<compile_context>
chip_gen: v7x
topology: tpu7x:2x2x1
jax: 0.10.0
libtpu: 0.0.40
codegen_flags: <defaults>
</compile_context>

<pallas_src>
import functools

import jax
import jax.numpy as jnp
from jax import lax
from jax.experimental import pallas as pl
from jax.experimental.pallas import tpu as pltpu

HIDDEN = 200    # logical LSTM hidden size (matches the PyTorch module)
HPAD = 256      # lane-aligned gate stride / padded hidden size
TACT = 48       # tactile feature size
ACT = 6         # action feature size (8 * 6 = 48 tiled action/state)


def _lstm_cell(gates, c, h_dim):
    """PyTorch LSTM cell math. gates: (B, 4*h_dim) in [i, f, g, o] order."""
    i = jax.nn.sigmoid(gates[:, 0 * h_dim:1 * h_dim])
    f = jax.nn.sigmoid(gates[:, 1 * h_dim:2 * h_dim])
    g = jnp.tanh(gates[:, 2 * h_dim:3 * h_dim])
    o = jax.nn.sigmoid(gates[:, 3 * h_dim:4 * h_dim])
    c_new = f * c + i * g
    h_new = o * jnp.tanh(c_new)
    return h_new, c_new


def _actp_kernel(context_frames,
                 tact_ref, tiled_ref,
                 wih1_ref, whh1_ref, b1_ref,
                 wih2h_ref, wih2t_ref, whh2_ref, b2_ref,
                 wf1h_ref, wf1x_ref, bf1_ref,
                 wf2_ref, bf2_ref,
                 out_ref):
    """Single invocation: full rollout over T-1 steps with an in-kernel loop."""
    num_steps, batch, _ = tact_ref.shape
    bf16 = jnp.bfloat16

    def step(t, carry):
        h1, c1, h2, c2, prev = carry

        tact = tact_ref[t]      # (B, 48) ground-truth tactile at step t (f32)
        tiled = tiled_ref[t]    # (B, 48) tiled (action, state) x4 (f32)

        # Teacher forcing for t <= context_frames-1, else feed back prediction.
        use_pred = t > (context_frames - 1)
        x1 = jnp.where(use_pred, prev, tact)           # (B, 48) f32
        x1b = x1.astype(bf16)
        tiledb = tiled.astype(bf16)

        # ---- LSTM1: input 48 -> hidden 200 (padded 256) ----
        g1 = (jnp.dot(x1b, wih1_ref[...], preferred_element_type=jnp.float32)
              + jnp.dot(h1.astype(bf16), whh1_ref[...],
                        preferred_element_type=jnp.float32)
              + b1_ref[...])
        h1n, c1n = _lstm_cell(g1, c1, HPAD)

        # ---- LSTM2: concat(h1, tiled) = 248 -> 200, concat via split weights ----
        g2 = (jnp.dot(h1n.astype(bf16), wih2h_ref[...],
                      preferred_element_type=jnp.float32)
              + jnp.dot(tiledb, wih2t_ref[...],
                        preferred_element_type=jnp.float32)
              + jnp.dot(h2.astype(bf16), whh2_ref[...],
                        preferred_element_type=jnp.float32)
              + b2_ref[...])
        h2n, c2n = _lstm_cell(g2, c2, HPAD)

        # ---- fc1(tanh) on concat(h2, x1) = 248 -> 200 (padded 256) ----
        out3 = jnp.tanh(
            jnp.dot(h2n.astype(bf16), wf1h_ref[...],
                    preferred_element_type=jnp.float32)
            + jnp.dot(x1b, wf1x_ref[...], preferred_element_type=jnp.float32)
            + bf1_ref[...])

        # ---- fc2(tanh): 200 (padded 256) -> 48 ----
        out4 = jnp.tanh(
            jnp.dot(out3.astype(bf16), wf2_ref[...],
                    preferred_element_type=jnp.float32)
            + bf2_ref[...])

        out_ref[t] = out4
        return h1n, c1n, h2n, c2n, out4

    zeros_h = jnp.zeros((batch, HPAD), jnp.float32)
    zeros_p = jnp.zeros((batch, TACT), jnp.float32)
    lax.fori_loop(0, num_steps, step,
                  (zeros_h, zeros_h, zeros_h, zeros_h, zeros_p))


# ---------------------------------------------------------------------------
# Weight layout helpers (pad gate stride 200 -> 256, lane aligned; zero pad).
# ---------------------------------------------------------------------------
def _pad_gate_cols(w):
    """(in, 4*HIDDEN) -> (in, 4*HPAD): gate k moved to columns [k*HPAD, k*HPAD+HIDDEN)."""
    out = jnp.zeros((w.shape[0], 4 * HPAD), w.dtype)
    for k in range(4):
        out = out.at[:, k * HPAD:k * HPAD + HIDDEN].set(
            w[:, k * HIDDEN:(k + 1) * HIDDEN])
    return out


def _pad_rows(w):
    """(HIDDEN, n) -> (HPAD, n) with zero-padded rows."""
    return jnp.zeros((HPAD, w.shape[1]), w.dtype).at[:HIDDEN].set(w)


def _pad_cols(w):
    """(in, HIDDEN) -> (in, HPAD) with zero-padded columns."""
    return jnp.zeros((w.shape[0], HPAD), w.dtype).at[:, :HIDDEN].set(w)


def actp_forward(tactiles, actions, params, context_frames):
    """tactiles: (T, B, 48), actions: (T, B, 6). Returns (T - context_frames, B, 48)."""
    T, B, _ = tactiles.shape
    state = actions[0]                                   # (B, 6)
    act_next = actions[1:]                               # (T-1, B, 6)
    state_b = jnp.broadcast_to(state[None], act_next.shape)
    # torch.cat((a, s, a, s, a, s, a, s), 1)
    tiled = jnp.concatenate([act_next, state_b] * 4, axis=-1)   # (T-1, B, 48)
    tact_seq = tactiles[:-1]                             # (T-1, B, 48)

    bf16, f32 = jnp.bfloat16, jnp.float32
    # bf16 matmul weights (lane-aligned gate layout), f32 biases.
    wih1 = _pad_gate_cols(params["wih1"]).astype(bf16)                 # (48, 1024)
    whh1 = _pad_gate_cols(_pad_rows(params["whh1"])).astype(bf16)      # (256, 1024)
    b1 = _pad_gate_cols(params["b1"]).astype(f32)                      # (1, 1024)
    wih2h = _pad_gate_cols(_pad_rows(params["wih2h"])).astype(bf16)    # (256, 1024)
    wih2t = _pad_gate_cols(params["wih2t"]).astype(bf16)               # (48, 1024)
    whh2 = _pad_gate_cols(_pad_rows(params["whh2"])).astype(bf16)      # (256, 1024)
    b2 = _pad_gate_cols(params["b2"]).astype(f32)                      # (1, 1024)
    wf1h = _pad_cols(_pad_rows(params["wf1h"])).astype(bf16)           # (256, 256)
    wf1x = _pad_cols(params["wf1x"]).astype(bf16)                      # (48, 256)
    bf1 = _pad_cols(params["bf1"]).astype(f32)                         # (1, 256)
    wf2 = _pad_rows(params["wf2"]).astype(bf16)                        # (256, 48)
    bf2 = params["bf2"].astype(f32)                                    # (1, 48)

    weights = [wih1, whh1, b1, wih2h, wih2t, whh2, b2,
               wf1h, wf1x, bf1, wf2, bf2]

    vmem_spec = lambda: pl.BlockSpec(memory_space=pltpu.MemorySpace.VMEM)

    out = pl.pallas_call(
        functools.partial(_actp_kernel, context_frames),
        out_shape=jax.ShapeDtypeStruct((T - 1, B, TACT), jnp.float32),
        in_specs=[vmem_spec() for _ in range(2 + len(weights))],
        out_specs=vmem_spec(),
    )(tact_seq, tiled, *weights)

    # torch.stack([last_output] + outputs) == predictions from step context_frames-1 on
    return out[context_frames - 1:]


def actp_reference(tactiles, actions, p, context_frames):
    """Pure-JAX f32 reference mirroring the PyTorch forward."""
    T, B, _ = tactiles.shape
    state = actions[0]
    h1 = jnp.zeros((B, HIDDEN)); c1 = jnp.zeros((B, HIDDEN))
    h2 = jnp.zeros((B, HIDDEN)); c2 = jnp.zeros((B, HIDDEN))
    prev = jnp.zeros((B, TACT))
    outs, last = [], None
    for idx in range(T - 1):
        tact = tactiles[idx]
        act = actions[idx + 1]
        tiled = jnp.concatenate([act, state] * 4, axis=1)
        x1 = prev if idx > context_frames - 1 else tact
        g1 = x1 @ p["wih1"] + h1 @ p["whh1"] + p["b1"]
        h1, c1 = _lstm_cell(g1, c1, HIDDEN)
        g2 = h1 @ p["wih2h"] + tiled @ p["wih2t"] + h2 @ p["whh2"] + p["b2"]
        h2, c2 = _lstm_cell(g2, c2, HIDDEN)
        out3 = jnp.tanh(h2 @ p["wf1h"] + x1 @ p["wf1x"] + p["bf1"])
        out4 = jnp.tanh(out3 @ p["wf2"] + p["bf2"])
        if idx > context_frames - 1:
            outs.append(out4)
        else:
            last = out4
        prev = out4
    return jnp.stack([last] + outs)


def init_params(key):
    """Deterministic synthetic params with PyTorch-default-style uniform ranges."""
    ks = jax.random.split(key, 16)
    k_lstm = 1.0 / jnp.sqrt(HIDDEN)
    k_fc1 = 1.0 / jnp.sqrt(HIDDEN + TACT)
    k_fc2 = 1.0 / jnp.sqrt(HIDDEN)

    def u(k, shape, bound):
        return jax.random.uniform(k, shape, jnp.float32, -bound, bound)

    # LSTM1: in 48, hidden 200 (gate order i,f,g,o along the 800 axis)
    wih1 = u(ks[0], (TACT, 4 * HIDDEN), k_lstm)
    whh1 = u(ks[1], (HIDDEN, 4 * HIDDEN), k_lstm)
    b1 = u(ks[2], (1, 4 * HIDDEN), k_lstm) + u(ks[3], (1, 4 * HIDDEN), k_lstm)
    # LSTM2: in 248 (split into h-part 200 and tiled-part 48), hidden 200
    wih2h = u(ks[4], (HIDDEN, 4 * HIDDEN), k_lstm)
    wih2t = u(ks[5], (TACT, 4 * HIDDEN), k_lstm)
    whh2 = u(ks[6], (HIDDEN, 4 * HIDDEN), k_lstm)
    b2 = u(ks[7], (1, 4 * HIDDEN), k_lstm) + u(ks[8], (1, 4 * HIDDEN), k_lstm)
    # fc1: 248 -> 200 (split), fc2: 200 -> 48
    wf1h = u(ks[9], (HIDDEN, HIDDEN), k_fc1)
    wf1x = u(ks[10], (TACT, HIDDEN), k_fc1)
    bf1 = u(ks[11], (1, HIDDEN), k_fc1)
    wf2 = u(ks[12], (HIDDEN, TACT), k_fc2)
    bf2 = u(ks[13], (1, TACT), k_fc2)
    return dict(wih1=wih1, whh1=whh1, b1=b1,
                wih2h=wih2h, wih2t=wih2t, whh2=whh2, b2=b2,
                wf1h=wf1h, wf1x=wf1x, bf1=bf1, wf2=wf2, bf2=bf2)


if __name__ == "__main__":
    T, B = 8, 2
    context_frames = 3

    key = jax.random.PRNGKey(0)
    k_p, k_t, k_a = jax.random.split(key, 3)
    params = init_params(k_p)
    tactiles = jax.random.uniform(k_t, (T, B, TACT), jnp.float32)   # (T, B, 48)
    actions = jax.random.uniform(k_a, (T, B, ACT), jnp.float32)     # (T, B, 6)

    forward = jax.jit(functools.partial(actp_forward, context_frames=context_frames))
    out = jax.block_until_ready(forward(tactiles, actions, params))
    assert out.shape == (T - context_frames, B, TACT), out.shape

    ref = jax.block_until_ready(
        actp_reference(tactiles, actions, params, context_frames))
    # bf16 matmul inputs with f32 accumulation vs. pure-f32 reference.
    assert jnp.allclose(out, ref, atol=5e-2, rtol=5e-2), (
        float(jnp.max(jnp.abs(out - ref))))

    print("KERNEL_OK")
</pallas_src>

<mosaic_0001>
module attributes {stable_mosaic.version = 11 : i64} {
  func.func @_actp_kernel(%arg0: memref<7x2x48xf32, #tpu.memory_space<vmem>>, %arg1: memref<7x2x48xf32, #tpu.memory_space<vmem>>, %arg2: memref<48x1024xbf16, #tpu.memory_space<vmem>>, %arg3: memref<256x1024xbf16, #tpu.memory_space<vmem>>, %arg4: memref<1x1024xf32, #tpu.memory_space<vmem>>, %arg5: memref<256x1024xbf16, #tpu.memory_space<vmem>>, %arg6: memref<48x1024xbf16, #tpu.memory_space<vmem>>, %arg7: memref<256x1024xbf16, #tpu.memory_space<vmem>>, %arg8: memref<1x1024xf32, #tpu.memory_space<vmem>>, %arg9: memref<256x256xbf16, #tpu.memory_space<vmem>>, %arg10: memref<48x256xbf16, #tpu.memory_space<vmem>>, %arg11: memref<1x256xf32, #tpu.memory_space<vmem>>, %arg12: memref<256x48xbf16, #tpu.memory_space<vmem>>, %arg13: memref<1x48xf32, #tpu.memory_space<vmem>>, %arg14: memref<7x2x48xf32, #tpu.memory_space<vmem>>) attributes {dimension_semantics = [], scalar_prefetch = 0 : i64, scratch_operands = 0 : i64, tpu.core_type = #tpu.core_type<tc>} {
    %cst = arith.constant 0.000000e+00 : f32
    %0 = vector.broadcast %cst : f32 to vector<2x256xf32>
    %cst_0 = arith.constant 0.000000e+00 : f32
    %1 = vector.broadcast %cst_0 : f32 to vector<2x48xf32>
    %c0_i32 = arith.constant 0 : i32
    %c7_i32 = arith.constant 7 : i32
    %2 = arith.addi %c0_i32, %c7_i32 : i32
    %c1_i32 = arith.constant 1 : i32
    %3:5 = scf.for %arg15 = %c0_i32 to %2 step %c1_i32 iter_args(%arg16 = %0, %arg17 = %0, %arg18 = %0, %arg19 = %0, %arg20 = %1) -> (vector<2x256xf32>, vector<2x256xf32>, vector<2x256xf32>, vector<2x256xf32>, vector<2x48xf32>)  : i32 {
      %4 = arith.index_cast %arg15 : i32 to index
      %c0 = arith.constant 0 : index
      %c0_2 = arith.constant 0 : index
      %5 = vector.load %arg0[%4, %c0, %c0_2] : memref<7x2x48xf32, #tpu.memory_space<vmem>>, vector<1x2x48xf32>
      %6 = vector.shape_cast %5 : vector<1x2x48xf32> to vector<2x48xf32>
      %7 = arith.index_cast %arg15 : i32 to index
      %c0_3 = arith.constant 0 : index
      %c0_4 = arith.constant 0 : index
      %8 = vector.load %arg1[%7, %c0_3, %c0_4] : memref<7x2x48xf32, #tpu.memory_space<vmem>>, vector<1x2x48xf32>
      %9 = vector.shape_cast %8 : vector<1x2x48xf32> to vector<2x48xf32>
      %c2_i32 = arith.constant 2 : i32
      %10 = arith.cmpi sgt, %arg15, %c2_i32 : i32
      %11 = arith.select %10, %arg20, %6 : vector<2x48xf32>
      %12 = arith.truncf %11 : vector<2x48xf32> to vector<2x48xbf16>
      %13 = arith.truncf %9 : vector<2x48xf32> to vector<2x48xbf16>
      %c0_5 = arith.constant 0 : index
      %c0_6 = arith.constant 0 : index
      %14 = vector.load %arg2[%c0_5, %c0_6] : memref<48x1024xbf16, #tpu.memory_space<vmem>>, vector<48x1024xbf16>
      %cst_7 = arith.constant dense<0.000000e+00> : vector<2x1024xf32>
      %15 = tpu.matmul %12, %14, %cst_7 {dimension_numbers = #tpu.dot_dimension_numbers<[1], [0], [0], [1], [0, 0, 1, 1], [], []>} : vector<2x48xbf16>, vector<48x1024xbf16>, vector<2x1024xf32> -> vector<2x1024xf32>
      %16 = arith.truncf %arg16 : vector<2x256xf32> to vector<2x256xbf16>
      %c0_8 = arith.constant 0 : index
      %c0_9 = arith.constant 0 : index
      %17 = vector.load %arg3[%c0_8, %c0_9] : memref<256x1024xbf16, #tpu.memory_space<vmem>>, vector<256x1024xbf16>
      %cst_10 = arith.constant dense<0.000000e+00> : vector<2x1024xf32>
      %18 = tpu.matmul %16, %17, %cst_10 {dimension_numbers = #tpu.dot_dimension_numbers<[1], [0], [0], [1], [0, 0, 1, 1], [], []>} : vector<2x256xbf16>, vector<256x1024xbf16>, vector<2x1024xf32> -> vector<2x1024xf32>
      %19 = arith.addf %15, %18 : vector<2x1024xf32>
      %c0_11 = arith.constant 0 : index
      %c0_12 = arith.constant 0 : index
      %20 = vector.load %arg4[%c0_11, %c0_12] : memref<1x1024xf32, #tpu.memory_space<vmem>>, vector<1x1024xf32>
      %21 = vector.broadcast %20 : vector<1x1024xf32> to vector<2x1024xf32>
      %22 = arith.addf %19, %21 : vector<2x1024xf32>
      %23 = vector.extract_strided_slice %22 {offsets = [0, 0], sizes = [2, 256], strides = [1, 1]} : vector<2x1024xf32> to vector<2x256xf32>
      %24 = arith.negf %23 : vector<2x256xf32>
      %25 = math.exp %24 : vector<2x256xf32>
      %cst_13 = arith.constant 1.000000e+00 : f32
      %26 = vector.broadcast %cst_13 : f32 to vector<2x256xf32>
      %27 = arith.addf %26, %25 : vector<2x256xf32>
      %28 = arith.divf %26, %27 : vector<2x256xf32>
      %29 = vector.extract_strided_slice %22 {offsets = [0, 256], sizes = [2, 256], strides = [1, 1]} : vector<2x1024xf32> to vector<2x256xf32>
      %30 = arith.negf %29 : vector<2x256xf32>
      %31 = math.exp %30 : vector<2x256xf32>
      %cst_14 = arith.constant 1.000000e+00 : f32
      %32 = vector.broadcast %cst_14 : f32 to vector<2x256xf32>
      %33 = arith.addf %32, %31 : vector<2x256xf32>
      %34 = arith.divf %32, %33 : vector<2x256xf32>
      %35 = vector.extract_strided_slice %22 {offsets = [0, 512], sizes = [2, 256], strides = [1, 1]} : vector<2x1024xf32> to vector<2x256xf32>
      %36 = math.tanh %35 : vector<2x256xf32>
      %37 = vector.extract_strided_slice %22 {offsets = [0, 768], sizes = [2, 256], strides = [1, 1]} : vector<2x1024xf32> to vector<2x256xf32>
      %38 = arith.negf %37 : vector<2x256xf32>
      %39 = math.exp %38 : vector<2x256xf32>
      %cst_15 = arith.constant 1.000000e+00 : f32
      %40 = vector.broadcast %cst_15 : f32 to vector<2x256xf32>
      %41 = arith.addf %40, %39 : vector<2x256xf32>
      %42 = arith.divf %40, %41 : vector<2x256xf32>
      %43 = arith.mulf %34, %arg17 : vector<2x256xf32>
      %44 = arith.mulf %28, %36 : vector<2x256xf32>
      %45 = arith.addf %43, %44 : vector<2x256xf32>
      %46 = math.tanh %45 : vector<2x256xf32>
      %47 = arith.mulf %42, %46 : vector<2x256xf32>
      %48 = arith.truncf %47 : vector<2x256xf32> to vector<2x256xbf16>
      %c0_16 = arith.constant 0 : index
      %c0_17 = arith.constant 0 : index
      %49 = vector.load %arg5[%c0_16, %c0_17] : memref<256x1024xbf16, #tpu.memory_space<vmem>>, vector<256x1024xbf16>
      %cst_18 = arith.constant dense<0.000000e+00> : vector<2x1024xf32>
      %50 = tpu.matmul %48, %49, %cst_18 {dimension_numbers = #tpu.dot_dimension_numbers<[1], [0], [0], [1], [0, 0, 1, 1], [], []>} : vector<2x256xbf16>, vector<256x1024xbf16>, vector<2x1024xf32> -> vector<2x1024xf32>
      %c0_19 = arith.constant 0 : index
      %c0_20 = arith.constant 0 : index
      %51 = vector.load %arg6[%c0_19, %c0_20] : memref<48x1024xbf16, #tpu.memory_space<vmem>>, vector<48x1024xbf16>
      %cst_21 = arith.constant dense<0.000000e+00> : vector<2x1024xf32>
      %52 = tpu.matmul %13, %51, %cst_21 {dimension_numbers = #tpu.dot_dimension_numbers<[1], [0], [0], [1], [0, 0, 1, 1], [], []>} : vector<2x48xbf16>, vector<48x1024xbf16>, vector<2x1024xf32> -> vector<2x1024xf32>
      %53 = arith.addf %50, %52 : vector<2x1024xf32>
      %54 = arith.truncf %arg18 : vector<2x256xf32> to vector<2x256xbf16>
      %c0_22 = arith.constant 0 : index
      %c0_23 = arith.constant 0 : index
      %55 = vector.load %arg7[%c0_22, %c0_23] : memref<256x1024xbf16, #tpu.memory_space<vmem>>, vector<256x1024xbf16>
      %cst_24 = arith.constant dense<0.000000e+00> : vector<2x1024xf32>
      %56 = tpu.matmul %54, %55, %cst_24 {dimension_numbers = #tpu.dot_dimension_numbers<[1], [0], [0], [1], [0, 0, 1, 1], [], []>} : vector<2x256xbf16>, vector<256x1024xbf16>, vector<2x1024xf32> -> vector<2x1024xf32>
      %57 = arith.addf %53, %56 : vector<2x1024xf32>
      %c0_25 = arith.constant 0 : index
      %c0_26 = arith.constant 0 : index
      %58 = vector.load %arg8[%c0_25, %c0_26] : memref<1x1024xf32, #tpu.memory_space<vmem>>, vector<1x1024xf32>
      %59 = vector.broadcast %58 : vector<1x1024xf32> to vector<2x1024xf32>
      %60 = arith.addf %57, %59 : vector<2x1024xf32>
      %61 = vector.extract_strided_slice %60 {offsets = [0, 0], sizes = [2, 256], strides = [1, 1]} : vector<2x1024xf32> to vector<2x256xf32>
      %62 = arith.negf %61 : vector<2x256xf32>
      %63 = math.exp %62 : vector<2x256xf32>
      %cst_27 = arith.constant 1.000000e+00 : f32
      %64 = vector.broadcast %cst_27 : f32 to vector<2x256xf32>
      %65 = arith.addf %64, %63 : vector<2x256xf32>
      %66 = arith.divf %64, %65 : vector<2x256xf32>
      %67 = vector.extract_strided_slice %60 {offsets = [0, 256], sizes = [2, 256], strides = [1, 1]} : vector<2x1024xf32> to vector<2x256xf32>
      %68 = arith.negf %67 : vector<2x256xf32>
      %69 = math.exp %68 : vector<2x256xf32>
      %cst_28 = arith.constant 1.000000e+00 : f32
      %70 = vector.broadcast %cst_28 : f32 to vector<2x256xf32>
      %71 = arith.addf %70, %69 : vector<2x256xf32>
      %72 = arith.divf %70, %71 : vector<2x256xf32>
      %73 = vector.extract_strided_slice %60 {offsets = [0, 512], sizes = [2, 256], strides = [1, 1]} : vector<2x1024xf32> to vector<2x256xf32>
      %74 = math.tanh %73 : vector<2x256xf32>
      %75 = vector.extract_strided_slice %60 {offsets = [0, 768], sizes = [2, 256], strides = [1, 1]} : vector<2x1024xf32> to vector<2x256xf32>
      %76 = arith.negf %75 : vector<2x256xf32>
      %77 = math.exp %76 : vector<2x256xf32>
      %cst_29 = arith.constant 1.000000e+00 : f32
      %78 = vector.broadcast %cst_29 : f32 to vector<2x256xf32>
      %79 = arith.addf %78, %77 : vector<2x256xf32>
      %80 = arith.divf %78, %79 : vector<2x256xf32>
      %81 = arith.mulf %72, %arg19 : vector<2x256xf32>
      %82 = arith.mulf %66, %74 : vector<2x256xf32>
      %83 = arith.addf %81, %82 : vector<2x256xf32>
      %84 = math.tanh %83 : vector<2x256xf32>
      %85 = arith.mulf %80, %84 : vector<2x256xf32>
      %86 = arith.truncf %85 : vector<2x256xf32> to vector<2x256xbf16>
      %c0_30 = arith.constant 0 : index
      %c0_31 = arith.constant 0 : index
      %87 = vector.load %arg9[%c0_30, %c0_31] : memref<256x256xbf16, #tpu.memory_space<vmem>>, vector<256x256xbf16>
      %cst_32 = arith.constant dense<0.000000e+00> : vector<2x256xf32>
      %88 = tpu.matmul %86, %87, %cst_32 {dimension_numbers = #tpu.dot_dimension_numbers<[1], [0], [0], [1], [0, 0, 1, 1], [], []>} : vector<2x256xbf16>, vector<256x256xbf16>, vector<2x256xf32> -> vector<2x256xf32>
      %c0_33 = arith.constant 0 : index
      %c0_34 = arith.constant 0 : index
      %89 = vector.load %arg10[%c0_33, %c0_34] : memref<48x256xbf16, #tpu.memory_space<vmem>>, vector<48x256xbf16>
      %cst_35 = arith.constant dense<0.000000e+00> : vector<2x256xf32>
      %90 = tpu.matmul %12, %89, %cst_35 {dimension_numbers = #tpu.dot_dimension_numbers<[1], [0], [0], [1], [0, 0, 1, 1], [], []>} : vector<2x48xbf16>, vector<48x256xbf16>, vector<2x256xf32> -> vector<2x256xf32>
      %91 = arith.addf %88, %90 : vector<2x256xf32>
      %c0_36 = arith.constant 0 : index
      %c0_37 = arith.constant 0 : index
      %92 = vector.load %arg11[%c0_36, %c0_37] : memref<1x256xf32, #tpu.memory_space<vmem>>, vector<1x256xf32>
      %93 = vector.broadcast %92 : vector<1x256xf32> to vector<2x256xf32>
      %94 = arith.addf %91, %93 : vector<2x256xf32>
      %95 = math.tanh %94 : vector<2x256xf32>
      %96 = arith.truncf %95 : vector<2x256xf32> to vector<2x256xbf16>
      %c0_38 = arith.constant 0 : index
      %c0_39 = arith.constant 0 : index
      %97 = vector.load %arg12[%c0_38, %c0_39] : memref<256x48xbf16, #tpu.memory_space<vmem>>, vector<256x48xbf16>
      %cst_40 = arith.constant dense<0.000000e+00> : vector<2x48xf32>
      %98 = tpu.matmul %96, %97, %cst_40 {dimension_numbers = #tpu.dot_dimension_numbers<[1], [0], [0], [1], [0, 0, 1, 1], [], []>} : vector<2x256xbf16>, vector<256x48xbf16>, vector<2x48xf32> -> vector<2x48xf32>
      %c0_41 = arith.constant 0 : index
      %c0_42 = arith.constant 0 : index
      %99 = vector.load %arg13[%c0_41, %c0_42] : memref<1x48xf32, #tpu.memory_space<vmem>>, vector<1x48xf32>
      %100 = vector.broadcast %99 : vector<1x48xf32> to vector<2x48xf32>
      %101 = arith.addf %98, %100 : vector<2x48xf32>
      %102 = math.tanh %101 : vector<2x48xf32>
      %103 = arith.index_cast %arg15 : i32 to index
      %c0_43 = arith.constant 0 : index
      %c0_44 = arith.constant 0 : index
      %104 = vector.load %arg14[%103, %c0_43, %c0_44] : memref<7x2x48xf32, #tpu.memory_space<vmem>>, vector<1x2x48xf32>
      %105 = vector.shape_cast %104 : vector<1x2x48xf32> to vector<2x48xf32>
      %106 = vector.shape_cast %102 : vector<2x48xf32> to vector<1x2x48xf32>
      tpu.vector_store %arg14[%103, %c0_43, %c0_44], %106 {strides = array<i32>} : memref<7x2x48xf32, #tpu.memory_space<vmem>>, vector<1x2x48xf32>,
      scf.yield %47, %45, %85, %83, %102 : vector<2x256xf32>, vector<2x256xf32>, vector<2x256xf32>, vector<2x256xf32>, vector<2x48xf32>
    }
    %c7_i32_1 = arith.constant 7 : i32
    return
  }
}

</mosaic_0001>

<llo_original>
// kernel: actp_forward.1
$region0: #{actp_forward.1}
  #allocation0 [shape = 'u32[]', space=smem, size = 0x4, offset = 0x4, fixed_abs, tag = 'smem constant byte address 0x4 - core index']
  #allocation1 [shape = 'u32[144,128]{1,0:T(1,128)}', space=vmem, size = 0x12000, scoped, tag = 'internal scratch']
  %s0 = inlined_call_operand.vmem [shape: f32[7,2,48], index: 0, kind: input, shape index: {}]
  %s1 = inlined_call_operand.vmem [shape: f32[7,2,48], index: 1, kind: input, shape index: {}]
  %s2 = inlined_call_operand.vmem [shape: bf16[48,1024], index: 2, kind: input, shape index: {}]
  %s3 = inlined_call_operand.vmem [shape: bf16[256,1024], index: 3, kind: input, shape index: {}]
  %s4 = inlined_call_operand.vmem [shape: f32[1,1024], index: 4, kind: input, shape index: {}]
  %s5 = inlined_call_operand.vmem [shape: bf16[256,1024], index: 5, kind: input, shape index: {}]
  %s6 = inlined_call_operand.vmem [shape: bf16[48,1024], index: 6, kind: input, shape index: {}]
  %s7 = inlined_call_operand.vmem [shape: bf16[256,1024], index: 7, kind: input, shape index: {}]
  %s8 = inlined_call_operand.vmem [shape: f32[1,1024], index: 8, kind: input, shape index: {}]
  %s9 = inlined_call_operand.vmem [shape: bf16[256,256], index: 9, kind: input, shape index: {}]
  %s10 = inlined_call_operand.vmem [shape: bf16[48,256], index: 10, kind: input, shape index: {}]
  %s11 = inlined_call_operand.vmem [shape: f32[1,256], index: 11, kind: input, shape index: {}]
  %s12 = inlined_call_operand.vmem [shape: bf16[256,48], index: 12, kind: input, shape index: {}]
  %s13 = inlined_call_operand.vmem [shape: f32[1,48], index: 13, kind: input, shape index: {}]
  %s14 = inlined_call_operand.vmem [shape: f32[7,2,48], index: 14, kind: output, shape index: {}]
  %s15 = sld [smem:[#allocation0]]
  $region73: #{actp_forward.1} parent=0
    _
  %s17 = ssub.s32 1, %s15
  %s18 = scalar_select 0, %s17, %s15
  // Predicated region
  $region2: #{actp_forward.1} parent=0 // pred_check
    _
  $region3: #{actp_forward.1} parent=0 // pred_check_branch
    %20 = sbr.rel (0) target = $region5
  $region4: #{actp_forward.1} parent=0 // pred_region
    _
  $region5: #{actp_forward.1} parent=0 // pred_fallthru
    _
  // Predicated region
  $region6: #{actp_forward.1} parent=0 // pred_check
    _
  $region7: #{actp_forward.1} parent=0 // pred_check_branch
    %22 = sbr.rel (0) target = $region9
  $region8: #{actp_forward.1} parent=0 // pred_region
    _
  $region9: #{actp_forward.1} parent=0 // pred_fallthru
    _
  // Predicated region
  $region10: #{actp_forward.1} parent=0 // pred_check
    _
  $region11: #{actp_forward.1} parent=0 // pred_check_branch
    %24 = sbr.rel (0) target = $region13
  $region12: #{actp_forward.1} parent=0 // pred_region
    _
  $region13: #{actp_forward.1} parent=0 // pred_fallthru
    _
  // Predicated region
  $region14: #{actp_forward.1} parent=0 // pred_check
    _
  $region15: #{actp_forward.1} parent=0 // pred_check_branch
    %26 = sbr.rel (0) target = $region17
  $region16: #{actp_forward.1} parent=0 // pred_region
    _
  $region17: #{actp_forward.1} parent=0 // pred_fallthru
    _
  // Predicated region
  $region18: #{actp_forward.1} parent=0 // pred_check
    _
  $region19: #{actp_forward.1} parent=0 // pred_check_branch
    %28 = sbr.rel (0) target = $region21
  $region20: #{actp_forward.1} parent=0 // pred_region
    _
  $region21: #{actp_forward.1} parent=0 // pred_fallthru
    _
  // Predicated region
  $region22: #{actp_forward.1} parent=0 // pred_check
    _
  $region23: #{actp_forward.1} parent=0 // pred_check_branch
    %30 = sbr.rel (0) target = $region25
  $region24: #{actp_forward.1} parent=0 // pred_region
    _
  $region25: #{actp_forward.1} parent=0 // pred_fallthru
    _
  // Predicated region
  $region26: #{actp_forward.1} parent=0 // pred_check
    _
  $region27: #{actp_forward.1} parent=0 // pred_check_branch
    %32 = sbr.rel (0) target = $region29
  $region28: #{actp_forward.1} parent=0 // pred_region
    _
  $region29: #{actp_forward.1} parent=0 // pred_fallthru
    _
  // Predicated region
  $region30: #{actp_forward.1} parent=0 // pred_check
    _
  $region31: #{actp_forward.1} parent=0 // pred_check_branch
    %34 = sbr.rel (0) target = $region33
  $region32: #{actp_forward.1} parent=0 // pred_region
    _
  $region33: #{actp_forward.1} parent=0 // pred_fallthru
    _
  // Predicated region
  $region34: #{actp_forward.1} parent=0 // pred_check
    _
  $region35: #{actp_forward.1} parent=0 // pred_check_branch
    %36 = sbr.rel (0) target = $region37
  $region36: #{actp_forward.1} parent=0 // pred_region
    _
  $region37: #{actp_forward.1} parent=0 // pred_fallthru
    _
  // Predicated region
  $region38: #{actp_forward.1} parent=0 // pred_check
    _
  $region39: #{actp_forward.1} parent=0 // pred_check_branch
    %38 = sbr.rel (0) target = $region41
  $region40: #{actp_forward.1} parent=0 // pred_region
    _
  $region41: #{actp_forward.1} parent=0 // pred_fallthru
    _
  // Predicated region
  $region42: #{actp_forward.1} parent=0 // pred_check
    _
  $region43: #{actp_forward.1} parent=0 // pred_check_branch
    %40 = sbr.rel (0) target = $region45
  $region44: #{actp_forward.1} parent=0 // pred_region
    _
  $region45: #{actp_forward.1} parent=0 // pred_fallthru
    _
  // Predicated region
  $region46: #{actp_forward.1} parent=0 // pred_check
    _
  $region47: #{actp_forward.1} parent=0 // pred_check_branch
    %42 = sbr.rel (0) target = $region49
  $region48: #{actp_forward.1} parent=0 // pred_region
    _
  $region49: #{actp_forward.1} parent=0 // pred_fallthru
    _
  // Predicated region
  $region50: #{actp_forward.1} parent=0 // pred_check
    _
  $region51: #{actp_forward.1} parent=0 // pred_check_branch
    %44 = sbr.rel (0) target = $region53
  $region52: #{actp_forward.1} parent=0 // pred_region
    _
  $region53: #{actp_forward.1} parent=0 // pred_fallthru
    _
  // Predicated region
  $region54: #{actp_forward.1} parent=0 // pred_check
    _
  $region55: #{actp_forward.1} parent=0 // pred_check_branch
    %46 = sbr.rel (0) target = $region57
  $region56: #{actp_forward.1} parent=0 // pred_region
    _
  $region57: #{actp_forward.1} parent=0 // pred_fallthru
    _
  loop: start=0, step=1, limit=7
  $region58: #{actp_forward.1} parent=0 // loop_pre_header
    _
  $region59: #{actp_forward.1} parent=0 // loop_header
    %s49 = sphi 0, %s53
    %p50 = scmp.ge.s32.totalorder %s49, 7
    %v54 = vphi 0.0, %v1417
    %v55 = vphi 0.0, %v1418
    %v56 = vphi 0.0, %v1413
    %v57 = vphi 0.0, %v1414
    %v58 = vphi 0.0, %v3702
    %v59 = vphi 0.0, %v3703
    %v60 = vphi 0.0, %v3698
    %v61 = vphi 0.0, %v3699
    %v62 = vphi 0.0, %v4209
  $region60: #{actp_forward.1} parent=0 // loop_header_branch
    %52 = sbr.rel (%p50) target = $region64
  $region61: #{actp_forward.1} parent=0 // loop_body
    %s63 = smul.u32 %s49, 2
    %s64 = scalar_lea.vmem %s0, %s63
    %v65 = vld [vmem:[%s64] sm:$0x3]
    %s66 = scalar_lea.vmem %s1, %s63
    %v67 = vld [vmem:[%s66] sm:$0x3]
    %p68 = scmp.gt.s32.totalorder %s49, 2
    %s69 = scalar_select %p68, 1, 0
    %v70 = vstv %s69
    %vm71 = vcmp.eq.s32.totalorder %v70, 1
    %v72 = vsel %vm71, %v62, %v65
    %v73 = vpack.c.bf16 %v72, %v72
    %v74 = vpack.c.bf16 %v67, %v67
    %v75 = vld [vmem:[%s2] sm:$0xff]
    %v76 = vld [vmem:[%s2 + $0x8] sm:$0xff]
    %v77 = vld [vmem:[%s2 + $0x10] sm:$0xff]
    %v78 = vld [vmem:[%s2 + $0x18] sm:$0xff]
    %v79 = vld [vmem:[%s2 + $0x20] sm:$0xff]
    %v80 = vld [vmem:[%s2 + $0x28] sm:$0xff]
    %v81 = vld [vmem:[%s2 + $0x30] sm:$0xff]
    %v82 = vld [vmem:[%s2 + $0x38] sm:$0xff]
    %v83 = vld [vmem:[%s2 + $0x40] sm:$0xff]
    %v84 = vld [vmem:[%s2 + $0x48] sm:$0xff]
    %v85 = vld [vmem:[%s2 + $0x50] sm:$0xff]
    %v86 = vld [vmem:[%s2 + $0x58] sm:$0xff]
    %v87 = vld [vmem:[%s2 + $0x60] sm:$0xff]
    %v88 = vld [vmem:[%s2 + $0x68] sm:$0xff]
    %v89 = vld [vmem:[%s2 + $0x70] sm:$0xff]
    %v90 = vld [vmem:[%s2 + $0x78] sm:$0xff]
    %v91 = vld [vmem:[%s2 + $0x80] sm:$0xff]
    %v92 = vld [vmem:[%s2 + $0x88] sm:$0xff]
    %v93 = vld [vmem:[%s2 + $0x90] sm:$0xff]
    %v94 = vld [vmem:[%s2 + $0x98] sm:$0xff]
    %v95 = vld [vmem:[%s2 + $0xa0] sm:$0xff]
    %v96 = vld [vmem:[%s2 + $0xa8] sm:$0xff]
    %v97 = vld [vmem:[%s2 + $0xb0] sm:$0xff]
    %v98 = vld [vmem:[%s2 + $0xb8] sm:$0xff]
    %v99 = vpack.c.bf16 %v54, %v54
    %v100 = vpack.c.bf16 %v55, %v55
    %v101 = vld [vmem:[%s3] sm:$0xff]
    %v102 = vld [vmem:[%s3 + $0x8] sm:$0xff]
    %v103 = vld [vmem:[%s3 + $0x10] sm:$0xff]
    %v104 = vld [vmem:[%s3 + $0x18] sm:$0xff]
    %v105 = vld [vmem:[%s3 + $0x20] sm:$0xff]
    %v106 = vld [vmem:[%s3 + $0x28] sm:$0xff]
    %v107 = vld [vmem:[%s3 + $0x30] sm:$0xff]
    %v108 = vld [vmem:[%s3 + $0x38] sm:$0xff]
    %v109 = vld [vmem:[%s3 + $0x40] sm:$0xff]
    %v110 = vld [vmem:[%s3 + $0x48] sm:$0xff]
    %v111 = vld [vmem:[%s3 + $0x50] sm:$0xff]
    %v112 = vld [vmem:[%s3 + $0x58] sm:$0xff]
    %v113 = vld [vmem:[%s3 + $0x60] sm:$0xff]
    %v114 = vld [vmem:[%s3 + $0x68] sm:$0xff]
    %v115 = vld [vmem:[%s3 + $0x70] sm:$0xff]
    %v116 = vld [vmem:[%s3 + $0x78] sm:$0xff]
    %v117 = vld [vmem:[%s3 + $0x80] sm:$0xff]
    %v118 = vld [vmem:[%s3 + $0x88] sm:$0xff]
    %v119 = vld [vmem:[%s3 + $0x90] sm:$0xff]
    %v120 = vld [vmem:[%s3 + $0x98] sm:$0xff]
    %v121 = vld [vmem:[%s3 + $0xa0] sm:$0xff]
    %v122 = vld [vmem:[%s3 + $0xa8] sm:$0xff]
    %v123 = vld [vmem:[%s3 + $0xb0] sm:$0xff]
    %v124 = vld [vmem:[%s3 + $0xb8] sm:$0xff]
    %v125 = vld [vmem:[%s3 + $0xc0] sm:$0xff]
    %v126 = vld [vmem:[%s3 + $0xc8] sm:$0xff]
    %v127 = vld [vmem:[%s3 + $0xd0] sm:$0xff]
    %v128 = vld [vmem:[%s3 + $0xd8] sm:$0xff]
    %v129 = vld [vmem:[%s3 + $0xe0] sm:$0xff]
    %v130 = vld [vmem:[%s3 + $0xe8] sm:$0xff]
    %v131 = vld [vmem:[%s3 + $0xf0] sm:$0xff]
    %v132 = vld [vmem:[%s3 + $0xf8] sm:$0xff]
    %v133 = vld [vmem:[%s3 + $0x100] sm:$0xff]
    %v134 = vld [vmem:[%s3 + $0x108] sm:$0xff]
    %v135 = vld [vmem:[%s3 + $0x110] sm:$0xff]
    %v136 = vld [vmem:[%s3 + $0x118] sm:$0xff]
    %v137 = vld [vmem:[%s3 + $0x120] sm:$0xff]
    %v138 = vld [vmem:[%s3 + $0x128] sm:$0xff]
    %v139 = vld [vmem:[%s3 + $0x130] sm:$0xff]
    %v140 = vld [vmem:[%s3 + $0x138] sm:$0xff]
    %v141 = vld [vmem:[%s3 + $0x140] sm:$0xff]
    %v142 = vld [vmem:[%s3 + $0x148] sm:$0xff]
    %v143 = vld [vmem:[%s3 + $0x150] sm:$0xff]
    %v144 = vld [vmem:[%s3 + $0x158] sm:$0xff]
    %v145 = vld [vmem:[%s3 + $0x160] sm:$0xff]
    %v146 = vld [vmem:[%s3 + $0x168] sm:$0xff]
    %v147 = vld [vmem:[%s3 + $0x170] sm:$0xff]
    %v148 = vld [vmem:[%s3 + $0x178] sm:$0xff]
    %v149 = vld [vmem:[%s3 + $0x180] sm:$0xff]
    %v150 = vld [vmem:[%s3 + $0x188] sm:$0xff]
    %v151 = vld [vmem:[%s3 + $0x190] sm:$0xff]
    %v152 = vld [vmem:[%s3 + $0x198] sm:$0xff]
    %v153 = vld [vmem:[%s3 + $0x1a0] sm:$0xff]
    %v154 = vld [vmem:[%s3 + $0x1a8] sm:$0xff]
    %v155 = vld [vmem:[%s3 + $0x1b0] sm:$0xff]
    %v156 = vld [vmem:[%s3 + $0x1b8] sm:$0xff]
    %v157 = vld [vmem:[%s3 + $0x1c0] sm:$0xff]
    %v158 = vld [vmem:[%s3 + $0x1c8] sm:$0xff]
    %v159 = vld [vmem:[%s3 + $0x1d0] sm:$0xff]
    %v160 = vld [vmem:[%s3 + $0x1d8] sm:$0xff]
    %v161 = vld [vmem:[%s3 + $0x1e0] sm:$0xff]
    %v162 = vld [vmem:[%s3 + $0x1e8] sm:$0xff]
    %v163 = vld [vmem:[%s3 + $0x1f0] sm:$0xff]
    %v164 = vld [vmem:[%s3 + $0x1f8] sm:$0xff]
    %v165 = vld [vmem:[%s3 + $0x200] sm:$0xff]
    %v166 = vld [vmem:[%s3 + $0x208] sm:$0xff]
    %v167 = vld [vmem:[%s3 + $0x210] sm:$0xff]
    %v168 = vld [vmem:[%s3 + $0x218] sm:$0xff]
    %v169 = vld [vmem:[%s3 + $0x220] sm:$0xff]
    %v170 = vld [vmem:[%s3 + $0x228] sm:$0xff]
    %v171 = vld [vmem:[%s3 + $0x230] sm:$0xff]
    %v172 = vld [vmem:[%s3 + $0x238] sm:$0xff]
    %v173 = vld [vmem:[%s3 + $0x240] sm:$0xff]
    %v174 = vld [vmem:[%s3 + $0x248] sm:$0xff]
    %v175 = vld [vmem:[%s3 + $0x250] sm:$0xff]
    %v176 = vld [vmem:[%s3 + $0x258] sm:$0xff]
    %v177 = vld [vmem:[%s3 + $0x260] sm:$0xff]
    %v178 = vld [vmem:[%s3 + $0x268] sm:$0xff]
    %v179 = vld [vmem:[%s3 + $0x270] sm:$0xff]
    %v180 = vld [vmem:[%s3 + $0x278] sm:$0xff]
    %v181 = vld [vmem:[%s3 + $0x280] sm:$0xff]
    %v182 = vld [vmem:[%s3 + $0x288] sm:$0xff]
    %v183 = vld [vmem:[%s3 + $0x290] sm:$0xff]
    %v184 = vld [vmem:[%s3 + $0x298] sm:$0xff]
    %v185 = vld [vmem:[%s3 + $0x2a0] sm:$0xff]
    %v186 = vld [vmem:[%s3 + $0x2a8] sm:$0xff]
    %v187 = vld [vmem:[%s3 + $0x2b0] sm:$0xff]
    %v188 = vld [vmem:[%s3 + $0x2b8] sm:$0xff]
    %v189 = vld [vmem:[%s3 + $0x2c0] sm:$0xff]
    %v190 = vld [vmem:[%s3 + $0x2c8] sm:$0xff]
    %v191 = vld [vmem:[%s3 + $0x2d0] sm:$0xff]
    %v192 = vld [vmem:[%s3 + $0x2d8] sm:$0xff]
    %v193 = vld [vmem:[%s3 + $0x2e0] sm:$0xff]
    %v194 = vld [vmem:[%s3 + $0x2e8] sm:$0xff]
    %v195 = vld [vmem:[%s3 + $0x2f0] sm:$0xff]
    %v196 = vld [vmem:[%s3 + $0x2f8] sm:$0xff]
    %v197 = vld [vmem:[%s3 + $0x300] sm:$0xff]
    %v198 = vld [vmem:[%s3 + $0x308] sm:$0xff]
    %v199 = vld [vmem:[%s3 + $0x310] sm:$0xff]
    %v200 = vld [vmem:[%s3 + $0x318] sm:$0xff]
    %v201 = vld [vmem:[%s3 + $0x320] sm:$0xff]
    %v202 = vld [vmem:[%s3 + $0x328] sm:$0xff]
    %v203 = vld [vmem:[%s3 + $0x330] sm:$0xff]
    %v204 = vld [vmem:[%s3 + $0x338] sm:$0xff]
    %v205 = vld [vmem:[%s3 + $0x340] sm:$0xff]
    %v206 = vld [vmem:[%s3 + $0x348] sm:$0xff]
    %v207 = vld [vmem:[%s3 + $0x350] sm:$0xff]
    %v208 = vld [vmem:[%s3 + $0x358] sm:$0xff]
    %v209 = vld [vmem:[%s3 + $0x360] sm:$0xff]
    %v210 = vld [vmem:[%s3 + $0x368] sm:$0xff]
    %v211 = vld [vmem:[%s3 + $0x370] sm:$0xff]
    %v212 = vld [vmem:[%s3 + $0x378] sm:$0xff]
    %v213 = vld [vmem:[%s3 + $0x380] sm:$0xff]
    %v214 = vld [vmem:[%s3 + $0x388] sm:$0xff]
    %v215 = vld [vmem:[%s3 + $0x390] sm:$0xff]
    %v216 = vld [vmem:[%s3 + $0x398] sm:$0xff]
    %v217 = vld [vmem:[%s3 + $0x3a0] sm:$0xff]
    %v218 = vld [vmem:[%s3 + $0x3a8] sm:$0xff]
    %v219 = vld [vmem:[%s3 + $0x3b0] sm:$0xff]
    %v220 = vld [vmem:[%s3 + $0x3b8] sm:$0xff]
    %v221 = vld [vmem:[%s3 + $0x3c0] sm:$0xff]
    %v222 = vld [vmem:[%s3 + $0x3c8] sm:$0xff]
    %v223 = vld [vmem:[%s3 + $0x3d0] sm:$0xff]
    %v224 = vld [vmem:[%s3 + $0x3d8] sm:$0xff]
    %v225 = vld [vmem:[%s3 + $0x3e0] sm:$0xff]
    %v226 = vld [vmem:[%s3 + $0x3e8] sm:$0xff]
    %v227 = vld [vmem:[%s3 + $0x3f0] sm:$0xff]
    %v228 = vld [vmem:[%s3 + $0x3f8] sm:$0xff]
    %v357 = vunpack.c.l.b16 %v101
    %v358 = vunpack.c.h.b16 %v101
    %v359 = vunpack.c.l.b16 %v102
    %v360 = vunpack.c.h.b16 %v102
    %v361 = vunpack.c.l.b16 %v103
    %v362 = vunpack.c.h.b16 %v103
    %v363 = vunpack.c.l.b16 %v104
    %v364 = vunpack.c.h.b16 %v104
    %v365 = vunpack.c.l.b16 %v105
    %v366 = vunpack.c.h.b16 %v105
    %v367 = vunpack.c.l.b16 %v106
    %v368 = vunpack.c.h.b16 %v106
    %v369 = vunpack.c.l.b16 %v107
    %v370 = vunpack.c.h.b16 %v107
    %v371 = vunpack.c.l.b16 %v108
    %v372 = vunpack.c.h.b16 %v108
    %v373 = vunpack.c.l.b16 %v109
    %v374 = vunpack.c.h.b16 %v109
    %v375 = vunpack.c.l.b16 %v110
    %v376 = vunpack.c.h.b16 %v110
    %v377 = vunpack.c.l.b16 %v111
    %v378 = vunpack.c.h.b16 %v111
    %v379 = vunpack.c.l.b16 %v112
    %v380 = vunpack.c.h.b16 %v112
    %v381 = vunpack.c.l.b16 %v113
    %v382 = vunpack.c.h.b16 %v113
    %v383 = vunpack.c.l.b16 %v114
    %v384 = vunpack.c.h.b16 %v114
    %v385 = vunpack.c.l.b16 %v115
    %v386 = vunpack.c.h.b16 %v115
    %v387 = vunpack.c.l.b16 %v116
    %v388 = vunpack.c.h.b16 %v116
    %v389 = vunpack.c.l.b16 %v117
    %v390 = vunpack.c.h.b16 %v117
    %v391 = vunpack.c.l.b16 %v118
    %v392 = vunpack.c.h.b16 %v118
    %v393 = vunpack.c.l.b16 %v119
    %v394 = vunpack.c.h.b16 %v119
    %v395 = vunpack.c.l.b16 %v120
    %v396 = vunpack.c.h.b16 %v120
    %v397 = vunpack.c.l.b16 %v121
    %v398 = vunpack.c.h.b16 %v121
    %v399 = vunpack.c.l.b16 %v122
    %v400 = vunpack.c.h.b16 %v122
    %v401 = vunpack.c.l.b16 %v123
    %v402 = vunpack.c.h.b16 %v123
    %v403 = vunpack.c.l.b16 %v124
    %v404 = vunpack.c.h.b16 %v124
    %v405 = vunpack.c.l.b16 %v125
    %v406 = vunpack.c.h.b16 %v125
    %v407 = vunpack.c.l.b16 %v126
    %v408 = vunpack.c.h.b16 %v126
    %v409 = vunpack.c.l.b16 %v127
    %v410 = vunpack.c.h.b16 %v127
    %v411 = vunpack.c.l.b16 %v128
    %v412 = vunpack.c.h.b16 %v128
    %v413 = vunpack.c.l.b16 %v129
    %v414 = vunpack.c.h.b16 %v129
    %v415 = vunpack.c.l.b16 %v130
    %v416 = vunpack.c.h.b16 %v130
    %v417 = vunpack.c.l.b16 %v131
    %v418 = vunpack.c.h.b16 %v131
    %v419 = vunpack.c.l.b16 %v132
    %v420 = vunpack.c.h.b16 %v132
    %v421 = vunpack.c.l.b16 %v133
    %v422 = vunpack.c.h.b16 %v133
    %v423 = vunpack.c.l.b16 %v134
    %v424 = vunpack.c.h.b16 %v134
    %v425 = vunpack.c.l.b16 %v135
    %v426 = vunpack.c.h.b16 %v135
    %v427 = vunpack.c.l.b16 %v136
    %v428 = vunpack.c.h.b16 %v136
    %v429 = vunpack.c.l.b16 %v137
    %v430 = vunpack.c.h.b16 %v137
    %v431 = vunpack.c.l.b16 %v138
    %v432 = vunpack.c.h.b16 %v138
    %v433 = vunpack.c.l.b16 %v139
    %v434 = vunpack.c.h.b16 %v139
    %v435 = vunpack.c.l.b16 %v140
    %v436 = vunpack.c.h.b16 %v140
    %v437 = vunpack.c.l.b16 %v141
    %v438 = vunpack.c.h.b16 %v141
    %v439 = vunpack.c.l.b16 %v142
    %v440 = vunpack.c.h.b16 %v142
    %v441 = vunpack.c.l.b16 %v143
    %v442 = vunpack.c.h.b16 %v143
    %v443 = vunpack.c.l.b16 %v144
    %v444 = vunpack.c.h.b16 %v144
    %v445 = vunpack.c.l.b16 %v145
    %v446 = vunpack.c.h.b16 %v145
    %v447 = vunpack.c.l.b16 %v146
    %v448 = vunpack.c.h.b16 %v146
    %v449 = vunpack.c.l.b16 %v147
    %v450 = vunpack.c.h.b16 %v147
    %v451 = vunpack.c.l.b16 %v148
    %v452 = vunpack.c.h.b16 %v148
    %v453 = vunpack.c.l.b16 %v149
    %v454 = vunpack.c.h.b16 %v149
    %v455 = vunpack.c.l.b16 %v150
    %v456 = vunpack.c.h.b16 %v150
    %v457 = vunpack.c.l.b16 %v151
    %v458 = vunpack.c.h.b16 %v151
    %v459 = vunpack.c.l.b16 %v152
    %v460 = vunpack.c.h.b16 %v152
    %v461 = vunpack.c.l.b16 %v153
    %v462 = vunpack.c.h.b16 %v153
    %v463 = vunpack.c.l.b16 %v154
    %v464 = vunpack.c.h.b16 %v154
    %v465 = vunpack.c.l.b16 %v155
    %v466 = vunpack.c.h.b16 %v155
    %v467 = vunpack.c.l.b16 %v156
    %v468 = vunpack.c.h.b16 %v156
    %v469 = vunpack.c.l.b16 %v157
    %v470 = vunpack.c.h.b16 %v157
    %v471 = vunpack.c.l.b16 %v158
    %v472 = vunpack.c.h.b16 %v158
    %v473 = vunpack.c.l.b16 %v159
    %v474 = vunpack.c.h.b16 %v159
    %v475 = vunpack.c.l.b16 %v160
    %v476 = vunpack.c.h.b16 %v160
    %v477 = vunpack.c.l.b16 %v161
    %v478 = vunpack.c.h.b16 %v161
    %v479 = vunpack.c.l.b16 %v162
    %v480 = vunpack.c.h.b16 %v162
    %v481 = vunpack.c.l.b16 %v163
    %v482 = vunpack.c.h.b16 %v163
    %v483 = vunpack.c.l.b16 %v164
    %v484 = vunpack.c.h.b16 %v164
    %v485 = vunpack.c.l.b16 %v165
    %v486 = vunpack.c.h.b16 %v165
    %v487 = vunpack.c.l.b16 %v166
    %v488 = vunpack.c.h.b16 %v166
    %v489 = vunpack.c.l.b16 %v167
    %v490 = vunpack.c.h.b16 %v167
    %v491 = vunpack.c.l.b16 %v168
    %v492 = vunpack.c.h.b16 %v168
    %v493 = vunpack.c.l.b16 %v169
    %v494 = vunpack.c.h.b16 %v169
    %v495 = vunpack.c.l.b16 %v170
    %v496 = vunpack.c.h.b16 %v170
    %v497 = vunpack.c.l.b16 %v171
    %v498 = vunpack.c.h.b16 %v171
    %v499 = vunpack.c.l.b16 %v172
    %v500 = vunpack.c.h.b16 %v172
    %v501 = vunpack.c.l.b16 %v173
    %v502 = vunpack.c.h.b16 %v173
    %v503 = vunpack.c.l.b16 %v174
    %v504 = vunpack.c.h.b16 %v174
    %v505 = vunpack.c.l.b16 %v175
    %v506 = vunpack.c.h.b16 %v175
    %v507 = vunpack.c.l.b16 %v176
    %v508 = vunpack.c.h.b16 %v176
    %v509 = vunpack.c.l.b16 %v177
    %v510 = vunpack.c.h.b16 %v177
    %v511 = vunpack.c.l.b16 %v178
    %v512 = vunpack.c.h.b16 %v178
    %v513 = vunpack.c.l.b16 %v179
    %v514 = vunpack.c.h.b16 %v179
    %v515 = vunpack.c.l.b16 %v180
    %v516 = vunpack.c.h.b16 %v180
    %v517 = vunpack.c.l.b16 %v181
    %v518 = vunpack.c.h.b16 %v181
    %v519 = vunpack.c.l.b16 %v182
    %v520 = vunpack.c.h.b16 %v182
    %v521 = vunpack.c.l.b16 %v183
    %v522 = vunpack.c.h.b16 %v183
    %v523 = vunpack.c.l.b16 %v184
    %v524 = vunpack.c.h.b16 %v184
    %v525 = vunpack.c.l.b16 %v185
    %v526 = vunpack.c.h.b16 %v185
    %v527 = vunpack.c.l.b16 %v186
    %v528 = vunpack.c.h.b16 %v186
    %v529 = vunpack.c.l.b16 %v187
    %v530 = vunpack.c.h.b16 %v187
    %v531 = vunpack.c.l.b16 %v188
    %v532 = vunpack.c.h.b16 %v188
    %v533 = vunpack.c.l.b16 %v189
    %v534 = vunpack.c.h.b16 %v189
    %v535 = vunpack.c.l.b16 %v190
    %v536 = vunpack.c.h.b16 %v190
    %v537 = vunpack.c.l.b16 %v191
    %v538 = vunpack.c.h.b16 %v191
    %v539 = vunpack.c.l.b16 %v192
    %v540 = vunpack.c.h.b16 %v192
    %v541 = vunpack.c.l.b16 %v193
    %v542 = vunpack.c.h.b16 %v193
    %v543 = vunpack.c.l.b16 %v194
    %v544 = vunpack.c.h.b16 %v194
    %v545 = vunpack.c.l.b16 %v195
    %v546 = vunpack.c.h.b16 %v195
    %v547 = vunpack.c.l.b16 %v196
    %v548 = vunpack.c.h.b16 %v196
    %v549 = vunpack.c.l.b16 %v197
    %v550 = vunpack.c.h.b16 %v197
    %v551 = vunpack.c.l.b16 %v198
    %v552 = vunpack.c.h.b16 %v198
    %v553 = vunpack.c.l.b16 %v199
    %v554 = vunpack.c.h.b16 %v199
    %v555 = vunpack.c.l.b16 %v200
    %v556 = vunpack.c.h.b16 %v200
    %v557 = vunpack.c.l.b16 %v201
    %v558 = vunpack.c.h.b16 %v201
    %v559 = vunpack.c.l.b16 %v202
    %v560 = vunpack.c.h.b16 %v202
    %v561 = vunpack.c.l.b16 %v203
    %v562 = vunpack.c.h.b16 %v203
    %v563 = vunpack.c.l.b16 %v204
    %v564 = vunpack.c.h.b16 %v204
    %v565 = vunpack.c.l.b16 %v205
    %v566 = vunpack.c.h.b16 %v205
    %v567 = vunpack.c.l.b16 %v206
    %v568 = vunpack.c.h.b16 %v206
    %v569 = vunpack.c.l.b16 %v207
    %v570 = vunpack.c.h.b16 %v207
    %v571 = vunpack.c.l.b16 %v208
    %v572 = vunpack.c.h.b16 %v208
    %v573 = vunpack.c.l.b16 %v209
    %v574 = vunpack.c.h.b16 %v209
    %v575 = vunpack.c.l.b16 %v210
    %v576 = vunpack.c.h.b16 %v210
    %v577 = vunpack.c.l.b16 %v211
    %v578 = vunpack.c.h.b16 %v211
    %v579 = vunpack.c.l.b16 %v212
    %v580 = vunpack.c.h.b16 %v212
    %v581 = vunpack.c.l.b16 %v213
    %v582 = vunpack.c.h.b16 %v213
    %v583 = vunpack.c.l.b16 %v214
    %v584 = vunpack.c.h.b16 %v214
    %v585 = vunpack.c.l.b16 %v215
    %v586 = vunpack.c.h.b16 %v215
    %v587 = vunpack.c.l.b16 %v216
    %v588 = vunpack.c.h.b16 %v216
    %v589 = vunpack.c.l.b16 %v217
    %v590 = vunpack.c.h.b16 %v217
    %v591 = vunpack.c.l.b16 %v218
    %v592 = vunpack.c.h.b16 %v218
    %v593 = vunpack.c.l.b16 %v219
    %v594 = vunpack.c.h.b16 %v219
    %v595 = vunpack.c.l.b16 %v220
    %v596 = vunpack.c.h.b16 %v220
    %v597 = vunpack.c.l.b16 %v221
    %v598 = vunpack.c.h.b16 %v221
    %v599 = vunpack.c.l.b16 %v222
    %v600 = vunpack.c.h.b16 %v222
    %v601 = vunpack.c.l.b16 %v223
    %v602 = vunpack.c.h.b16 %v223
    %v603 = vunpack.c.l.b16 %v224
    %v604 = vunpack.c.h.b16 %v224
    %v605 = vunpack.c.l.b16 %v225
    %v606 = vunpack.c.h.b16 %v225
    %v607 = vunpack.c.l.b16 %v226
    %v608 = vunpack.c.h.b16 %v226
    %v609 = vunpack.c.l.b16 %v227
    %v610 = vunpack.c.h.b16 %v227
    %v611 = vunpack.c.l.b16 %v228
    %v612 = vunpack.c.h.b16 %v228
    %v613 = vpack.c.b16 %v365, %v357
    %v614 = vpack.c.b16 %v366, %v358
    %v615 = vpack.c.b16 %v367, %v359
    %v616 = vpack.c.b16 %v368, %v360
    %v617 = vpack.c.b16 %v369, %v361
    %v618 = vpack.c.b16 %v370, %v362
    %v619 = vpack.c.b16 %v371, %v363
    %v620 = vpack.c.b16 %v372, %v364
    %v621 = vpack.c.b16 %v381, %v373
    %v622 = vpack.c.b16 %v382, %v374
    %v623 = vpack.c.b16 %v383, %v375
    %v624 = vpack.c.b16 %v384, %v376
    %v625 = vpack.c.b16 %v385, %v377
    %v626 = vpack.c.b16 %v386, %v378
    %v627 = vpack.c.b16 %v387, %v379
    %v628 = vpack.c.b16 %v388, %v380
    %v629 = vpack.c.b16 %v397, %v389
    %v630 = vpack.c.b16 %v398, %v390
    %v631 = vpack.c.b16 %v399, %v391
    %v632 = vpack.c.b16 %v400, %v392
    %v633 = vpack.c.b16 %v401, %v393
    %v634 = vpack.c.b16 %v402, %v394
    %v635 = vpack.c.b16 %v403, %v395
    %v636 = vpack.c.b16 %v404, %v396
    %v637 = vpack.c.b16 %v413, %v405
    %v638 = vpack.c.b16 %v414, %v406
    %v639 = vpack.c.b16 %v415, %v407
    %v640 = vpack.c.b16 %v416, %v408
    %v641 = vpack.c.b16 %v417, %v409
    %v642 = vpack.c.b16 %v418, %v410
    %v643 = vpack.c.b16 %v419, %v411
    %v644 = vpack.c.b16 %v420, %v412
    %v645 = vpack.c.b16 %v429, %v421
    %v646 = vpack.c.b16 %v430, %v422
    %v647 = vpack.c.b16 %v431, %v423
    %v648 = vpack.c.b16 %v432, %v424
    %v649 = vpack.c.b16 %v433, %v425
    %v650 = vpack.c.b16 %v434, %v426
    %v651 = vpack.c.b16 %v435, %v427
    %v652 = vpack.c.b16 %v436, %v428
    %v653 = vpack.c.b16 %v445, %v437
    %v654 = vpack.c.b16 %v446, %v438
    %v655 = vpack.c.b16 %v447, %v439
    %v656 = vpack.c.b16 %v448, %v440
    %v657 = vpack.c.b16 %v449, %v441
    %v658 = vpack.c.b16 %v450, %v442
    %v659 = vpack.c.b16 %v451, %v443
    %v660 = vpack.c.b16 %v452, %v444
    %v661 = vpack.c.b16 %v461, %v453
    %v662 = vpack.c.b16 %v462, %v454
    %v663 = vpack.c.b16 %v463, %v455
    %v664 = vpack.c.b16 %v464, %v456
    %v665 = vpack.c.b16 %v465, %v457
    %v666 = vpack.c.b16 %v466, %v458
    %v667 = vpack.c.b16 %v467, %v459
    %v668 = vpack.c.b16 %v468, %v460
    %v669 = vpack.c.b16 %v477, %v469
    %v670 = vpack.c.b16 %v478, %v470
    %v671 = vpack.c.b16 %v479, %v471
    %v672 = vpack.c.b16 %v480, %v472
    %v673 = vpack.c.b16 %v481, %v473
    %v674 = vpack.c.b16 %v482, %v474
    %v675 = vpack.c.b16 %v483, %v475
    %v676 = vpack.c.b16 %v484, %v476
    %v677 = vpack.c.b16 %v493, %v485
    %v678 = vpack.c.b16 %v494, %v486
    %v679 = vpack.c.b16 %v495, %v487
    %v680 = vpack.c.b16 %v496, %v488
    %v681 = vpack.c.b16 %v497, %v489
    %v682 = vpack.c.b16 %v498, %v490
    %v683 = vpack.c.b16 %v499, %v491
    %v684 = vpack.c.b16 %v500, %v492
    %v685 = vpack.c.b16 %v509, %v501
    %v686 = vpack.c.b16 %v510, %v502
    %v687 = vpack.c.b16 %v511, %v503
    %v688 = vpack.c.b16 %v512, %v504
    %v689 = vpack.c.b16 %v513, %v505
    %v690 = vpack.c.b16 %v514, %v506
    %v691 = vpack.c.b16 %v515, %v507
    %v692 = vpack.c.b16 %v516, %v508
    %v693 = vpack.c.b16 %v525, %v517
    %v694 = vpack.c.b16 %v526, %v518
    %v695 = vpack.c.b16 %v527, %v519
    %v696 = vpack.c.b16 %v528, %v520
    %v697 = vpack.c.b16 %v529, %v521
    %v698 = vpack.c.b16 %v530, %v522
    %v699 = vpack.c.b16 %v531, %v523
    %v700 = vpack.c.b16 %v532, %v524
    %v701 = vpack.c.b16 %v541, %v533
    %v702 = vpack.c.b16 %v542, %v534
    %v703 = vpack.c.b16 %v543, %v535
    %v704 = vpack.c.b16 %v544, %v536
    %v705 = vpack.c.b16 %v545, %v537
    %v706 = vpack.c.b16 %v546, %v538
    %v707 = vpack.c.b16 %v547, %v539
    %v708 = vpack.c.b16 %v548, %v540
    %v709 = vpack.c.b16 %v557, %v549
    %v710 = vpack.c.b16 %v558, %v550
    %v711 = vpack.c.b16 %v559, %v551
    %v712 = vpack.c.b16 %v560, %v552
    %v713 = vpack.c.b16 %v561, %v553
    %v714 = vpack.c.b16 %v562, %v554
    %v715 = vpack.c.b16 %v563, %v555
    %v716 = vpack.c.b16 %v564, %v556
    %v717 = vpack.c.b16 %v573, %v565
    %v718 = vpack.c.b16 %v574, %v566
    %v719 = vpack.c.b16 %v575, %v567
    %v720 = vpack.c.b16 %v576, %v568
    %v721 = vpack.c.b16 %v577, %v569
    %v722 = vpack.c.b16 %v578, %v570
    %v723 = vpack.c.b16 %v579, %v571
    %v724 = vpack.c.b16 %v580, %v572
    %v725 = vpack.c.b16 %v589, %v581
    %v726 = vpack.c.b16 %v590, %v582
    %v727 = vpack.c.b16 %v591, %v583
    %v728 = vpack.c.b16 %v592, %v584
    %v729 = vpack.c.b16 %v593, %v585
    %v730 = vpack.c.b16 %v594, %v586
    %v731 = vpack.c.b16 %v595, %v587
    %v732 = vpack.c.b16 %v596, %v588
    %v733 = vpack.c.b16 %v605, %v597
    %v734 = vpack.c.b16 %v606, %v598
    %v735 = vpack.c.b16 %v607, %v599
    %v736 = vpack.c.b16 %v608, %v600
    %v737 = vpack.c.b16 %v609, %v601
    %v738 = vpack.c.b16 %v610, %v602
    %v739 = vpack.c.b16 %v611, %v603
    %v740 = vpack.c.b16 %v612, %v604
    %869 = vmatprep.subr.bf16.mxu0 %v614
    %870 = vmatpush1.bf16.msra.mxu0 %v613
    %871 = vmatprep.subr.bf16.mxu0 %v622
    %872 = vmatpush1.bf16.msra.mxu0 %v621
    %873 = vmatprep.subr.bf16.mxu0 %v630
    %874 = vmatpush1.bf16.msra.mxu0 %v629
    %875 = vmatprep.subr.bf16.mxu0 %v638
    %876 = vmatpush1.bf16.msra.mxu0 %v637
    %877 = vmatprep.subr.bf16.mxu0 %v646
    %878 = vmatpush1.bf16.msra.mxu0 %v645
    %879 = vmatprep.subr.bf16.mxu0 %v654
    %880 = vmatpush1.bf16.msra.mxu0 %v653
    %881 = vmatprep.subr.bf16.mxu0 %v662
    %882 = vmatpush1.bf16.msra.mxu0 %v661
    %883 = vmatprep.subr.bf16.mxu0 %v670
    %884 = vmatpush1.bf16.msra.mxu0 %v669
    %885 = vmatprep.subr.bf16.mxu0 %v678
    %886 = vmatpush1.bf16.msra.mxu0 %v677
    %887 = vmatprep.subr.bf16.mxu0 %v686
    %888 = vmatpush1.bf16.msra.mxu0 %v685
    %889 = vmatprep.subr.bf16.mxu0 %v694
    %890 = vmatpush1.bf16.msra.mxu0 %v693
    %891 = vmatprep.subr.bf16.mxu0 %v702
    %892 = vmatpush1.bf16.msra.mxu0 %v701
    %893 = vmatprep.subr.bf16.mxu0 %v710
    %894 = vmatpush1.bf16.msra.mxu0 %v709
    %895 = vmatprep.subr.bf16.mxu0 %v718
    %896 = vmatpush1.bf16.msra.mxu0 %v717
    %897 = vmatprep.subr.bf16.mxu0 %v726
    %898 = vmatpush1.bf16.msra.mxu0 %v725
    %899 = vmatprep.subr.bf16.mxu0 %v734
    %900 = vmatpush1.bf16.msra.mxu0 %v733
    %901 = vmatprep.mubr.bf16.mxu0 %v100
    %902 = vmatmul.mubr.bf16.gmra.mrb[0].mxu0 %v99
    %v903 = vpop.f32.mrb[0].mxu0
    %v904 = vadd.f32 0.0, %v903
    %v905 = vpop.f32.mrb[0].mxu0
    %v906 = vadd.f32 0.0, %v905
    %v907 = vpop.f32.mrb[0].mxu0
    %v908 = vpop.f32.mrb[0].mxu0
    %909 = vdwg.mxu0
    %910 = vmatprep.subr.bf16.mxu0 %v616
    %911 = vmatpush1.bf16.msra.mxu0 %v615
    %912 = vmatprep.subr.bf16.mxu0 %v624
    %913 = vmatpush1.bf16.msra.mxu0 %v623
    %914 = vmatprep.subr.bf16.mxu0 %v632
    %915 = vmatpush1.bf16.msra.mxu0 %v631
    %916 = vmatprep.subr.bf16.mxu0 %v640
    %917 = vmatpush1.bf16.msra.mxu0 %v639
    %918 = vmatprep.subr.bf16.mxu0 %v648
    %919 = vmatpush1.bf16.msra.mxu0 %v647
    %920 = vmatprep.subr.bf16.mxu0 %v656
    %921 = vmatpush1.bf16.msra.mxu0 %v655
    %922 = vmatprep.subr.bf16.mxu0 %v664
    %923 = vmatpush1.bf16.msra.mxu0 %v663
    %924 = vmatprep.subr.bf16.mxu0 %v672
    %925 = vmatpush1.bf16.msra.mxu0 %v671
    %926 = vmatprep.subr.bf16.mxu0 %v680
    %927 = vmatpush1.bf16.msra.mxu0 %v679
    %928 = vmatprep.subr.bf16.mxu0 %v688
    %929 = vmatpush1.bf16.msra.mxu0 %v687
    %930 = vmatprep.subr.bf16.mxu0 %v696
    %931 = vmatpush1.bf16.msra.mxu0 %v695
    %932 = vmatprep.subr.bf16.mxu0 %v704
    %933 = vmatpush1.bf16.msra.mxu0 %v703
    %934 = vmatprep.subr.bf16.mxu0 %v712
    %935 = vmatpush1.bf16.msra.mxu0 %v711
    %936 = vmatprep.subr.bf16.mxu0 %v720
    %937 = vmatpush1.bf16.msra.mxu0 %v719
    %938 = vmatprep.subr.bf16.mxu0 %v728
    %939 = vmatpush1.bf16.msra.mxu0 %v727
    %940 = vmatprep.subr.bf16.mxu0 %v736
    %941 = vmatpush1.bf16.msra.mxu0 %v735
    %942 = vmatprep.mubr.bf16.mxu0 %v100
    %943 = vmatmul.mubr.bf16.gmra.mrb[0].mxu0 %v99
    %v944 = vpop.f32.mrb[0].mxu0
    %v945 = vadd.f32 0.0, %v944
    %v946 = vpop.f32.mrb[0].mxu0
    %v947 = vadd.f32 0.0, %v946
    %v948 = vpop.f32.mrb[0].mxu0
    %v949 = vpop.f32.mrb[0].mxu0
    %950 = vdwg.mxu0
    %951 = vmatprep.subr.bf16.mxu0 %v618
    %952 = vmatpush1.bf16.msra.mxu0 %v617
    %953 = vmatprep.subr.bf16.mxu0 %v626
    %954 = vmatpush1.bf16.msra.mxu0 %v625
    %955 = vmatprep.subr.bf16.mxu0 %v634
    %956 = vmatpush1.bf16.msra.mxu0 %v633
    %957 = vmatprep.subr.bf16.mxu0 %v642
    %958 = vmatpush1.bf16.msra.mxu0 %v641
    %959 = vmatprep.subr.bf16.mxu0 %v650
    %960 = vmatpush1.bf16.msra.mxu0 %v649
    %961 = vmatprep.subr.bf16.mxu0 %v658
    %962 = vmatpush1.bf16.msra.mxu0 %v657
    %963 = vmatprep.subr.bf16.mxu0 %v666
    %964 = vmatpush1.bf16.msra.mxu0 %v665
    %965 = vmatprep.subr.bf16.mxu0 %v674
    %966 = vmatpush1.bf16.msra.mxu0 %v673
    %967 = vmatprep.subr.bf16.mxu0 %v682
    %968 = vmatpush1.bf16.msra.mxu0 %v681
    %969 = vmatprep.subr.bf16.mxu0 %v690
    %970 = vmatpush1.bf16.msra.mxu0 %v689
    %971 = vmatprep.subr.bf16.mxu0 %v698
    %972 = vmatpush1.bf16.msra.mxu0 %v697
    %973 = vmatprep.subr.bf16.mxu0 %v706
    %974 = vmatpush1.bf16.msra.mxu0 %v705
    %975 = vmatprep.subr.bf16.mxu0 %v714
    %976 = vmatpush1.bf16.msra.mxu0 %v713
    %977 = vmatprep.subr.bf16.mxu0 %v722
    %978 = vmatpush1.bf16.msra.mxu0 %v721
    %979 = vmatprep.subr.bf16.mxu0 %v730
    %980 = vmatpush1.bf16.msra.mxu0 %v729
    %981 = vmatprep.subr.bf16.mxu0 %v738
    %982 = vmatpush1.bf16.msra.mxu0 %v737
    %983 = vmatprep.mubr.bf16.mxu0 %v100
    %984 = vmatmul.mubr.bf16.gmra.mrb[0].mxu0 %v99
    %v985 = vpop.f32.mrb[0].mxu0
    %v986 = vadd.f32 0.0, %v985
    %v987 = vpop.f32.mrb[0].mxu0
    %v988 = vadd.f32 0.0, %v987
    %v989 = vpop.f32.mrb[0].mxu0
    %v990 = vpop.f32.mrb[0].mxu0
    %991 = vdwg.mxu0
    %992 = vmatprep.subr.bf16.mxu0 %v620
    %993 = vmatpush1.bf16.msra.mxu0 %v619
    %994 = vmatprep.subr.bf16.mxu0 %v628
    %995 = vmatpush1.bf16.msra.mxu0 %v627
    %996 = vmatprep.subr.bf16.mxu0 %v636
    %997 = vmatpush1.bf16.msra.mxu0 %v635
    %998 = vmatprep.subr.bf16.mxu0 %v644
    %999 = vmatpush1.bf16.msra.mxu0 %v643
    %1000 = vmatprep.subr.bf16.mxu0 %v652
    %1001 = vmatpush1.bf16.msra.mxu0 %v651
    %1002 = vmatprep.subr.bf16.mxu0 %v660
    %1003 = vmatpush1.bf16.msra.mxu0 %v659
    %1004 = vmatprep.subr.bf16.mxu0 %v668
    %1005 = vmatpush1.bf16.msra.mxu0 %v667
    %1006 = vmatprep.subr.bf16.mxu0 %v676
    %1007 = vmatpush1.bf16.msra.mxu0 %v675
    %1008 = vmatprep.subr.bf16.mxu0 %v684
    %1009 = vmatpush1.bf16.msra.mxu0 %v683
    %1010 = vmatprep.subr.bf16.mxu0 %v692
    %1011 = vmatpush1.bf16.msra.mxu0 %v691
    %1012 = vmatprep.subr.bf16.mxu0 %v700
    %1013 = vmatpush1.bf16.msra.mxu0 %v699
    %1014 = vmatprep.subr.bf16.mxu0 %v708
    %1015 = vmatpush1.bf16.msra.mxu0 %v707
    %1016 = vmatprep.subr.bf16.mxu0 %v716
    %1017 = vmatpush1.bf16.msra.mxu0 %v715
    %1018 = vmatprep.subr.bf16.mxu0 %v724
    %1019 = vmatpush1.bf16.msra.mxu0 %v723
    %1020 = vmatprep.subr.bf16.mxu0 %v732
    %1021 = vmatpush1.bf16.msra.mxu0 %v731
    %1022 = vmatprep.subr.bf16.mxu0 %v740
    %1023 = vmatpush1.bf16.msra.mxu0 %v739
    %1024 = vmatprep.mubr.bf16.mxu0 %v100
    %1025 = vmatmul.mubr.bf16.gmra.mrb[0].mxu0 %v99
    %v1026 = vpop.f32.mrb[0].mxu0
    %v1027 = vadd.f32 0.0, %v1026
    %v1028 = vpop.f32.mrb[0].mxu0
    %v1029 = vadd.f32 0.0, %v1028
    %v1030 = vpop.f32.mrb[0].mxu0
    %v1031 = vpop.f32.mrb[0].mxu0
    %1032 = vdwg.mxu0
    %v1057 = vunpack.c.l.b16 %v75
    %v1058 = vunpack.c.h.b16 %v75
    %v1059 = vunpack.c.l.b16 %v76
    %v1060 = vunpack.c.h.b16 %v76
    %v1061 = vunpack.c.l.b16 %v77
    %v1062 = vunpack.c.h.b16 %v77
    %v1063 = vunpack.c.l.b16 %v78
    %v1064 = vunpack.c.h.b16 %v78
    %v1065 = vunpack.c.l.b16 %v79
    %v1066 = vunpack.c.h.b16 %v79
    %v1067 = vunpack.c.l.b16 %v80
    %v1068 = vunpack.c.h.b16 %v80
    %v1069 = vunpack.c.l.b16 %v81
    %v1070 = vunpack.c.h.b16 %v81
    %v1071 = vunpack.c.l.b16 %v82
    %v1072 = vunpack.c.h.b16 %v82
    %v1073 = vunpack.c.l.b16 %v83
    %v1074 = vunpack.c.h.b16 %v83
    %v1075 = vunpack.c.l.b16 %v84
    %v1076 = vunpack.c.h.b16 %v84
    %v1077 = vunpack.c.l.b16 %v85
    %v1078 = vunpack.c.h.b16 %v85
    %v1079 = vunpack.c.l.b16 %v86
    %v1080 = vunpack.c.h.b16 %v86
    %v1081 = vunpack.c.l.b16 %v87
    %v1082 = vunpack.c.h.b16 %v87
    %v1083 = vunpack.c.l.b16 %v88
    %v1084 = vunpack.c.h.b16 %v88
    %v1085 = vunpack.c.l.b16 %v89
    %v1086 = vunpack.c.h.b16 %v89
    %v1087 = vunpack.c.l.b16 %v90
    %v1088 = vunpack.c.h.b16 %v90
    %v1089 = vunpack.c.l.b16 %v91
    %v1090 = vunpack.c.h.b16 %v91
    %v1091 = vunpack.c.l.b16 %v92
    %v1092 = vunpack.c.h.b16 %v92
    %v1093 = vunpack.c.l.b16 %v93
    %v1094 = vunpack.c.h.b16 %v93
    %v1095 = vunpack.c.l.b16 %v94
    %v1096 = vunpack.c.h.b16 %v94
    %v1097 = vunpack.c.l.b16 %v95
    %v1098 = vunpack.c.h.b16 %v95
    %v1099 = vunpack.c.l.b16 %v96
    %v1100 = vunpack.c.h.b16 %v96
    %v1101 = vunpack.c.l.b16 %v97
    %v1102 = vunpack.c.h.b16 %v97
    %v1103 = vunpack.c.l.b16 %v98
    %v1104 = vunpack.c.h.b16 %v98
    %v1105 = vpack.c.b16 %v1065, %v1057
    %v1106 = vpack.c.b16 %v1066, %v1058
    %v1107 = vpack.c.b16 %v1067, %v1059
    %v1108 = vpack.c.b16 %v1068, %v1060
    %v1109 = vpack.c.b16 %v1069, %v1061
    %v1110 = vpack.c.b16 %v1070, %v1062
    %v1111 = vpack.c.b16 %v1071, %v1063
    %v1112 = vpack.c.b16 %v1072, %v1064
    %v1113 = vpack.c.b16 %v1081, %v1073
    %v1114 = vpack.c.b16 %v1082, %v1074
    %v1115 = vpack.c.b16 %v1083, %v1075
    %v1116 = vpack.c.b16 %v1084, %v1076
    %v1117 = vpack.c.b16 %v1085, %v1077
    %v1118 = vpack.c.b16 %v1086, %v1078
    %v1119 = vpack.c.b16 %v1087, %v1079
    %v1120 = vpack.c.b16 %v1088, %v1080
    %v1121 = vpack.c.b16 %v1097, %v1089
    %v1122 = vpack.c.b16 %v1098, %v1090
    %v1123 = vpack.c.b16 %v1099, %v1091
    %v1124 = vpack.c.b16 %v1100, %v1092
    %v1125 = vpack.c.b16 %v1101, %v1093
    %v1126 = vpack.c.b16 %v1102, %v1094
    %v1127 = vpack.c.b16 %v1103, %v1095
    %v1128 = vpack.c.b16 %v1104, %v1096
    %vm1153 = vcmask 392192
    %v1155 = vsel %vm1153, %v73, 0
    %1157 = vmatprep.subr.bf16.mxu0 %v1106
    %1158 = vmatpush1.bf16.msra.mxu0 %v1105
    %1159 = vmatprep.subr.bf16.mxu0 %v1114
    %1160 = vmatpush1.bf16.msra.mxu0 %v1113
    %1161 = vmatprep.subr.bf16.mxu0 %v1122
    %1162 = vmatpush1.bf16.msra.mxu0 %v1121
    %1163 = vmatprep.subr.bf16.mxu0 0
    %1164 = vmatpush1.bf16.msra.mxu0 0
    %1165 = vmatprep.subr.bf16.mxu0 0
    %1166 = vmatpush1.bf16.msra.mxu0 0
    %1167 = vmatprep.subr.bf16.mxu0 0
    %1168 = vmatpush1.bf16.msra.mxu0 0
    %1169 = vmatprep.subr.bf16.mxu0 0
    %1170 = vmatpush1.bf16.msra.mxu0 0
    %1171 = vmatprep.subr.bf16.mxu0 0
    %1172 = vmatpush1.bf16.msra.mxu0 0
    %1173 = vmatprep.subr.bf16.mxu0 0
    %1174 = vmatpush1.bf16.msra.mxu0 0
    %1175 = vmatprep.subr.bf16.mxu0 0
    %1176 = vmatpush1.bf16.msra.mxu0 0
    %1177 = vmatprep.subr.bf16.mxu0 0
    %1178 = vmatpush1.bf16.msra.mxu0 0
    %1179 = vmatprep.subr.bf16.mxu0 0
    %1180 = vmatpush1.bf16.msra.mxu0 0
    %1181 = vmatprep.subr.bf16.mxu0 0
    %1182 = vmatpush1.bf16.msra.mxu0 0
    %1183 = vmatprep.subr.bf16.mxu0 0
    %1184 = vmatpush1.bf16.msra.mxu0 0
    %1185 = vmatprep.subr.bf16.mxu0 0
    %1186 = vmatpush1.bf16.msra.mxu0 0
    %1187 = vmatprep.subr.bf16.mxu0 0
    %1188 = vmatpush1.bf16.msra.mxu0 0
    %1189 = vmatprep.mubr.bf16.mxu0 0
    %1190 = vmatmul.mubr.bf16.gmra.mrb[0].mxu0 %v1155
    %v1191 = vpop.f32.mrb[0].mxu0
    %v1192 = vadd.f32 %v904, %v1191
    %v1193 = vpop.f32.mrb[0].mxu0
    %v1194 = vadd.f32 %v906, %v1193
    %v1195 = vpop.f32.mrb[0].mxu0
    %v1196 = vpop.f32.mrb[0].mxu0
    %1197 = vdwg.mxu0
    %1198 = vmatprep.subr.bf16.mxu0 %v1108
    %1199 = vmatpush1.bf16.msra.mxu0 %v1107
    %1200 = vmatprep.subr.bf16.mxu0 %v1116
    %1201 = vmatpush1.bf16.msra.mxu0 %v1115
    %1202 = vmatprep.subr.bf16.mxu0 %v1124
    %1203 = vmatpush1.bf16.msra.mxu0 %v1123
    %1204 = vmatprep.subr.bf16.mxu0 0
    %1205 = vmatpush1.bf16.msra.mxu0 0
    %1206 = vmatprep.subr.bf16.mxu0 0
    %1207 = vmatpush1.bf16.msra.mxu0 0
    %1208 = vmatprep.subr.bf16.mxu0 0
    %1209 = vmatpush1.bf16.msra.mxu0 0
    %1210 = vmatprep.subr.bf16.mxu0 0
    %1211 = vmatpush1.bf16.msra.mxu0 0
    %1212 = vmatprep.subr.bf16.mxu0 0
    %1213 = vmatpush1.bf16.msra.mxu0 0
    %1214 = vmatprep.subr.bf16.mxu0 0
    %1215 = vmatpush1.bf16.msra.mxu0 0
    %1216 = vmatprep.subr.bf16.mxu0 0
    %1217 = vmatpush1.bf16.msra.mxu0 0
    %1218 = vmatprep.subr.bf16.mxu0 0
    %1219 = vmatpush1.bf16.msra.mxu0 0
    %1220 = vmatprep.subr.bf16.mxu0 0
    %1221 = vmatpush1.bf16.msra.mxu0 0
    %1222 = vmatprep.subr.bf16.mxu0 0
    %1223 = vmatpush1.bf16.msra.mxu0 0
    %1224 = vmatprep.subr.bf16.mxu0 0
    %1225 = vmatpush1.bf16.msra.mxu0 0
    %1226 = vmatprep.subr.bf16.mxu0 0
    %1227 = vmatpush1.bf16.msra.mxu0 0
    %1228 = vmatprep.subr.bf16.mxu0 0
    %1229 = vmatpush1.bf16.msra.mxu0 0
    %1230 = vmatprep.mubr.bf16.mxu0 0
    %1231 = vmatmul.mubr.bf16.gmra.mrb[0].mxu0 %v1155
    %v1232 = vpop.f32.mrb[0].mxu0
    %v1233 = vadd.f32 %v945, %v1232
    %v1234 = vpop.f32.mrb[0].mxu0
    %v1235 = vadd.f32 %v947, %v1234
    %v1236 = vpop.f32.mrb[0].mxu0
    %v1237 = vpop.f32.mrb[0].mxu0
    %1238 = vdwg.mxu0
    %1239 = vmatprep.subr.bf16.mxu0 %v1110
    %1240 = vmatpush1.bf16.msra.mxu0 %v1109
    %1241 = vmatprep.subr.bf16.mxu0 %v1118
    %1242 = vmatpush1.bf16.msra.mxu0 %v1117
    %1243 = vmatprep.subr.bf16.mxu0 %v1126
    %1244 = vmatpush1.bf16.msra.mxu0 %v1125
    %1245 = vmatprep.subr.bf16.mxu0 0
    %1246 = vmatpush1.bf16.msra.mxu0 0
    %1247 = vmatprep.subr.bf16.mxu0 0
    %1248 = vmatpush1.bf16.msra.mxu0 0
    %1249 = vmatprep.subr.bf16.mxu0 0
    %1250 = vmatpush1.bf16.msra.mxu0 0
    %1251 = vmatprep.subr.bf16.mxu0 0
    %1252 = vmatpush1.bf16.msra.mxu0 0
    %1253 = vmatprep.subr.bf16.mxu0 0
    %1254 = vmatpush1.bf16.msra.mxu0 0
    %1255 = vmatprep.subr.bf16.mxu0 0
    %1256 = vmatpush1.bf16.msra.mxu0 0
    %1257 = vmatprep.subr.bf16.mxu0 0
    %1258 = vmatpush1.bf16.msra.mxu0 0
    %1259 = vmatprep.subr.bf16.mxu0 0
    %1260 = vmatpush1.bf16.msra.mxu0 0
    %1261 = vmatprep.subr.bf16.mxu0 0
    %1262 = vmatpush1.bf16.msra.mxu0 0
    %1263 = vmatprep.subr.bf16.mxu0 0
    %1264 = vmatpush1.bf16.msra.mxu0 0
    %1265 = vmatprep.subr.bf16.mxu0 0
    %1266 = vmatpush1.bf16.msra.mxu0 0
    %1267 = vmatprep.subr.bf16.mxu0 0
    %1268 = vmatpush1.bf16.msra.mxu0 0
    %1269 = vmatprep.subr.bf16.mxu0 0
    %1270 = vmatpush1.bf16.msra.mxu0 0
    %1271 = vmatprep.mubr.bf16.mxu0 0
    %1272 = vmatmul.mubr.bf16.gmra.mrb[0].mxu0 %v1155
    %v1273 = vpop.f32.mrb[0].mxu0
    %v1274 = vadd.f32 %v986, %v1273
    %v1275 = vpop.f32.mrb[0].mxu0
    %v1276 = vadd.f32 %v988, %v1275
    %v1277 = vpop.f32.mrb[0].mxu0
    %v1278 = vpop.f32.mrb[0].mxu0
    %1279 = vdwg.mxu0
    %1280 = vmatprep.subr.bf16.mxu0 %v1112
    %1281 = vmatpush1.bf16.msra.mxu0 %v1111
    %1282 = vmatprep.subr.bf16.mxu0 %v1120
    %1283 = vmatpush1.bf16.msra.mxu0 %v1119
    %1284 = vmatprep.subr.bf16.mxu0 %v1128
    %1285 = vmatpush1.bf16.msra.mxu0 %v1127
    %1286 = vmatprep.subr.bf16.mxu0 0
    %1287 = vmatpush1.bf16.msra.mxu0 0
    %1288 = vmatprep.subr.bf16.mxu0 0
    %1289 = vmatpush1.bf16.msra.mxu0 0
    %1290 = vmatprep.subr.bf16.mxu0 0
    %1291 = vmatpush1.bf16.msra.mxu0 0
    %1292 = vmatprep.subr.bf16.mxu0 0
    %1293 = vmatpush1.bf16.msra.mxu0 0
    %1294 = vmatprep.subr.bf16.mxu0 0
    %1295 = vmatpush1.bf16.msra.mxu0 0
    %1296 = vmatprep.subr.bf16.mxu0 0
    %1297 = vmatpush1.bf16.msra.mxu0 0
    %1298 = vmatprep.subr.bf16.mxu0 0
    %1299 = vmatpush1.bf16.msra.mxu0 0
    %1300 = vmatprep.subr.bf16.mxu0 0
    %1301 = vmatpush1.bf16.msra.mxu0 0
    %1302 = vmatprep.subr.bf16.mxu0 0
    %1303 = vmatpush1.bf16.msra.mxu0 0
    %1304 = vmatprep.subr.bf16.mxu0 0
    %1305 = vmatpush1.bf16.msra.mxu0 0
    %1306 = vmatprep.subr.bf16.mxu0 0
    %1307 = vmatpush1.bf16.msra.mxu0 0
    %1308 = vmatprep.subr.bf16.mxu0 0
    %1309 = vmatpush1.bf16.msra.mxu0 0
    %1310 = vmatprep.subr.bf16.mxu0 0
    %1311 = vmatpush1.bf16.msra.mxu0 0
    %1312 = vmatprep.mubr.bf16.mxu0 0
    %1313 = vmatmul.mubr.bf16.gmra.mrb[0].mxu0 %v1155
    %v1314 = vpop.f32.mrb[0].mxu0
    %v1315 = vadd.f32 %v1027, %v1314
    %v1316 = vpop.f32.mrb[0].mxu0
    %v1317 = vadd.f32 %v1029, %v1316
    %v1318 = vpop.f32.mrb[0].mxu0
    %v1319 = vpop.f32.mrb[0].mxu0
    %1320 = vdwg.mxu0
    %v1321 = vld [vmem:[%s4] sm:$0xff]
    %v1323 = vlaneseq
    %v1324 = vshrl.u32 %v1323, 7
    %v1325 = vsub.s32 0, %v1324
    %v1326 = vrot.slane %v1321, %v1325
    %v1327 = vlaneseq
    %v1328 = vshrl.u32 %v1327, 7
    %v1329 = vsub.s32 1, %v1328
    %v1330 = vrot.slane %v1321, %v1329
    %v1331 = vlaneseq
    %v1332 = vshrl.u32 %v1331, 7
    %v1333 = vsub.s32 2, %v1332
    %v1334 = vrot.slane %v1321, %v1333
    %v1335 = vlaneseq
    %v1336 = vshrl.u32 %v1335, 7
    %v1337 = vsub.s32 3, %v1336
    %v1338 = vrot.slane %v1321, %v1337
    %v1339 = vlaneseq
    %v1340 = vshrl.u32 %v1339, 7
    %v1341 = vsub.s32 4, %v1340
    %v1342 = vrot.slane %v1321, %v1341
    %v1343 = vlaneseq
    %v1344 = vshrl.u32 %v1343, 7
    %v1345 = vsub.s32 5, %v1344
    %v1346 = vrot.slane %v1321, %v1345
    %v1347 = vlaneseq
    %v1348 = vshrl.u32 %v1347, 7
    %v1349 = vsub.s32 6, %v1348
    %v1350 = vrot.slane %v1321, %v1349
    %v1351 = vlaneseq
    %v1352 = vshrl.u32 %v1351, 7
    %v1353 = vsub.s32 7, %v1352
    %v1354 = vrot.slane %v1321, %v1353
    %v1363 = vadd.f32 %v1192, %v1326
    %v1364 = vadd.f32 %v1194, %v1330
    %v1365 = vadd.f32 %v1233, %v1334
    %v1366 = vadd.f32 %v1235, %v1338
    %v1367 = vadd.f32 %v1274, %v1342
    %v1368 = vadd.f32 %v1276, %v1346
    %v1369 = vadd.f32 %v1315, %v1350
    %v1370 = vadd.f32 %v1317, %v1354
    %v1371 = vxor.u32 %v1363, 2147483648
    %v1372 = vxor.u32 %v1364, 2147483648
    %v1373 = vmul.f32 %v1371, 1.442695
    %v1374 = vpow.pop %v1373
    %v1375 = vmul.f32 %v1372, 1.442695
    %v1376 = vpow.pop %v1375
    %v1377 = vadd.f32 %v1374, 1.0
    %v1378 = vadd.f32 %v1376, 1.0
    %v1379 = vrcp.pop %v1377
    %v1380 = vmul.f32 1.0, %v1379
    %v1381 = vrcp.pop %v1378
    %v1382 = vmul.f32 1.0, %v1381
    %v1383 = vxor.u32 %v1365, 2147483648
    %v1384 = vxor.u32 %v1366, 2147483648
    %v1385 = vmul.f32 %v1383, 1.442695
    %v1386 = vpow.pop %v1385
    %v1387 = vmul.f32 %v1384, 1.442695
    %v1388 = vpow.pop %v1387
    %v1389 = vadd.f32 %v1386, 1.0
    %v1390 = vadd.f32 %v1388, 1.0
    %v1391 = vrcp.pop %v1389
    %v1392 = vmul.f32 1.0, %v1391
    %v1393 = vrcp.pop %v1390
    %v1394 = vmul.f32 1.0, %v1393
    %v1395 = vtanh.pop %v1367
    %v1396 = vtanh.pop %v1368
    %v1397 = vxor.u32 %v1369, 2147483648
    %v1398 = vxor.u32 %v1370, 2147483648
    %v1399 = vmul.f32 %v1397, 1.442695
    %v1400 = vpow.pop %v1399
    %v1401 = vmul.f32 %v1398, 1.442695
    %v1402 = vpow.pop %v1401
    %v1403 = vadd.f32 %v1400, 1.0
    %v1404 = vadd.f32 %v1402, 1.0
    %v1405 = vrcp.pop %v1403
    %v1406 = vmul.f32 1.0, %v1405
    %v1407 = vrcp.pop %v1404
    %v1408 = vmul.f32 1.0, %v1407
    %v1409 = vmul.f32 %v1392, %v56
    %v1410 = vmul.f32 %v1394, %v57
    %v1411 = vmul.f32 %v1380, %v1395
    %v1412 = vmul.f32 %v1382, %v1396
    %v1413 = vadd.f32 %v1409, %v1411
    %v1414 = vadd.f32 %v1410, %v1412
    %v1415 = vtanh.pop %v1413
    %v1416 = vtanh.pop %v1414
    %v1417 = vmul.f32 %v1406, %v1415
    %v1418 = vmul.f32 %v1408, %v1416
    %v1419 = vpack.c.bf16 %v1417, %v1417
    %v1420 = vpack.c.bf16 %v1418, %v1418
    %v1421 = vld [vmem:[%s5] sm:$0xff]
    %v1422 = vld [vmem:[%s5 + $0x8] sm:$0xff]
    %v1423 = vld [vmem:[%s5 + $0x10] sm:$0xff]
    %v1424 = vld [vmem:[%s5 + $0x18] sm:$0xff]
    %v1425 = vld [vmem:[%s5 + $0x20] sm:$0xff]
    %v1426 = vld [vmem:[%s5 + $0x28] sm:$0xff]
    %v1427 = vld [vmem:[%s5 + $0x30] sm:$0xff]
    %v1428 = vld [vmem:[%s5 + $0x38] sm:$0xff]
    %v1429 = vld [vmem:[%s5 + $0x40] sm:$0xff]
    %v1430 = vld [vmem:[%s5 + $0x48] sm:$0xff]
    %v1431 = vld [vmem:[%s5 + $0x50] sm:$0xff]
    %v1432 = vld [vmem:[%s5 + $0x58] sm:$0xff]
    %v1433 = vld [vmem:[%s5 + $0x60] sm:$0xff]
    %v1434 = vld [vmem:[%s5 + $0x68] sm:$0xff]
    %v1435 = vld [vmem:[%s5 + $0x70] sm:$0xff]
    %v1436 = vld [vmem:[%s5 + $0x78] sm:$0xff]
    %v1437 = vld [vmem:[%s5 + $0x80] sm:$0xff]
    %v1438 = vld [vmem:[%s5 + $0x88] sm:$0xff]
    %v1439 = vld [vmem:[%s5 + $0x90] sm:$0xff]
    %v1440 = vld [vmem:[%s5 + $0x98] sm:$0xff]
    %v1441 = vld [vmem:[%s5 + $0xa0] sm:$0xff]
    %v1442 = vld [vmem:[%s5 + $0xa8] sm:$0xff]
    %v1443 = vld [vmem:[%s5 + $0xb0] sm:$0xff]
    %v1444 = vld [vmem:[%s5 + $0xb8] sm:$0xff]
    %v1445 = vld [vmem:[%s5 + $0xc0] sm:$0xff]
    %v1446 = vld [vmem:[%s5 + $0xc8] sm:$0xff]
    %v1447 = vld [vmem:[%s5 + $0xd0] sm:$0xff]
    %v1448 = vld [vmem:[%s5 + $0xd8] sm:$0xff]
    %v1449 = vld [vmem:[%s5 + $0xe0] sm:$0xff]
    %v1450 = vld [vmem:[%s5 + $0xe8] sm:$0xff]
    %v1451 = vld [vmem:[%s5 + $0xf0] sm:$0xff]
    %v1452 = vld [vmem:[%s5 + $0xf8] sm:$0xff]
    %v1453 = vld [vmem:[%s5 + $0x100] sm:$0xff]
    %v1454 = vld [vmem:[%s5 + $0x108] sm:$0xff]
    %v1455 = vld [vmem:[%s5 + $0x110] sm:$0xff]
    %v1456 = vld [vmem:[%s5 + $0x118] sm:$0xff]
    %v1457 = vld [vmem:[%s5 + $0x120] sm:$0xff]
    %v1458 = vld [vmem:[%s5 + $0x128] sm:$0xff]
    %v1459 = vld [vmem:[%s5 + $0x130] sm:$0xff]
    %v1460 = vld [vmem:[%s5 + $0x138] sm:$0xff]
    %v1461 = vld [vmem:[%s5 + $0x140] sm:$0xff]
    %v1462 = vld [vmem:[%s5 + $0x148] sm:$0xff]
    %v1463 = vld [vmem:[%s5 + $0x150] sm:$0xff]
    %v1464 = vld [vmem:[%s5 + $0x158] sm:$0xff]
    %v1465 = vld [vmem:[%s5 + $0x160] sm:$0xff]
    %v1466 = vld [vmem:[%s5 + $0x168] sm:$0xff]
    %v1467 = vld [vmem:[%s5 + $0x170] sm:$0xff]
    %v1468 = vld [vmem:[%s5 + $0x178] sm:$0xff]
    %v1469 = vld [vmem:[%s5 + $0x180] sm:$0xff]
    %v1470 = vld [vmem:[%s5 + $0x188] sm:$0xff]
    %v1471 = vld [vmem:[%s5 + $0x190] sm:$0xff]
    %v1472 = vld [vmem:[%s5 + $0x198] sm:$0xff]
    %v1473 = vld [vmem:[%s5 + $0x1a0] sm:$0xff]
    %v1474 = vld [vmem:[%s5 + $0x1a8] sm:$0xff]
    %v1475 = vld [vmem:[%s5 + $0x1b0] sm:$0xff]
    %v1476 = vld [vmem:[%s5 + $0x1b8] sm:$0xff]
    %v1477 = vld [vmem:[%s5 + $0x1c0] sm:$0xff]
    %v1478 = vld [vmem:[%s5 + $0x1c8] sm:$0xff]
    %v1479 = vld [vmem:[%s5 + $0x1d0] sm:$0xff]
    %v1480 = vld [vmem:[%s5 + $0x1d8] sm:$0xff]
    %v1481 = vld [vmem:[%s5 + $0x1e0] sm:$0xff]
    %v1482 = vld [vmem:[%s5 + $0x1e8] sm:$0xff]
    %v1483 = vld [vmem:[%s5 + $0x1f0] sm:$0xff]
    %v1484 = vld [vmem:[%s5 + $0x1f8] sm:$0xff]
    %v1485 = vld [vmem:[%s5 + $0x200] sm:$0xff]
    %v1486 = vld [vmem:[%s5 + $0x208] sm:$0xff]
    %v1487 = vld [vmem:[%s5 + $0x210] sm:$0xff]
    %v1488 = vld [vmem:[%s5 + $0x218] sm:$0xff]
    %v1489 = vld [vmem:[%s5 + $0x220] sm:$0xff]
    %v1490 = vld [vmem:[%s5 + $0x228] sm:$0xff]
    %v1491 = vld [vmem:[%s5 + $0x230] sm:$0xff]
    %v1492 = vld [vmem:[%s5 + $0x238] sm:$0xff]
    %v1493 = vld [vmem:[%s5 + $0x240] sm:$0xff]
    %v1494 = vld [vmem:[%s5 + $0x248] sm:$0xff]
    %v1495 = vld [vmem:[%s5 + $0x250] sm:$0xff]
    %v1496 = vld [vmem:[%s5 + $0x258] sm:$0xff]
    %v1497 = vld [vmem:[%s5 + $0x260] sm:$0xff]
    %v1498 = vld [vmem:[%s5 + $0x268] sm:$0xff]
    %v1499 = vld [vmem:[%s5 + $0x270] sm:$0xff]
    %v1500 = vld [vmem:[%s5 + $0x278] sm:$0xff]
    %v1501 = vld [vmem:[%s5 + $0x280] sm:$0xff]
    %v1502 = vld [vmem:[%s5 + $0x288] sm:$0xff]
    %v1503 = vld [vmem:[%s5 + $0x290] sm:$0xff]
    %v1504 = vld [vmem:[%s5 + $0x298] sm:$0xff]
    %v1505 = vld [vmem:[%s5 + $0x2a0] sm:$0xff]
    %v1506 = vld [vmem:[%s5 + $0x2a8] sm:$0xff]
    %v1507 = vld [vmem:[%s5 + $0x2b0] sm:$0xff]
    %v1508 = vld [vmem:[%s5 + $0x2b8] sm:$0xff]
    %v1509 = vld [vmem:[%s5 + $0x2c0] sm:$0xff]
    %v1510 = vld [vmem:[%s5 + $0x2c8] sm:$0xff]
    %v1511 = vld [vmem:[%s5 + $0x2d0] sm:$0xff]
    %v1512 = vld [vmem:[%s5 + $0x2d8] sm:$0xff]
    %v1513 = vld [vmem:[%s5 + $0x2e0] sm:$0xff]
    %v1514 = vld [vmem:[%s5 + $0x2e8] sm:$0xff]
    %v1515 = vld [vmem:[%s5 + $0x2f0] sm:$0xff]
    %v1516 = vld [vmem:[%s5 + $0x2f8] sm:$0xff]
    %v1517 = vld [vmem:[%s5 + $0x300] sm:$0xff]
    %v1518 = vld [vmem:[%s5 + $0x308] sm:$0xff]
    %v1519 = vld [vmem:[%s5 + $0x310] sm:$0xff]
    %v1520 = vld [vmem:[%s5 + $0x318] sm:$0xff]
    %v1521 = vld [vmem:[%s5 + $0x320] sm:$0xff]
    %v1522 = vld [vmem:[%s5 + $0x328] sm:$0xff]
    %v1523 = vld [vmem:[%s5 + $0x330] sm:$0xff]
    %v1524 = vld [vmem:[%s5 + $0x338] sm:$0xff]
    %v1525 = vld [vmem:[%s5 + $0x340] sm:$0xff]
    %v1526 = vld [vmem:[%s5 + $0x348] sm:$0xff]
    %v1527 = vld [vmem:[%s5 + $0x350] sm:$0xff]
    %v1528 = vld [vmem:[%s5 + $0x358] sm:$0xff]
    %v1529 = vld [vmem:[%s5 + $0x360] sm:$0xff]
    %v1530 = vld [vmem:[%s5 + $0x368] sm:$0xff]
    %v1531 = vld [vmem:[%s5 + $0x370] sm:$0xff]
    %v1532 = vld [vmem:[%s5 + $0x378] sm:$0xff]
    %v1533 = vld [vmem:[%s5 + $0x380] sm:$0xff]
    %v1534 = vld [vmem:[%s5 + $0x388] sm:$0xff]
    %v1535 = vld [vmem:[%s5 + $0x390] sm:$0xff]
    %v1536 = vld [vmem:[%s5 + $0x398] sm:$0xff]
    %v1537 = vld [vmem:[%s5 + $0x3a0] sm:$0xff]
    %v1538 = vld [vmem:[%s5 + $0x3a8] sm:$0xff]
    %v1539 = vld [vmem:[%s5 + $0x3b0] sm:$0xff]
    %v1540 = vld [vmem:[%s5 + $0x3b8] sm:$0xff]
    %v1541 = vld [vmem:[%s5 + $0x3c0] sm:$0xff]
    %v1542 = vld [vmem:[%s5 + $0x3c8] sm:$0xff]
    %v1543 = vld [vmem:[%s5 + $0x3d0] sm:$0xff]
    %v1544 = vld [vmem:[%s5 + $0x3d8] sm:$0xff]
    %v1545 = vld [vmem:[%s5 + $0x3e0] sm:$0xff]
    %v1546 = vld [vmem:[%s5 + $0x3e8] sm:$0xff]
    %v1547 = vld [vmem:[%s5 + $0x3f0] sm:$0xff]
    %v1548 = vld [vmem:[%s5 + $0x3f8] sm:$0xff]
    %v1549 = vld [vmem:[%s6] sm:$0xff]
    %v1550 = vld [vmem:[%s6 + $0x8] sm:$0xff]
    %v1551 = vld [vmem:[%s6 + $0x10] sm:$0xff]
    %v1552 = vld [vmem:[%s6 + $0x18] sm:$0xff]
    %v1553 = vld [vmem:[%s6 + $0x20] sm:$0xff]
    %v1554 = vld [vmem:[%s6 + $0x28] sm:$0xff]
    %v1555 = vld [vmem:[%s6 + $0x30] sm:$0xff]
    %v1556 = vld [vmem:[%s6 + $0x38] sm:$0xff]
    %v1557 = vld [vmem:[%s6 + $0x40] sm:$0xff]
    %v1558 = vld [vmem:[%s6 + $0x48] sm:$0xff]
    %v1559 = vld [vmem:[%s6 + $0x50] sm:$0xff]
    %v1560 = vld [vmem:[%s6 + $0x58] sm:$0xff]
    %v1561 = vld [vmem:[%s6 + $0x60] sm:$0xff]
    %v1562 = vld [vmem:[%s6 + $0x68] sm:$0xff]
    %v1563 = vld [vmem:[%s6 + $0x70] sm:$0xff]
    %v1564 = vld [vmem:[%s6 + $0x78] sm:$0xff]
    %v1565 = vld [vmem:[%s6 + $0x80] sm:$0xff]
    %v1566 = vld [vmem:[%s6 + $0x88] sm:$0xff]
    %v1567 = vld [vmem:[%s6 + $0x90] sm:$0xff]
    %v1568 = vld [vmem:[%s6 + $0x98] sm:$0xff]
    %v1569 = vld [vmem:[%s6 + $0xa0] sm:$0xff]
    %v1570 = vld [vmem:[%s6 + $0xa8] sm:$0xff]
    %v1571 = vld [vmem:[%s6 + $0xb0] sm:$0xff]
    %v1572 = vld [vmem:[%s6 + $0xb8] sm:$0xff]
    %v1597 = vunpack.c.l.b16 %v1549
    %v1598 = vunpack.c.h.b16 %v1549
    %v1599 = vunpack.c.l.b16 %v1550
    %v1600 = vunpack.c.h.b16 %v1550
    %v1601 = vunpack.c.l.b16 %v1551
    %v1602 = vunpack.c.h.b16 %v1551
    %v1603 = vunpack.c.l.b16 %v1552
    %v1604 = vunpack.c.h.b16 %v1552
    %v1605 = vunpack.c.l.b16 %v1553
    %v1606 = vunpack.c.h.b16 %v1553
    %v1607 = vunpack.c.l.b16 %v1554
    %v1608 = vunpack.c.h.b16 %v1554
    %v1609 = vunpack.c.l.b16 %v1555
    %v1610 = vunpack.c.h.b16 %v1555
    %v1611 = vunpack.c.l.b16 %v1556
    %v1612 = vunpack.c.h.b16 %v1556
    %v1613 = vunpack.c.l.b16 %v1557
    %v1614 = vunpack.c.h.b16 %v1557
    %v1615 = vunpack.c.l.b16 %v1558
    %v1616 = vunpack.c.h.b16 %v1558
    %v1617 = vunpack.c.l.b16 %v1559
    %v1618 = vunpack.c.h.b16 %v1559
    %v1619 = vunpack.c.l.b16 %v1560
    %v1620 = vunpack.c.h.b16 %v1560
    %v1621 = vunpack.c.l.b16 %v1561
    %v1622 = vunpack.c.h.b16 %v1561
    %v1623 = vunpack.c.l.b16 %v1562
    %v1624 = vunpack.c.h.b16 %v1562
    %v1625 = vunpack.c.l.b16 %v1563
    %v1626 = vunpack.c.h.b16 %v1563
    %v1627 = vunpack.c.l.b16 %v1564
    %v1628 = vunpack.c.h.b16 %v1564
    %v1629 = vunpack.c.l.b16 %v1565
    %v1630 = vunpack.c.h.b16 %v1565
    %v1631 = vunpack.c.l.b16 %v1566
    %v1632 = vunpack.c.h.b16 %v1566
    %v1633 = vunpack.c.l.b16 %v1567
    %v1634 = vunpack.c.h.b16 %v1567
    %v1635 = vunpack.c.l.b16 %v1568
    %v1636 = vunpack.c.h.b16 %v1568
    %v1637 = vunpack.c.l.b16 %v1569
    %v1638 = vunpack.c.h.b16 %v1569
    %v1639 = vunpack.c.l.b16 %v1570
    %v1640 = vunpack.c.h.b16 %v1570
    %v1641 = vunpack.c.l.b16 %v1571
    %v1642 = vunpack.c.h.b16 %v1571
    %v1643 = vunpack.c.l.b16 %v1572
    %v1644 = vunpack.c.h.b16 %v1572
    %v1645 = vpack.c.b16 %v1605, %v1597
    %v1646 = vpack.c.b16 %v1606, %v1598
    %v1647 = vpack.c.b16 %v1607, %v1599
    %v1648 = vpack.c.b16 %v1608, %v1600
    %v1649 = vpack.c.b16 %v1609, %v1601
    %v1650 = vpack.c.b16 %v1610, %v1602
    %v1651 = vpack.c.b16 %v1611, %v1603
    %v1652 = vpack.c.b16 %v1612, %v1604
    %v1653 = vpack.c.b16 %v1621, %v1613
    %v1654 = vpack.c.b16 %v1622, %v1614
    %v1655 = vpack.c.b16 %v1623, %v1615
    %v1656 = vpack.c.b16 %v1624, %v1616
    %v1657 = vpack.c.b16 %v1625, %v1617
    %v1658 = vpack.c.b16 %v1626, %v1618
    %v1659 = vpack.c.b16 %v1627, %v1619
    %v1660 = vpack.c.b16 %v1628, %v1620
    %v1661 = vpack.c.b16 %v1637, %v1629
    %v1662 = vpack.c.b16 %v1638, %v1630
    %v1663 = vpack.c.b16 %v1639, %v1631
    %v1664 = vpack.c.b16 %v1640, %v1632
    %v1665 = vpack.c.b16 %v1641, %v1633
    %v1666 = vpack.c.b16 %v1642, %v1634
    %v1667 = vpack.c.b16 %v1643, %v1635
    %v1668 = vpack.c.b16 %v1644, %v1636
    %v1694 = vsel %vm1153, %v74, 0
    %1696 = vmatprep.subr.bf16.mxu0 %v1646
    %1697 = vmatpush1.bf16.msra.mxu0 %v1645
    %1698 = vmatprep.subr.bf16.mxu0 %v1654
    %1699 = vmatpush1.bf16.msra.mxu0 %v1653
    %1700 = vmatprep.subr.bf16.mxu0 %v1662
    %1701 = vmatpush1.bf16.msra.mxu0 %v1661
    %1702 = vmatprep.subr.bf16.mxu0 0
    %1703 = vmatpush1.bf16.msra.mxu0 0
    %1704 = vmatprep.subr.bf16.mxu0 0
    %1705 = vmatpush1.bf16.msra.mxu0 0
    %1706 = vmatprep.subr.bf16.mxu0 0
    %1707 = vmatpush1.bf16.msra.mxu0 0
    %1708 = vmatprep.subr.bf16.mxu0 0
    %1709 = vmatpush1.bf16.msra.mxu0 0
    %1710 = vmatprep.subr.bf16.mxu0 0
    %1711 = vmatpush1.bf16.msra.mxu0 0
    %1712 = vmatprep.subr.bf16.mxu0 0
    %1713 = vmatpush1.bf16.msra.mxu0 0
    %1714 = vmatprep.subr.bf16.mxu0 0
    %1715 = vmatpush1.bf16.msra.mxu0 0
    %1716 = vmatprep.subr.bf16.mxu0 0
    %1717 = vmatpush1.bf16.msra.mxu0 0
    %1718 = vmatprep.subr.bf16.mxu0 0
    %1719 = vmatpush1.bf16.msra.mxu0 0
    %1720 = vmatprep.subr.bf16.mxu0 0
    %1721 = vmatpush1.bf16.msra.mxu0 0
    %1722 = vmatprep.subr.bf16.mxu0 0
    %1723 = vmatpush1.bf16.msra.mxu0 0
    %1724 = vmatprep.subr.bf16.mxu0 0
    %1725 = vmatpush1.bf16.msra.mxu0 0
    %1726 = vmatprep.subr.bf16.mxu0 0
    %1727 = vmatpush1.bf16.msra.mxu0 0
    %1728 = vmatprep.mubr.bf16.mxu0 0
    %1729 = vmatmul.mubr.bf16.gmra.mrb[0].mxu0 %v1694
    %v1730 = vpop.f32.mrb[0].mxu0
    %v1731 = vadd.f32 0.0, %v1730
    %v1732 = vpop.f32.mrb[0].mxu0
    %v1733 = vadd.f32 0.0, %v1732
    %v1734 = vpop.f32.mrb[0].mxu0
    %v1735 = vpop.f32.mrb[0].mxu0
    %1736 = vdwg.mxu0
    %1737 = vmatprep.subr.bf16.mxu0 %v1648
    %1738 = vmatpush1.bf16.msra.mxu0 %v1647
    %1739 = vmatprep.subr.bf16.mxu0 %v1656
    %1740 = vmatpush1.bf16.msra.mxu0 %v1655
    %1741 = vmatprep.subr.bf16.mxu0 %v1664
    %1742 = vmatpush1.bf16.msra.mxu0 %v1663
    %1743 = vmatprep.subr.bf16.mxu0 0
    %1744 = vmatpush1.bf16.msra.mxu0 0
    %1745 = vmatprep.subr.bf16.mxu0 0
    %1746 = vmatpush1.bf16.msra.mxu0 0
    %1747 = vmatprep.subr.bf16.mxu0 0
    %1748 = vmatpush1.bf16.msra.mxu0 0
    %1749 = vmatprep.subr.bf16.mxu0 0
    %1750 = vmatpush1.bf16.msra.mxu0 0
    %1751 = vmatprep.subr.bf16.mxu0 0
    %1752 = vmatpush1.bf16.msra.mxu0 0
    %1753 = vmatprep.subr.bf16.mxu0 0
    %1754 = vmatpush1.bf16.msra.mxu0 0
    %1755 = vmatprep.subr.bf16.mxu0 0
    %1756 = vmatpush1.bf16.msra.mxu0 0
    %1757 = vmatprep.subr.bf16.mxu0 0
    %1758 = vmatpush1.bf16.msra.mxu0 0
    %1759 = vmatprep.subr.bf16.mxu0 0
    %1760 = vmatpush1.bf16.msra.mxu0 0
    %1761 = vmatprep.subr.bf16.mxu0 0
    %1762 = vmatpush1.bf16.msra.mxu0 0
    %1763 = vmatprep.subr.bf16.mxu0 0
    %1764 = vmatpush1.bf16.msra.mxu0 0
    %1765 = vmatprep.subr.bf16.mxu0 0
    %1766 = vmatpush1.bf16.msra.mxu0 0
    %1767 = vmatprep.subr.bf16.mxu0 0
    %1768 = vmatpush1.bf16.msra.mxu0 0
    %1769 = vmatprep.mubr.bf16.mxu0 0
    %1770 = vmatmul.mubr.bf16.gmra.mrb[0].mxu0 %v1694
    %v1771 = vpop.f32.mrb[0].mxu0
    %v1772 = vadd.f32 0.0, %v1771
    %v1773 = vpop.f32.mrb[0].mxu0
    %v1774 = vadd.f32 0.0, %v1773
    %v1775 = vpop.f32.mrb[0].mxu0
    %v1776 = vpop.f32.mrb[0].mxu0
    %1777 = vdwg.mxu0
    %1778 = vmatprep.subr.bf16.mxu0 %v1650
    %1779 = vmatpush1.bf16.msra.mxu0 %v1649
    %1780 = vmatprep.subr.bf16.mxu0 %v1658
    %1781 = vmatpush1.bf16.msra.mxu0 %v1657
    %1782 = vmatprep.subr.bf16.mxu0 %v1666
    %1783 = vmatpush1.bf16.msra.mxu0 %v1665
    %1784 = vmatprep.subr.bf16.mxu0 0
    %1785 = vmatpush1.bf16.msra.mxu0 0
    %1786 = vmatprep.subr.bf16.mxu0 0
    %1787 = vmatpush1.bf16.msra.mxu0 0
    %1788 = vmatprep.subr.bf16.mxu0 0
    %1789 = vmatpush1.bf16.msra.mxu0 0
    %1790 = vmatprep.subr.bf16.mxu0 0
    %1791 = vmatpush1.bf16.msra.mxu0 0
    %1792 = vmatprep.subr.bf16.mxu0 0
    %1793 = vmatpush1.bf16.msra.mxu0 0
    %1794 = vmatprep.subr.bf16.mxu0 0
    %1795 = vmatpush1.bf16.msra.mxu0 0
    %1796 = vmatprep.subr.bf16.mxu0 0
    %1797 = vmatpush1.bf16.msra.mxu0 0
    %1798 = vmatprep.subr.bf16.mxu0 0
    %1799 = vmatpush1.bf16.msra.mxu0 0
    %1800 = vmatprep.subr.bf16.mxu0 0
    %1801 = vmatpush1.bf16.msra.mxu0 0
    %1802 = vmatprep.subr.bf16.mxu0 0
    %1803 = vmatpush1.bf16.msra.mxu0 0
    %1804 = vmatprep.subr.bf16.mxu0 0
    %1805 = vmatpush1.bf16.msra.mxu0 0
    %1806 = vmatprep.subr.bf16.mxu0 0
    %1807 = vmatpush1.bf16.msra.mxu0 0
    %1808 = vmatprep.subr.bf16.mxu0 0
    %1809 = vmatpush1.bf16.msra.mxu0 0
    %1810 = vmatprep.mubr.bf16.mxu0 0
    %1811 = vmatmul.mubr.bf16.gmra.mrb[0].mxu0 %v1694
    %v1812 = vpop.f32.mrb[0].mxu0
    %v1813 = vadd.f32 0.0, %v1812
    %v1814 = vpop.f32.mrb[0].mxu0
    %v1815 = vadd.f32 0.0, %v1814
    %v1816 = vpop.f32.mrb[0].mxu0
    %v1817 = vpop.f32.mrb[0].mxu0
    %1818 = vdwg.mxu0
    %1819 = vmatprep.subr.bf16.mxu0 %v1652
    %1820 = vmatpush1.bf16.msra.mxu0 %v1651
    %1821 = vmatprep.subr.bf16.mxu0 %v1660
    %1822 = vmatpush1.bf16.msra.mxu0 %v1659
    %1823 = vmatprep.subr.bf16.mxu0 %v1668
    %1824 = vmatpush1.bf16.msra.mxu0 %v1667
    %1825 = vmatprep.subr.bf16.mxu0 0
    %1826 = vmatpush1.bf16.msra.mxu0 0
    %1827 = vmatprep.subr.bf16.mxu0 0
    %1828 = vmatpush1.bf16.msra.mxu0 0
    %1829 = vmatprep.subr.bf16.mxu0 0
    %1830 = vmatpush1.bf16.msra.mxu0 0
    %1831 = vmatprep.subr.bf16.mxu0 0
    %1832 = vmatpush1.bf16.msra.mxu0 0
    %1833 = vmatprep.subr.bf16.mxu0 0
    %1834 = vmatpush1.bf16.msra.mxu0 0
    %1835 = vmatprep.subr.bf16.mxu0 0
    %1836 = vmatpush1.bf16.msra.mxu0 0
    %1837 = vmatprep.subr.bf16.mxu0 0
    %1838 = vmatpush1.bf16.msra.mxu0 0
    %1839 = vmatprep.subr.bf16.mxu0 0
    %1840 = vmatpush1.bf16.msra.mxu0 0
    %1841 = vmatprep.subr.bf16.mxu0 0
    %1842 = vmatpush1.bf16.msra.mxu0 0
    %1843 = vmatprep.subr.bf16.mxu0 0
    %1844 = vmatpush1.bf16.msra.mxu0 0
    %1845 = vmatprep.subr.bf16.mxu0 0
    %1846 = vmatpush1.bf16.msra.mxu0 0
    %1847 = vmatprep.subr.bf16.mxu0 0
    %1848 = vmatpush1.bf16.msra.mxu0 0
    %1849 = vmatprep.subr.bf16.mxu0 0
    %1850 = vmatpush1.bf16.msra.mxu0 0
    %1851 = vmatprep.mubr.bf16.mxu0 0
    %1852 = vmatmul.mubr.bf16.gmra.mrb[0].mxu0 %v1694
    %v1853 = vpop.f32.mrb[0].mxu0
    %v1854 = vadd.f32 0.0, %v1853
    %v1855 = vpop.f32.mrb[0].mxu0
    %v1856 = vadd.f32 0.0, %v1855
    %v1857 = vpop.f32.mrb[0].mxu0
    %v1858 = vpop.f32.mrb[0].mxu0
    %1859 = vdwg.mxu0
    %v1988 = vunpack.c.l.b16 %v1421
    %v1989 = vunpack.c.h.b16 %v1421
    %v1990 = vunpack.c.l.b16 %v1422
    %v1991 = vunpack.c.h.b16 %v1422
    %v1992 = vunpack.c.l.b16 %v1423
    %v1993 = vunpack.c.h.b16 %v1423
    %v1994 = vunpack.c.l.b16 %v1424
    %v1995 = vunpack.c.h.b16 %v1424
    %v1996 = vunpack.c.l.b16 %v1425
    %v1997 = vunpack.c.h.b16 %v1425
    %v1998 = vunpack.c.l.b16 %v1426
    %v1999 = vunpack.c.h.b16 %v1426
    %v2000 = vunpack.c.l.b16 %v1427
    %v2001 = vunpack.c.h.b16 %v1427
    %v2002 = vunpack.c.l.b16 %v1428
    %v2003 = vunpack.c.h.b16 %v1428
    %v2004 = vunpack.c.l.b16 %v1429
    %v2005 = vunpack.c.h.b16 %v1429
    %v2006 = vunpack.c.l.b16 %v1430
    %v2007 = vunpack.c.h.b16 %v1430
    %v2008 = vunpack.c.l.b16 %v1431
    %v2009 = vunpack.c.h.b16 %v1431
    %v2010 = vunpack.c.l.b16 %v1432
    %v2011 = vunpack.c.h.b16 %v1432
    %v2012 = vunpack.c.l.b16 %v1433
    %v2013 = vunpack.c.h.b16 %v1433
    %v2014 = vunpack.c.l.b16 %v1434
    %v2015 = vunpack.c.h.b16 %v1434
    %v2016 = vunpack.c.l.b16 %v1435
    %v2017 = vunpack.c.h.b16 %v1435
    %v2018 = vunpack.c.l.b16 %v1436
    %v2019 = vunpack.c.h.b16 %v1436
    %v2020 = vunpack.c.l.b16 %v1437
    %v2021 = vunpack.c.h.b16 %v1437
    %v2022 = vunpack.c.l.b16 %v1438
    %v2023 = vunpack.c.h.b16 %v1438
    %v2024 = vunpack.c.l.b16 %v1439
    %v2025 = vunpack.c.h.b16 %v1439
    %v2026 = vunpack.c.l.b16 %v1440
    %v2027 = vunpack.c.h.b16 %v1440
    %v2028 = vunpack.c.l.b16 %v1441
    %v2029 = vunpack.c.h.b16 %v1441
    %v2030 = vunpack.c.l.b16 %v1442
    %v2031 = vunpack.c.h.b16 %v1442
    %v2032 = vunpack.c.l.b16 %v1443
    %v2033 = vunpack.c.h.b16 %v1443
    %v2034 = vunpack.c.l.b16 %v1444
    %v2035 = vunpack.c.h.b16 %v1444
    %v2036 = vunpack.c.l.b16 %v1445
    %v2037 = vunpack.c.h.b16 %v1445
    %v2038 = vunpack.c.l.b16 %v1446
    %v2039 = vunpack.c.h.b16 %v1446
    %v2040 = vunpack.c.l.b16 %v1447
    %v2041 = vunpack.c.h.b16 %v1447
    %v2042 = vunpack.c.l.b16 %v1448
    %v2043 = vunpack.c.h.b16 %v1448
    %v2044 = vunpack.c.l.b16 %v1449
    %v2045 = vunpack.c.h.b16 %v1449
    %v2046 = vunpack.c.l.b16 %v1450
    %v2047 = vunpack.c.h.b16 %v1450
    %v2048 = vunpack.c.l.b16 %v1451
    %v2049 = vunpack.c.h.b16 %v1451
    %v2050 = vunpack.c.l.b16 %v1452
    %v2051 = vunpack.c.h.b16 %v1452
    %v2052 = vunpack.c.l.b16 %v1453
    %v2053 = vunpack.c.h.b16 %v1453
    %v2054 = vunpack.c.l.b16 %v1454
    %v2055 = vunpack.c.h.b16 %v1454
    %v2056 = vunpack.c.l.b16 %v1455
    %v2057 = vunpack.c.h.b16 %v1455
    %v2058 = vunpack.c.l.b16 %v1456
    %v2059 = vunpack.c.h.b16 %v1456
    %v2060 = vunpack.c.l.b16 %v1457
    %v2061 = vunpack.c.h.b16 %v1457
    %v2062 = vunpack.c.l.b16 %v1458
    %v2063 = vunpack.c.h.b16 %v1458
    %v2064 = vunpack.c.l.b16 %v1459
    %v2065 = vunpack.c.h.b16 %v1459
    %v2066 = vunpack.c.l.b16 %v1460
    %v2067 = vunpack.c.h.b16 %v1460
    %v2068 = vunpack.c.l.b16 %v1461
    %v2069 = vunpack.c.h.b16 %v1461
    %v2070 = vunpack.c.l.b16 %v1462
    %v2071 = vunpack.c.h.b16 %v1462
    %v2072 = vunpack.c.l.b16 %v1463
    %v2073 = vunpack.c.h.b16 %v1463
    %v2074 = vunpack.c.l.b16 %v1464
    %v2075 = vunpack.c.h.b16 %v1464
    %v2076 = vunpack.c.l.b16 %v1465
    %v2077 = vunpack.c.h.b16 %v1465
    %v2078 = vunpack.c.l.b16 %v1466
    %v2079 = vunpack.c.h.b16 %v1466
    %v2080 = vunpack.c.l.b16 %v1467
    %v2081 = vunpack.c.h.b16 %v1467
    %v2082 = vunpack.c.l.b16 %v1468
    %v2083 = vunpack.c.h.b16 %v1468
    %v2084 = vunpack.c.l.b16 %v1469
    %v2085 = vunpack.c.h.b16 %v1469
    %v2086 = vunpack.c.l.b16 %v1470
    %v2087 = vunpack.c.h.b16 %v1470
    %v2088 = vunpack.c.l.b16 %v1471
    %v2089 = vunpack.c.h.b16 %v1471
    %v2090 = vunpack.c.l.b16 %v1472
    %v2091 = vunpack.c.h.b16 %v1472
    %v2092 = vunpack.c.l.b16 %v1473
    %v2093 = vunpack.c.h.b16 %v1473
    %v2094 = vunpack.c.l.b16 %v1474
    %v2095 = vunpack.c.h.b16 %v1474
    %v2096 = vunpack.c.l.b16 %v1475
    %v2097 = vunpack.c.h.b16 %v1475
    %v2098 = vunpack.c.l.b16 %v1476
    %v2099 = vunpack.c.h.b16 %v1476
    %v2100 = vunpack.c.l.b16 %v1477
    %v2101 = vunpack.c.h.b16 %v1477
    %v2102 = vunpack.c.l.b16 %v1478
    %v2103 = vunpack.c.h.b16 %v1478
    %v2104 = vunpack.c.l.b16 %v1479
    %v2105 = vunpack.c.h.b16 %v1479
    %v2106 = vunpack.c.l.b16 %v1480
    %v2107 = vunpack.c.h.b16 %v1480
    %v2108 = vunpack.c.l.b16 %v1481
    %v2109 = vunpack.c.h.b16 %v1481
    %v2110 = vunpack.c.l.b16 %v1482
    %v2111 = vunpack.c.h.b16 %v1482
    %v2112 = vunpack.c.l.b16 %v1483
    %v2113 = vunpack.c.h.b16 %v1483
    %v2114 = vunpack.c.l.b16 %v1484
    %v2115 = vunpack.c.h.b16 %v1484
    %v2116 = vunpack.c.l.b16 %v1485
    %v2117 = vunpack.c.h.b16 %v1485
    %v2118 = vunpack.c.l.b16 %v1486
    %v2119 = vunpack.c.h.b16 %v1486
    %v2120 = vunpack.c.l.b16 %v1487
    %v2121 = vunpack.c.h.b16 %v1487
    %v2122 = vunpack.c.l.b16 %v1488
    %v2123 = vunpack.c.h.b16 %v1488
    %v2124 = vunpack.c.l.b16 %v1489
    %v2125 = vunpack.c.h.b16 %v1489
    %v2126 = vunpack.c.l.b16 %v1490
    %v2127 = vunpack.c.h.b16 %v1490
    %v2128 = vunpack.c.l.b16 %v1491
    %v2129 = vunpack.c.h.b16 %v1491
    %v2130 = vunpack.c.l.b16 %v1492
    %v2131 = vunpack.c.h.b16 %v1492
    %v2132 = vunpack.c.l.b16 %v1493
    %v2133 = vunpack.c.h.b16 %v1493
    %v2134 = vunpack.c.l.b16 %v1494
    %v2135 = vunpack.c.h.b16 %v1494
    %v2136 = vunpack.c.l.b16 %v1495
    %v2137 = vunpack.c.h.b16 %v1495
    %v2138 = vunpack.c.l.b16 %v1496
    %v2139 = vunpack.c.h.b16 %v1496
    %v2140 = vunpack.c.l.b16 %v1497
    %v2141 = vunpack.c.h.b16 %v1497
    %v2142 = vunpack.c.l.b16 %v1498
    %v2143 = vunpack.c.h.b16 %v1498
    %v2144 = vunpack.c.l.b16 %v1499
    %v2145 = vunpack.c.h.b16 %v1499
    %v2146 = vunpack.c.l.b16 %v1500
    %v2147 = vunpack.c.h.b16 %v1500
    %v2148 = vunpack.c.l.b16 %v1501
    %v2149 = vunpack.c.h.b16 %v1501
    %v2150 = vunpack.c.l.b16 %v1502
    %v2151 = vunpack.c.h.b16 %v1502
    %v2152 = vunpack.c.l.b16 %v1503
    %v2153 = vunpack.c.h.b16 %v1503
    %v2154 = vunpack.c.l.b16 %v1504
    %v2155 = vunpack.c.h.b16 %v1504
    %v2156 = vunpack.c.l.b16 %v1505
    %v2157 = vunpack.c.h.b16 %v1505
    %v2158 = vunpack.c.l.b16 %v1506
    %v2159 = vunpack.c.h.b16 %v1506
    %v2160 = vunpack.c.l.b16 %v1507
    %v2161 = vunpack.c.h.b16 %v1507
    %v2162 = vunpack.c.l.b16 %v1508
    %v2163 = vunpack.c.h.b16 %v1508
    %v2164 = vunpack.c.l.b16 %v1509
    %v2165 = vunpack.c.h.b16 %v1509
    %v2166 = vunpack.c.l.b16 %v1510
    %v2167 = vunpack.c.h.b16 %v1510
    %v2168 = vunpack.c.l.b16 %v1511
    %v2169 = vunpack.c.h.b16 %v1511
    %v2170 = vunpack.c.l.b16 %v1512
    %v2171 = vunpack.c.h.b16 %v1512
    %v2172 = vunpack.c.l.b16 %v1513
    %v2173 = vunpack.c.h.b16 %v1513
    %v2174 = vunpack.c.l.b16 %v1514
    %v2175 = vunpack.c.h.b16 %v1514
    %v2176 = vunpack.c.l.b16 %v1515
    %v2177 = vunpack.c.h.b16 %v1515
    %v2178 = vunpack.c.l.b16 %v1516
    %v2179 = vunpack.c.h.b16 %v1516
    %v2180 = vunpack.c.l.b16 %v1517
    %v2181 = vunpack.c.h.b16 %v1517
    %v2182 = vunpack.c.l.b16 %v1518
    %v2183 = vunpack.c.h.b16 %v1518
    %v2184 = vunpack.c.l.b16 %v1519
    %v2185 = vunpack.c.h.b16 %v1519
    %v2186 = vunpack.c.l.b16 %v1520
    %v2187 = vunpack.c.h.b16 %v1520
    %v2188 = vunpack.c.l.b16 %v1521
    %v2189 = vunpack.c.h.b16 %v1521
    %v2190 = vunpack.c.l.b16 %v1522
    %v2191 = vunpack.c.h.b16 %v1522
    %v2192 = vunpack.c.l.b16 %v1523
    %v2193 = vunpack.c.h.b16 %v1523
    %v2194 = vunpack.c.l.b16 %v1524
    %v2195 = vunpack.c.h.b16 %v1524
    %v2196 = vunpack.c.l.b16 %v1525
    %v2197 = vunpack.c.h.b16 %v1525
    %v2198 = vunpack.c.l.b16 %v1526
    %v2199 = vunpack.c.h.b16 %v1526
    %v2200 = vunpack.c.l.b16 %v1527
    %v2201 = vunpack.c.h.b16 %v1527
    %v2202 = vunpack.c.l.b16 %v1528
    %v2203 = vunpack.c.h.b16 %v1528
    %v2204 = vunpack.c.l.b16 %v1529
    %v2205 = vunpack.c.h.b16 %v1529
    %v2206 = vunpack.c.l.b16 %v1530
    %v2207 = vunpack.c.h.b16 %v1530
    %v2208 = vunpack.c.l.b16 %v1531
    %v2209 = vunpack.c.h.b16 %v1531
    %v2210 = vunpack.c.l.b16 %v1532
    %v2211 = vunpack.c.h.b16 %v1532
    %v2212 = vunpack.c.l.b16 %v1533
    %v2213 = vunpack.c.h.b16 %v1533
    %v2214 = vunpack.c.l.b16 %v1534
    %v2215 = vunpack.c.h.b16 %v1534
    %v2216 = vunpack.c.l.b16 %v1535
    %v2217 = vunpack.c.h.b16 %v1535
    %v2218 = vunpack.c.l.b16 %v1536
    %v2219 = vunpack.c.h.b16 %v1536
    %v2220 = vunpack.c.l.b16 %v1537
    %v2221 = vunpack.c.h.b16 %v1537
    %v2222 = vunpack.c.l.b16 %v1538
    %v2223 = vunpack.c.h.b16 %v1538
    %v2224 = vunpack.c.l.b16 %v1539
    %v2225 = vunpack.c.h.b16 %v1539
    %v2226 = vunpack.c.l.b16 %v1540
    %v2227 = vunpack.c.h.b16 %v1540
    %v2228 = vunpack.c.l.b16 %v1541
    %v2229 = vunpack.c.h.b16 %v1541
    %v2230 = vunpack.c.l.b16 %v1542
    %v2231 = vunpack.c.h.b16 %v1542
    %v2232 = vunpack.c.l.b16 %v1543
    %v2233 = vunpack.c.h.b16 %v1543
    %v2234 = vunpack.c.l.b16 %v1544
    %v2235 = vunpack.c.h.b16 %v1544
    %v2236 = vunpack.c.l.b16 %v1545
    %v2237 = vunpack.c.h.b16 %v1545
    %v2238 = vunpack.c.l.b16 %v1546
    %v2239 = vunpack.c.h.b16 %v1546
    %v2240 = vunpack.c.l.b16 %v1547
    %v2241 = vunpack.c.h.b16 %v1547
    %v2242 = vunpack.c.l.b16 %v1548
    %v2243 = vunpack.c.h.b16 %v1548
    %v2244 = vpack.c.b16 %v1996, %v1988
    %v2245 = vpack.c.b16 %v1997, %v1989
    %v2246 = vpack.c.b16 %v1998, %v1990
    %v2247 = vpack.c.b16 %v1999, %v1991
    %v2248 = vpack.c.b16 %v2000, %v1992
    %v2249 = vpack.c.b16 %v2001, %v1993
    %v2250 = vpack.c.b16 %v2002, %v1994
    %v2251 = vpack.c.b16 %v2003, %v1995
    %v2252 = vpack.c.b16 %v2012, %v2004
    %v2253 = vpack.c.b16 %v2013, %v2005
    %v2254 = vpack.c.b16 %v2014, %v2006
    %v2255 = vpack.c.b16 %v2015, %v2007
    %v2256 = vpack.c.b16 %v2016, %v2008
    %v2257 = vpack.c.b16 %v2017, %v2009
    %v2258 = vpack.c.b16 %v2018, %v2010
    %v2259 = vpack.c.b16 %v2019, %v2011
    %v2260 = vpack.c.b16 %v2028, %v2020
    %v2261 = vpack.c.b16 %v2029, %v2021
    %v2262 = vpack.c.b16 %v2030, %v2022
    %v2263 = vpack.c.b16 %v2031, %v2023
    %v2264 = vpack.c.b16 %v2032, %v2024
    %v2265 = vpack.c.b16 %v2033, %v2025
    %v2266 = vpack.c.b16 %v2034, %v2026
    %v2267 = vpack.c.b16 %v2035, %v2027
    %v2268 = vpack.c.b16 %v2044, %v2036
    %v2269 = vpack.c.b16 %v2045, %v2037
    %v2270 = vpack.c.b16 %v2046, %v2038
    %v2271 = vpack.c.b16 %v2047, %v2039
    %v2272 = vpack.c.b16 %v2048, %v2040
    %v2273 = vpack.c.b16 %v2049, %v2041
    %v2274 = vpack.c.b16 %v2050, %v2042
    %v2275 = vpack.c.b16 %v2051, %v2043
    %v2276 = vpack.c.b16 %v2060, %v2052
    %v2277 = vpack.c.b16 %v2061, %v2053
    %v2278 = vpack.c.b16 %v2062, %v2054
    %v2279 = vpack.c.b16 %v2063, %v2055
    %v2280 = vpack.c.b16 %v2064, %v2056
    %v2281 = vpack.c.b16 %v2065, %v2057
    %v2282 = vpack.c.b16 %v2066, %v2058
    %v2283 = vpack.c.b16 %v2067, %v2059
    %v2284 = vpack.c.b16 %v2076, %v2068
    %v2285 = vpack.c.b16 %v2077, %v2069
    %v2286 = vpack.c.b16 %v2078, %v2070
    %v2287 = vpack.c.b16 %v2079, %v2071
    %v2288 = vpack.c.b16 %v2080, %v2072
    %v2289 = vpack.c.b16 %v2081, %v2073
    %v2290 = vpack.c.b16 %v2082, %v2074
    %v2291 = vpack.c.b16 %v2083, %v2075
    %v2292 = vpack.c.b16 %v2092, %v2084
    %v2293 = vpack.c.b16 %v2093, %v2085
    %v2294 = vpack.c.b16 %v2094, %v2086
    %v2295 = vpack.c.b16 %v2095, %v2087
    %v2296 = vpack.c.b16 %v2096, %v2088
    %v2297 = vpack.c.b16 %v2097, %v2089
    %v2298 = vpack.c.b16 %v2098, %v2090
    %v2299 = vpack.c.b16 %v2099, %v2091
    %v2300 = vpack.c.b16 %v2108, %v2100
    %v2301 = vpack.c.b16 %v2109, %v2101
    %v2302 = vpack.c.b16 %v2110, %v2102
    %v2303 = vpack.c.b16 %v2111, %v2103
    %v2304 = vpack.c.b16 %v2112, %v2104
    %v2305 = vpack.c.b16 %v2113, %v2105
    %v2306 = vpack.c.b16 %v2114, %v2106
    %v2307 = vpack.c.b16 %v2115, %v2107
    %v2308 = vpack.c.b16 %v2124, %v2116
    %v2309 = vpack.c.b16 %v2125, %v2117
    %v2310 = vpack.c.b16 %v2126, %v2118
    %v2311 = vpack.c.b16 %v2127, %v2119
    %v2312 = vpack.c.b16 %v2128, %v2120
    %v2313 = vpack.c.b16 %v2129, %v2121
    %v2314 = vpack.c.b16 %v2130, %v2122
    %v2315 = vpack.c.b16 %v2131, %v2123
    %v2316 = vpack.c.b16 %v2140, %v2132
    %v2317 = vpack.c.b16 %v2141, %v2133
    %v2318 = vpack.c.b16 %v2142, %v2134
    %v2319 = vpack.c.b16 %v2143, %v2135
    %v2320 = vpack.c.b16 %v2144, %v2136
    %v2321 = vpack.c.b16 %v2145, %v2137
    %v2322 = vpack.c.b16 %v2146, %v2138
    %v2323 = vpack.c.b16 %v2147, %v2139
    %v2324 = vpack.c.b16 %v2156, %v2148
    %v2325 = vpack.c.b16 %v2157, %v2149
    %v2326 = vpack.c.b16 %v2158, %v2150
    %v2327 = vpack.c.b16 %v2159, %v2151
    %v2328 = vpack.c.b16 %v2160, %v2152
    %v2329 = vpack.c.b16 %v2161, %v2153
    %v2330 = vpack.c.b16 %v2162, %v2154
    %v2331 = vpack.c.b16 %v2163, %v2155
    %v2332 = vpack.c.b16 %v2172, %v2164
    %v2333 = vpack.c.b16 %v2173, %v2165
    %v2334 = vpack.c.b16 %v2174, %v2166
    %v2335 = vpack.c.b16 %v2175, %v2167
    %v2336 = vpack.c.b16 %v2176, %v2168
    %v2337 = vpack.c.b16 %v2177, %v2169
    %v2338 = vpack.c.b16 %v2178, %v2170
    %v2339 = vpack.c.b16 %v2179, %v2171
    %v2340 = vpack.c.b16 %v2188, %v2180
    %v2341 = vpack.c.b16 %v2189, %v2181
    %v2342 = vpack.c.b16 %v2190, %v2182
    %v2343 = vpack.c.b16 %v2191, %v2183
    %v2344 = vpack.c.b16 %v2192, %v2184
    %v2345 = vpack.c.b16 %v2193, %v2185
    %v2346 = vpack.c.b16 %v2194, %v2186
    %v2347 = vpack.c.b16 %v2195, %v2187
    %v2348 = vpack.c.b16 %v2204, %v2196
    %v2349 = vpack.c.b16 %v2205, %v2197
    %v2350 = vpack.c.b16 %v2206, %v2198
    %v2351 = vpack.c.b16 %v2207, %v2199
    %v2352 = vpack.c.b16 %v2208, %v2200
    %v2353 = vpack.c.b16 %v2209, %v2201
    %v2354 = vpack.c.b16 %v2210, %v2202
    %v2355 = vpack.c.b16 %v2211, %v2203
    %v2356 = vpack.c.b16 %v2220, %v2212
    %v2357 = vpack.c.b16 %v2221, %v2213
    %v2358 = vpack.c.b16 %v2222, %v2214
    %v2359 = vpack.c.b16 %v2223, %v2215
    %v2360 = vpack.c.b16 %v2224, %v2216
    %v2361 = vpack.c.b16 %v2225, %v2217
    %v2362 = vpack.c.b16 %v2226, %v2218
    %v2363 = vpack.c.b16 %v2227, %v2219
    %v2364 = vpack.c.b16 %v2236, %v2228
    %v2365 = vpack.c.b16 %v2237, %v2229
    %v2366 = vpack.c.b16 %v2238, %v2230
    %v2367 = vpack.c.b16 %v2239, %v2231
    %v2368 = vpack.c.b16 %v2240, %v2232
    %v2369 = vpack.c.b16 %v2241, %v2233
    %v2370 = vpack.c.b16 %v2242, %v2234
    %v2371 = vpack.c.b16 %v2243, %v2235
    %2500 = vmatprep.subr.bf16.mxu0 %v2245
    %2501 = vmatpush1.bf16.msra.mxu0 %v2244
    %2502 = vmatprep.subr.bf16.mxu0 %v2253
    %2503 = vmatpush1.bf16.msra.mxu0 %v2252
    %2504 = vmatprep.subr.bf16.mxu0 %v2261
    %2505 = vmatpush1.bf16.msra.mxu0 %v2260
    %2506 = vmatprep.subr.bf16.mxu0 %v2269
    %2507 = vmatpush1.bf16.msra.mxu0 %v2268
    %2508 = vmatprep.subr.bf16.mxu0 %v2277
    %2509 = vmatpush1.bf16.msra.mxu0 %v2276
    %2510 = vmatprep.subr.bf16.mxu0 %v2285
    %2511 = vmatpush1.bf16.msra.mxu0 %v2284
    %2512 = vmatprep.subr.bf16.mxu0 %v2293
    %2513 = vmatpush1.bf16.msra.mxu0 %v2292
    %2514 = vmatprep.subr.bf16.mxu0 %v2301
    %2515 = vmatpush1.bf16.msra.mxu0 %v2300
    %2516 = vmatprep.subr.bf16.mxu0 %v2309
    %2517 = vmatpush1.bf16.msra.mxu0 %v2308
    %2518 = vmatprep.subr.bf16.mxu0 %v2317
    %2519 = vmatpush1.bf16.msra.mxu0 %v2316
    %2520 = vmatprep.subr.bf16.mxu0 %v2325
    %2521 = vmatpush1.bf16.msra.mxu0 %v2324
    %2522 = vmatprep.subr.bf16.mxu0 %v2333
    %2523 = vmatpush1.bf16.msra.mxu0 %v2332
    %2524 = vmatprep.subr.bf16.mxu0 %v2341
    %2525 = vmatpush1.bf16.msra.mxu0 %v2340
    %2526 = vmatprep.subr.bf16.mxu0 %v2349
    %2527 = vmatpush1.bf16.msra.mxu0 %v2348
    %2528 = vmatprep.subr.bf16.mxu0 %v2357
    %2529 = vmatpush1.bf16.msra.mxu0 %v2356
    %2530 = vmatprep.subr.bf16.mxu0 %v2365
    %2531 = vmatpush1.bf16.msra.mxu0 %v2364
    %2532 = vmatprep.mubr.bf16.mxu0 %v1420
    %2533 = vmatmul.mubr.bf16.gmra.mrb[0].mxu0 %v1419
    %v2534 = vpop.f32.mrb[0].mxu0
    %v2535 = vadd.f32 %v1731, %v2534
    %v2536 = vpop.f32.mrb[0].mxu0
    %v2537 = vadd.f32 %v1733, %v2536
    %v2538 = vpop.f32.mrb[0].mxu0
    %v2539 = vpop.f32.mrb[0].mxu0
    %2540 = vdwg.mxu0
    %2541 = vmatprep.subr.bf16.mxu0 %v2247
    %2542 = vmatpush1.bf16.msra.mxu0 %v2246
    %2543 = vmatprep.subr.bf16.mxu0 %v2255
    %2544 = vmatpush1.bf16.msra.mxu0 %v2254
    %2545 = vmatprep.subr.bf16.mxu0 %v2263
    %2546 = vmatpush1.bf16.msra.mxu0 %v2262
    %2547 = vmatprep.subr.bf16.mxu0 %v2271
    %2548 = vmatpush1.bf16.msra.mxu0 %v2270
    %2549 = vmatprep.subr.bf16.mxu0 %v2279
    %2550 = vmatpush1.bf16.msra.mxu0 %v2278
    %2551 = vmatprep.subr.bf16.mxu0 %v2287
    %2552 = vmatpush1.bf16.msra.mxu0 %v2286
    %2553 = vmatprep.subr.bf16.mxu0 %v2295
    %2554 = vmatpush1.bf16.msra.mxu0 %v2294
    %2555 = vmatprep.subr.bf16.mxu0 %v2303
    %2556 = vmatpush1.bf16.msra.mxu0 %v2302
    %2557 = vmatprep.subr.bf16.mxu0 %v2311
    %2558 = vmatpush1.bf16.msra.mxu0 %v2310
    %2559 = vmatprep.subr.bf16.mxu0 %v2319
    %2560 = vmatpush1.bf16.msra.mxu0 %v2318
    %2561 = vmatprep.subr.bf16.mxu0 %v2327
    %2562 = vmatpush1.bf16.msra.mxu0 %v2326
    %2563 = vmatprep.subr.bf16.mxu0 %v2335
    %2564 = vmatpush1.bf16.msra.mxu0 %v2334
    %2565 = vmatprep.subr.bf16.mxu0 %v2343
    %2566 = vmatpush1.bf16.msra.mxu0 %v2342
    %2567 = vmatprep.subr.bf16.mxu0 %v2351
    %2568 = vmatpush1.bf16.msra.mxu0 %v2350
    %2569 = vmatprep.subr.bf16.mxu0 %v2359
    %2570 = vmatpush1.bf16.msra.mxu0 %v2358
    %2571 = vmatprep.subr.bf16.mxu0 %v2367
    %2572 = vmatpush1.bf16.msra.mxu0 %v2366
    %2573 = vmatprep.mubr.bf16.mxu0 %v1420
    %2574 = vmatmul.mubr.bf16.gmra.mrb[0].mxu0 %v1419
    %v2575 = vpop.f32.mrb[0].mxu0
    %v2576 = vadd.f32 %v1772, %v2575
    %v2577 = vpop.f32.mrb[0].mxu0
    %v2578 = vadd.f32 %v1774, %v2577
    %v2579 = vpop.f32.mrb[0].mxu0
    %v2580 = vpop.f32.mrb[0].mxu0
    %2581 = vdwg.mxu0
    %2582 = vmatprep.subr.bf16.mxu0 %v2249
    %2583 = vmatpush1.bf16.msra.mxu0 %v2248
    %2584 = vmatprep.subr.bf16.mxu0 %v2257
    %2585 = vmatpush1.bf16.msra.mxu0 %v2256
    %2586 = vmatprep.subr.bf16.mxu0 %v2265
    %2587 = vmatpush1.bf16.msra.mxu0 %v2264
    %2588 = vmatprep.subr.bf16.mxu0 %v2273
    %2589 = vmatpush1.bf16.msra.mxu0 %v2272
    %2590 = vmatprep.subr.bf16.mxu0 %v2281
    %2591 = vmatpush1.bf16.msra.mxu0 %v2280
    %2592 = vmatprep.subr.bf16.mxu0 %v2289
    %2593 = vmatpush1.bf16.msra.mxu0 %v2288
    %2594 = vmatprep.subr.bf16.mxu0 %v2297
    %2595 = vmatpush1.bf16.msra.mxu0 %v2296
    %2596 = vmatprep.subr.bf16.mxu0 %v2305
    %2597 = vmatpush1.bf16.msra.mxu0 %v2304
    %2598 = vmatprep.subr.bf16.mxu0 %v2313
    %2599 = vmatpush1.bf16.msra.mxu0 %v2312
    %2600 = vmatprep.subr.bf16.mxu0 %v2321
    %2601 = vmatpush1.bf16.msra.mxu0 %v2320
    %2602 = vmatprep.subr.bf16.mxu0 %v2329
    %2603 = vmatpush1.bf16.msra.mxu0 %v2328
    %2604 = vmatprep.subr.bf16.mxu0 %v2337
    %2605 = vmatpush1.bf16.msra.mxu0 %v2336
    %2606 = vmatprep.subr.bf16.mxu0 %v2345
    %2607 = vmatpush1.bf16.msra.mxu0 %v2344
    %2608 = vmatprep.subr.bf16.mxu0 %v2353
    %2609 = vmatpush1.bf16.msra.mxu0 %v2352
    %2610 = vmatprep.subr.bf16.mxu0 %v2361
    %2611 = vmatpush1.bf16.msra.mxu0 %v2360
    %2612 = vmatprep.subr.bf16.mxu0 %v2369
    %2613 = vmatpush1.bf16.msra.mxu0 %v2368
    %2614 = vmatprep.mubr.bf16.mxu0 %v1420
    %2615 = vmatmul.mubr.bf16.gmra.mrb[0].mxu0 %v1419
    %v2616 = vpop.f32.mrb[0].mxu0
    %v2617 = vadd.f32 %v1813, %v2616
    %v2618 = vpop.f32.mrb[0].mxu0
    %v2619 = vadd.f32 %v1815, %v2618
    %v2620 = vpop.f32.mrb[0].mxu0
    %v2621 = vpop.f32.mrb[0].mxu0
    %2622 = vdwg.mxu0
    %2623 = vmatprep.subr.bf16.mxu0 %v2251
    %2624 = vmatpush1.bf16.msra.mxu0 %v2250
    %2625 = vmatprep.subr.bf16.mxu0 %v2259
    %2626 = vmatpush1.bf16.msra.mxu0 %v2258
    %2627 = vmatprep.subr.bf16.mxu0 %v2267
    %2628 = vmatpush1.bf16.msra.mxu0 %v2266
    %2629 = vmatprep.subr.bf16.mxu0 %v2275
    %2630 = vmatpush1.bf16.msra.mxu0 %v2274
    %2631 = vmatprep.subr.bf16.mxu0 %v2283
    %2632 = vmatpush1.bf16.msra.mxu0 %v2282
    %2633 = vmatprep.subr.bf16.mxu0 %v2291
    %2634 = vmatpush1.bf16.msra.mxu0 %v2290
    %2635 = vmatprep.subr.bf16.mxu0 %v2299
    %2636 = vmatpush1.bf16.msra.mxu0 %v2298
    %2637 = vmatprep.subr.bf16.mxu0 %v2307
    %2638 = vmatpush1.bf16.msra.mxu0 %v2306
    %2639 = vmatprep.subr.bf16.mxu0 %v2315
    %2640 = vmatpush1.bf16.msra.mxu0 %v2314
    %2641 = vmatprep.subr.bf16.mxu0 %v2323
    %2642 = vmatpush1.bf16.msra.mxu0 %v2322
    %2643 = vmatprep.subr.bf16.mxu0 %v2331
    %2644 = vmatpush1.bf16.msra.mxu0 %v2330
    %2645 = vmatprep.subr.bf16.mxu0 %v2339
    %2646 = vmatpush1.bf16.msra.mxu0 %v2338
    %2647 = vmatprep.subr.bf16.mxu0 %v2347
    %2648 = vmatpush1.bf16.msra.mxu0 %v2346
    %2649 = vmatprep.subr.bf16.mxu0 %v2355
    %2650 = vmatpush1.bf16.msra.mxu0 %v2354
    %2651 = vmatprep.subr.bf16.mxu0 %v2363
    %2652 = vmatpush1.bf16.msra.mxu0 %v2362
    %2653 = vmatprep.subr.bf16.mxu0 %v2371
    %2654 = vmatpush1.bf16.msra.mxu0 %v2370
    %2655 = vmatprep.mubr.bf16.mxu0 %v1420
    %2656 = vmatmul.mubr.bf16.gmra.mrb[0].mxu0 %v1419
    %v2657 = vpop.f32.mrb[0].mxu0
    %v2658 = vadd.f32 %v1854, %v2657
    %v2659 = vpop.f32.mrb[0].mxu0
    %v2660 = vadd.f32 %v1856, %v2659
    %v2661 = vpop.f32.mrb[0].mxu0
    %v2662 = vpop.f32.mrb[0].mxu0
    %2663 = vdwg.mxu0
    %v2664 = vpack.c.bf16 %v58, %v58
    %v2665 = vpack.c.bf16 %v59, %v59
    %v2666 = vld [vmem:[%s7] sm:$0xff]
    %v2667 = vld [vmem:[%s7 + $0x8] sm:$0xff]
    %v2668 = vld [vmem:[%s7 + $0x10] sm:$0xff]
    %v2669 = vld [vmem:[%s7 + $0x18] sm:$0xff]
    %v2670 = vld [vmem:[%s7 + $0x20] sm:$0xff]
    %v2671 = vld [vmem:[%s7 + $0x28] sm:$0xff]
    %v2672 = vld [vmem:[%s7 + $0x30] sm:$0xff]
    %v2673 = vld [vmem:[%s7 + $0x38] sm:$0xff]
    %v2674 = vld [vmem:[%s7 + $0x40] sm:$0xff]
    %v2675 = vld [vmem:[%s7 + $0x48] sm:$0xff]
    %v2676 = vld [vmem:[%s7 + $0x50] sm:$0xff]
    %v2677 = vld [vmem:[%s7 + $0x58] sm:$0xff]
    %v2678 = vld [vmem:[%s7 + $0x60] sm:$0xff]
    %v2679 = vld [vmem:[%s7 + $0x68] sm:$0xff]
    %v2680 = vld [vmem:[%s7 + $0x70] sm:$0xff]
    %v2681 = vld [vmem:[%s7 + $0x78] sm:$0xff]
    %v2682 = vld [vmem:[%s7 + $0x80] sm:$0xff]
    %v2683 = vld [vmem:[%s7 + $0x88] sm:$0xff]
    %v2684 = vld [vmem:[%s7 + $0x90] sm:$0xff]
    %v2685 = vld [vmem:[%s7 + $0x98] sm:$0xff]
    %v2686 = vld [vmem:[%s7 + $0xa0] sm:$0xff]
    %v2687 = vld [vmem:[%s7 + $0xa8] sm:$0xff]
    %v2688 = vld [vmem:[%s7 + $0xb0] sm:$0xff]
    %v2689 = vld [vmem:[%s7 + $0xb8] sm:$0xff]
    %v2690 = vld [vmem:[%s7 + $0xc0] sm:$0xff]
    %v2691 = vld [vmem:[%s7 + $0xc8] sm:$0xff]
    %v2692 = vld [vmem:[%s7 + $0xd0] sm:$0xff]
    %v2693 = vld [vmem:[%s7 + $0xd8] sm:$0xff]
    %v2694 = vld [vmem:[%s7 + $0xe0] sm:$0xff]
    %v2695 = vld [vmem:[%s7 + $0xe8] sm:$0xff]
    %v2696 = vld [vmem:[%s7 + $0xf0] sm:$0xff]
    %v2697 = vld [vmem:[%s7 + $0xf8] sm:$0xff]
    %v2698 = vld [vmem:[%s7 + $0x100] sm:$0xff]
    %v2699 = vld [vmem:[%s7 + $0x108] sm:$0xff]
    %v2700 = vld [vmem:[%s7 + $0x110] sm:$0xff]
    %v2701 = vld [vmem:[%s7 + $0x118] sm:$0xff]
    %v2702 = vld [vmem:[%s7 + $0x120] sm:$0xff]
    %v2703 = vld [vmem:[%s7 + $0x128] sm:$0xff]
    %v2704 = vld [vmem:[%s7 + $0x130] sm:$0xff]
    %v2705 = vld [vmem:[%s7 + $0x138] sm:$0xff]
    %v2706 = vld [vmem:[%s7 + $0x140] sm:$0xff]
    %v2707 = vld [vmem:[%s7 + $0x148] sm:$0xff]
    %v2708 = vld [vmem:[%s7 + $0x150] sm:$0xff]
    %v2709 = vld [vmem:[%s7 + $0x158] sm:$0xff]
    %v2710 = vld [vmem:[%s7 + $0x160] sm:$0xff]
    %v2711 = vld [vmem:[%s7 + $0x168] sm:$0xff]
    %v2712 = vld [vmem:[%s7 + $0x170] sm:$0xff]
    %v2713 = vld [vmem:[%s7 + $0x178] sm:$0xff]
    %v2714 = vld [vmem:[%s7 + $0x180] sm:$0xff]
    %v2715 = vld [vmem:[%s7 + $0x188] sm:$0xff]
    %v2716 = vld [vmem:[%s7 + $0x190] sm:$0xff]
    %v2717 = vld [vmem:[%s7 + $0x198] sm:$0xff]
    %v2718 = vld [vmem:[%s7 + $0x1a0] sm:$0xff]
    %v2719 = vld [vmem:[%s7 + $0x1a8] sm:$0xff]
    %v2720 = vld [vmem:[%s7 + $0x1b0] sm:$0xff]
    %v2721 = vld [vmem:[%s7 + $0x1b8] sm:$0xff]
    %v2722 = vld [vmem:[%s7 + $0x1c0] sm:$0xff]
    %v2723 = vld [vmem:[%s7 + $0x1c8] sm:$0xff]
    %v2724 = vld [vmem:[%s7 + $0x1d0] sm:$0xff]
    %v2725 = vld [vmem:[%s7 + $0x1d8] sm:$0xff]
    %v2726 = vld [vmem:[%s7 + $0x1e0] sm:$0xff]
    %v2727 = vld [vmem:[%s7 + $0x1e8] sm:$0xff]
    %v2728 = vld [vmem:[%s7 + $0x1f0] sm:$0xff]
    %v2729 = vld [vmem:[%s7 + $0x1f8] sm:$0xff]
    %v2730 = vld [vmem:[%s7 + $0x200] sm:$0xff]
    %v2731 = vld [vmem:[%s7 + $0x208] sm:$0xff]
    %v2732 = vld [vmem:[%s7 + $0x210] sm:$0xff]
    %v2733 = vld [vmem:[%s7 + $0x218] sm:$0xff]
    %v2734 = vld [vmem:[%s7 + $0x220] sm:$0xff]
    %v2735 = vld [vmem:[%s7 + $0x228] sm:$0xff]
    %v2736 = vld [vmem:[%s7 + $0x230] sm:$0xff]
    %v2737 = vld [vmem:[%s7 + $0x238] sm:$0xff]
    %v2738 = vld [vmem:[%s7 + $0x240] sm:$0xff]
    %v2739 = vld [vmem:[%s7 + $0x248] sm:$0xff]
    %v2740 = vld [vmem:[%s7 + $0x250] sm:$0xff]
    %v2741 = vld [vmem:[%s7 + $0x258] sm:$0xff]
    %v2742 = vld [vmem:[%s7 + $0x260] sm:$0xff]
    %v2743 = vld [vmem:[%s7 + $0x268] sm:$0xff]
    %v2744 = vld [vmem:[%s7 + $0x270] sm:$0xff]
    %v2745 = vld [vmem:[%s7 + $0x278] sm:$0xff]
    %v2746 = vld [vmem:[%s7 + $0x280] sm:$0xff]
    %v2747 = vld [vmem:[%s7 + $0x288] sm:$0xff]
    %v2748 = vld [vmem:[%s7 + $0x290] sm:$0xff]
    %v2749 = vld [vmem:[%s7 + $0x298] sm:$0xff]
    %v2750 = vld [vmem:[%s7 + $0x2a0] sm:$0xff]
    %v2751 = vld [vmem:[%s7 + $0x2a8] sm:$0xff]
    %v2752 = vld [vmem:[%s7 + $0x2b0] sm:$0xff]
    %v2753 = vld [vmem:[%s7 + $0x2b8] sm:$0xff]
    %v2754 = vld [vmem:[%s7 + $0x2c0] sm:$0xff]
    %v2755 = vld [vmem:[%s7 + $0x2c8] sm:$0xff]
    %v2756 = vld [vmem:[%s7 + $0x2d0] sm:$0xff]
    %v2757 = vld [vmem:[%s7 + $0x2d8] sm:$0xff]
    %v2758 = vld [vmem:[%s7 + $0x2e0] sm:$0xff]
    %v2759 = vld [vmem:[%s7 + $0x2e8] sm:$0xff]
    %v2760 = vld [vmem:[%s7 + $0x2f0] sm:$0xff]
    %v2761 = vld [vmem:[%s7 + $0x2f8] sm:$0xff]
    %v2762 = vld [vmem:[%s7 + $0x300] sm:$0xff]
    %v2763 = vld [vmem:[%s7 + $0x308] sm:$0xff]
    %v2764 = vld [vmem:[%s7 + $0x310] sm:$0xff]
    %v2765 = vld [vmem:[%s7 + $0x318] sm:$0xff]
    %v2766 = vld [vmem:[%s7 + $0x320] sm:$0xff]
    %v2767 = vld [vmem:[%s7 + $0x328] sm:$0xff]
    %v2768 = vld [vmem:[%s7 + $0x330] sm:$0xff]
    %v2769 = vld [vmem:[%s7 + $0x338] sm:$0xff]
    %v2770 = vld [vmem:[%s7 + $0x340] sm:$0xff]
    %v2771 = vld [vmem:[%s7 + $0x348] sm:$0xff]
    %v2772 = vld [vmem:[%s7 + $0x350] sm:$0xff]
    %v2773 = vld [vmem:[%s7 + $0x358] sm:$0xff]
    %v2774 = vld [vmem:[%s7 + $0x360] sm:$0xff]
    %v2775 = vld [vmem:[%s7 + $0x368] sm:$0xff]
    %v2776 = vld [vmem:[%s7 + $0x370] sm:$0xff]
    %v2777 = vld [vmem:[%s7 + $0x378] sm:$0xff]
    %v2778 = vld [vmem:[%s7 + $0x380] sm:$0xff]
    %v2779 = vld [vmem:[%s7 + $0x388] sm:$0xff]
    %v2780 = vld [vmem:[%s7 + $0x390] sm:$0xff]
    %v2781 = vld [vmem:[%s7 + $0x398] sm:$0xff]
    %v2782 = vld [vmem:[%s7 + $0x3a0] sm:$0xff]
    %v2783 = vld [vmem:[%s7 + $0x3a8] sm:$0xff]
    %v2784 = vld [vmem:[%s7 + $0x3b0] sm:$0xff]
    %v2785 = vld [vmem:[%s7 + $0x3b8] sm:$0xff]
    %v2786 = vld [vmem:[%s7 + $0x3c0] sm:$0xff]
    %v2787 = vld [vmem:[%s7 + $0x3c8] sm:$0xff]
    %v2788 = vld [vmem:[%s7 + $0x3d0] sm:$0xff]
    %v2789 = vld [vmem:[%s7 + $0x3d8] sm:$0xff]
    %v2790 = vld [vmem:[%s7 + $0x3e0] sm:$0xff]
    %v2791 = vld [vmem:[%s7 + $0x3e8] sm:$0xff]
    %v2792 = vld [vmem:[%s7 + $0x3f0] sm:$0xff]
    %v2793 = vld [vmem:[%s7 + $0x3f8] sm:$0xff]
    %v2922 = vunpack.c.l.b16 %v2666
    %v2923 = vunpack.c.h.b16 %v2666
    %v2924 = vunpack.c.l.b16 %v2667
    %v2925 = vunpack.c.h.b16 %v2667
    %v2926 = vunpack.c.l.b16 %v2668
    %v2927 = vunpack.c.h.b16 %v2668
    %v2928 = vunpack.c.l.b16 %v2669
    %v2929 = vunpack.c.h.b16 %v2669
    %v2930 = vunpack.c.l.b16 %v2670
    %v2931 = vunpack.c.h.b16 %v2670
    %v2932 = vunpack.c.l.b16 %v2671
    %v2933 = vunpack.c.h.b16 %v2671
    %v2934 = vunpack.c.l.b16 %v2672
    %v2935 = vunpack.c.h.b16 %v2672
    %v2936 = vunpack.c.l.b16 %v2673
    %v2937 = vunpack.c.h.b16 %v2673
    %v2938 = vunpack.c.l.b16 %v2674
    %v2939 = vunpack.c.h.b16 %v2674
    %v2940 = vunpack.c.l.b16 %v2675
    %v2941 = vunpack.c.h.b16 %v2675
    %v2942 = vunpack.c.l.b16 %v2676
    %v2943 = vunpack.c.h.b16 %v2676
    %v2944 = vunpack.c.l.b16 %v2677
    %v2945 = vunpack.c.h.b16 %v2677
    %v2946 = vunpack.c.l.b16 %v2678
    %v2947 = vunpack.c.h.b16 %v2678
    %v2948 = vunpack.c.l.b16 %v2679
    %v2949 = vunpack.c.h.b16 %v2679
    %v2950 = vunpack.c.l.b16 %v2680
    %v2951 = vunpack.c.h.b16 %v2680
    %v2952 = vunpack.c.l.b16 %v2681
    %v2953 = vunpack.c.h.b16 %v2681
    %v2954 = vunpack.c.l.b16 %v2682
    %v2955 = vunpack.c.h.b16 %v2682
    %v2956 = vunpack.c.l.b16 %v2683
    %v2957 = vunpack.c.h.b16 %v2683
    %v2958 = vunpack.c.l.b16 %v2684
    %v2959 = vunpack.c.h.b16 %v2684
    %v2960 = vunpack.c.l.b16 %v2685
    %v2961 = vunpack.c.h.b16 %v2685
    %v2962 = vunpack.c.l.b16 %v2686
    %v2963 = vunpack.c.h.b16 %v2686
    %v2964 = vunpack.c.l.b16 %v2687
    %v2965 = vunpack.c.h.b16 %v2687
    %v2966 = vunpack.c.l.b16 %v2688
    %v2967 = vunpack.c.h.b16 %v2688
    %v2968 = vunpack.c.l.b16 %v2689
    %v2969 = vunpack.c.h.b16 %v2689
    %v2970 = vunpack.c.l.b16 %v2690
    %v2971 = vunpack.c.h.b16 %v2690
    %v2972 = vunpack.c.l.b16 %v2691
    %v2973 = vunpack.c.h.b16 %v2691
    %v2974 = vunpack.c.l.b16 %v2692
    %v2975 = vunpack.c.h.b16 %v2692
    %v2976 = vunpack.c.l.b16 %v2693
    %v2977 = vunpack.c.h.b16 %v2693
    %v2978 = vunpack.c.l.b16 %v2694
    %v2979 = vunpack.c.h.b16 %v2694
    %v2980 = vunpack.c.l.b16 %v2695
    %v2981 = vunpack.c.h.b16 %v2695
    %v2982 = vunpack.c.l.b16 %v2696
    %v2983 = vunpack.c.h.b16 %v2696
    %v2984 = vunpack.c.l.b16 %v2697
    %v2985 = vunpack.c.h.b16 %v2697
    %v2986 = vunpack.c.l.b16 %v2698
    %v2987 = vunpack.c.h.b16 %v2698
    %v2988 = vunpack.c.l.b16 %v2699
    %v2989 = vunpack.c.h.b16 %v2699
    %v2990 = vunpack.c.l.b16 %v2700
    %v2991 = vunpack.c.h.b16 %v2700
    %v2992 = vunpack.c.l.b16 %v2701
    %v2993 = vunpack.c.h.b16 %v2701
    %v2994 = vunpack.c.l.b16 %v2702
    %v2995 = vunpack.c.h.b16 %v2702
    %v2996 = vunpack.c.l.b16 %v2703
    %v2997 = vunpack.c.h.b16 %v2703
    %v2998 = vunpack.c.l.b16 %v2704
    %v2999 = vunpack.c.h.b16 %v2704
    %v3000 = vunpack.c.l.b16 %v2705
    %v3001 = vunpack.c.h.b16 %v2705
    %v3002 = vunpack.c.l.b16 %v2706
    %v3003 = vunpack.c.h.b16 %v2706
    %v3004 = vunpack.c.l.b16 %v2707
    %v3005 = vunpack.c.h.b16 %v2707
    %v3006 = vunpack.c.l.b16 %v2708
    %v3007 = vunpack.c.h.b16 %v2708
    %v3008 = vunpack.c.l.b16 %v2709
    %v3009 = vunpack.c.h.b16 %v2709
    %v3010 = vunpack.c.l.b16 %v2710
    %v3011 = vunpack.c.h.b16 %v2710
    %v3012 = vunpack.c.l.b16 %v2711
    %v3013 = vunpack.c.h.b16 %v2711
    %v3014 = vunpack.c.l.b16 %v2712
    %v3015 = vunpack.c.h.b16 %v2712
    %v3016 = vunpack.c.l.b16 %v2713
    %v3017 = vunpack.c.h.b16 %v2713
    %v3018 = vunpack.c.l.b16 %v2714
    %v3019 = vunpack.c.h.b16 %v2714
    %v3020 = vunpack.c.l.b16 %v2715
    %v3021 = vunpack.c.h.b16 %v2715
    %v3022 = vunpack.c.l.b16 %v2716
    %v3023 = vunpack.c.h.b16 %v2716
    %v3024 = vunpack.c.l.b16 %v2717
    %v3025 = vunpack.c.h.b16 %v2717
    %v3026 = vunpack.c.l.b16 %v2718
    %v3027 = vunpack.c.h.b16 %v2718
    %v3028 = vunpack.c.l.b16 %v2719
    %v3029 = vunpack.c.h.b16 %v2719
    %v3030 = vunpack.c.l.b16 %v2720
    %v3031 = vunpack.c.h.b16 %v2720
    %v3032 = vunpack.c.l.b16 %v2721
    %v3033 = vunpack.c.h.b16 %v2721
    %v3034 = vunpack.c.l.b16 %v2722
    %v3035 = vunpack.c.h.b16 %v2722
    %v3036 = vunpack.c.l.b16 %v2723
    %v3037 = vunpack.c.h.b16 %v2723
    %v3038 = vunpack.c.l.b16 %v2724
    %v3039 = vunpack.c.h.b16 %v2724
    %v3040 = vunpack.c.l.b16 %v2725
    %v3041 = vunpack.c.h.b16 %v2725
    %v3042 = vunpack.c.l.b16 %v2726
    %v3043 = vunpack.c.h.b16 %v2726
    %v3044 = vunpack.c.l.b16 %v2727
    %v3045 = vunpack.c.h.b16 %v2727
    %v3046 = vunpack.c.l.b16 %v2728
    %v3047 = vunpack.c.h.b16 %v2728
    %v3048 = vunpack.c.l.b16 %v2729
    %v3049 = vunpack.c.h.b16 %v2729
    %v3050 = vunpack.c.l.b16 %v2730
    %v3051 = vunpack.c.h.b16 %v2730
    %v3052 = vunpack.c.l.b16 %v2731
    %v3053 = vunpack.c.h.b16 %v2731
    %v3054 = vunpack.c.l.b16 %v2732
    %v3055 = vunpack.c.h.b16 %v2732
    %v3056 = vunpack.c.l.b16 %v2733
    %v3057 = vunpack.c.h.b16 %v2733
    %v3058 = vunpack.c.l.b16 %v2734
    %v3059 = vunpack.c.h.b16 %v2734
    %v3060 = vunpack.c.l.b16 %v2735
    %v3061 = vunpack.c.h.b16 %v2735
    %v3062 = vunpack.c.l.b16 %v2736
    %v3063 = vunpack.c.h.b16 %v2736
    %v3064 = vunpack.c.l.b16 %v2737
    %v3065 = vunpack.c.h.b16 %v2737
    %v3066 = vunpack.c.l.b16 %v2738
    %v3067 = vunpack.c.h.b16 %v2738
    %v3068 = vunpack.c.l.b16 %v2739
    %v3069 = vunpack.c.h.b16 %v2739
    %v3070 = vunpack.c.l.b16 %v2740
    %v3071 = vunpack.c.h.b16 %v2740
    %v3072 = vunpack.c.l.b16 %v2741
    %v3073 = vunpack.c.h.b16 %v2741
    %v3074 = vunpack.c.l.b16 %v2742
    %v3075 = vunpack.c.h.b16 %v2742
    %v3076 = vunpack.c.l.b16 %v2743
    %v3077 = vunpack.c.h.b16 %v2743
    %v3078 = vunpack.c.l.b16 %v2744
    %v3079 = vunpack.c.h.b16 %v2744
    %v3080 = vunpack.c.l.b16 %v2745
    %v3081 = vunpack.c.h.b16 %v2745
    %v3082 = vunpack.c.l.b16 %v2746
    %v3083 = vunpack.c.h.b16 %v2746
    %v3084 = vunpack.c.l.b16 %v2747
    %v3085 = vunpack.c.h.b16 %v2747
    %v3086 = vunpack.c.l.b16 %v2748
    %v3087 = vunpack.c.h.b16 %v2748
    %v3088 = vunpack.c.l.b16 %v2749
    %v3089 = vunpack.c.h.b16 %v2749
    %v3090 = vunpack.c.l.b16 %v2750
    %v3091 = vunpack.c.h.b16 %v2750
    %v3092 = vunpack.c.l.b16 %v2751
    %v3093 = vunpack.c.h.b16 %v2751
    %v3094 = vunpack.c.l.b16 %v2752
    %v3095 = vunpack.c.h.b16 %v2752
    %v3096 = vunpack.c.l.b16 %v2753
    %v3097 = vunpack.c.h.b16 %v2753
    %v3098 = vunpack.c.l.b16 %v2754
    %v3099 = vunpack.c.h.b16 %v2754
    %v3100 = vunpack.c.l.b16 %v2755
    %v3101 = vunpack.c.h.b16 %v2755
    %v3102 = vunpack.c.l.b16 %v2756
    %v3103 = vunpack.c.h.b16 %v2756
    %v3104 = vunpack.c.l.b16 %v2757
    %v3105 = vunpack.c.h.b16 %v2757
    %v3106 = vunpack.c.l.b16 %v2758
    %v3107 = vunpack.c.h.b16 %v2758
    %v3108 = vunpack.c.l.b16 %v2759
    %v3109 = vunpack.c.h.b16 %v2759
    %v3110 = vunpack.c.l.b16 %v2760
    %v3111 = vunpack.c.h.b16 %v2760
    %v3112 = vunpack.c.l.b16 %v2761
    %v3113 = vunpack.c.h.b16 %v2761
    %v3114 = vunpack.c.l.b16 %v2762
    %v3115 = vunpack.c.h.b16 %v2762
    %v3116 = vunpack.c.l.b16 %v2763
    %v3117 = vunpack.c.h.b16 %v2763
    %v3118 = vunpack.c.l.b16 %v2764
    %v3119 = vunpack.c.h.b16 %v2764
    %v3120 = vunpack.c.l.b16 %v2765
    %v3121 = vunpack.c.h.b16 %v2765
    %v3122 = vunpack.c.l.b16 %v2766
    %v3123 = vunpack.c.h.b16 %v2766
    %v3124 = vunpack.c.l.b16 %v2767
    %v3125 = vunpack.c.h.b16 %v2767
    %v3126 = vunpack.c.l.b16 %v2768
    %v3127 = vunpack.c.h.b16 %v2768
    %v3128 = vunpack.c.l.b16 %v2769
    %v3129 = vunpack.c.h.b16 %v2769
    %v3130 = vunpack.c.l.b16 %v2770
    %v3131 = vunpack.c.h.b16 %v2770
    %v3132 = vunpack.c.l.b16 %v2771
    %v3133 = vunpack.c.h.b16 %v2771
    %v3134 = vunpack.c.l.b16 %v2772
    %v3135 = vunpack.c.h.b16 %v2772
    %v3136 = vunpack.c.l.b16 %v2773
    %v3137 = vunpack.c.h.b16 %v2773
    %v3138 = vunpack.c.l.b16 %v2774
    %v3139 = vunpack.c.h.b16 %v2774
    %v3140 = vunpack.c.l.b16 %v2775
    %v3141 = vunpack.c.h.b16 %v2775
    %v3142 = vunpack.c.l.b16 %v2776
    %v3143 = vunpack.c.h.b16 %v2776
    %v3144 = vunpack.c.l.b16 %v2777
    %v3145 = vunpack.c.h.b16 %v2777
    %v3146 = vunpack.c.l.b16 %v2778
    %v3147 = vunpack.c.h.b16 %v2778
    %v3148 = vunpack.c.l.b16 %v2779
    %v3149 = vunpack.c.h.b16 %v2779
    %v3150 = vunpack.c.l.b16 %v2780
    %v3151 = vunpack.c.h.b16 %v2780
    %v3152 = vunpack.c.l.b16 %v2781
    %v3153 = vunpack.c.h.b16 %v2781
    %v3154 = vunpack.c.l.b16 %v2782
    %v3155 = vunpack.c.h.b16 %v2782
    %v3156 = vunpack.c.l.b16 %v2783
    %v3157 = vunpack.c.h.b16 %v2783
    %v3158 = vunpack.c.l.b16 %v2784
    %v3159 = vunpack.c.h.b16 %v2784
    %v3160 = vunpack.c.l.b16 %v2785
    %v3161 = vunpack.c.h.b16 %v2785
    %v3162 = vunpack.c.l.b16 %v2786
    %v3163 = vunpack.c.h.b16 %v2786
    %v3164 = vunpack.c.l.b16 %v2787
    %v3165 = vunpack.c.h.b16 %v2787
    %v3166 = vunpack.c.l.b16 %v2788
    %v3167 = vunpack.c.h.b16 %v2788
    %v3168 = vunpack.c.l.b16 %v2789
    %v3169 = vunpack.c.h.b16 %v2789
    %v3170 = vunpack.c.l.b16 %v2790
    %v3171 = vunpack.c.h.b16 %v2790
    %v3172 = vunpack.c.l.b16 %v2791
    %v3173 = vunpack.c.h.b16 %v2791
    %v3174 = vunpack.c.l.b16 %v2792
    %v3175 = vunpack.c.h.b16 %v2792
    %v3176 = vunpack.c.l.b16 %v2793
    %v3177 = vunpack.c.h.b16 %v2793
    %v3178 = vpack.c.b16 %v2930, %v2922
    %v3179 = vpack.c.b16 %v2931, %v2923
    %v3180 = vpack.c.b16 %v2932, %v2924
    %v3181 = vpack.c.b16 %v2933, %v2925
    %v3182 = vpack.c.b16 %v2934, %v2926
    %v3183 = vpack.c.b16 %v2935, %v2927
    %v3184 = vpack.c.b16 %v2936, %v2928
    %v3185 = vpack.c.b16 %v2937, %v2929
    %v3186 = vpack.c.b16 %v2946, %v2938
    %v3187 = vpack.c.b16 %v2947, %v2939
    %v3188 = vpack.c.b16 %v2948, %v2940
    %v3189 = vpack.c.b16 %v2949, %v2941
    %v3190 = vpack.c.b16 %v2950, %v2942
    %v3191 = vpack.c.b16 %v2951, %v2943
    %v3192 = vpack.c.b16 %v2952, %v2944
    %v3193 = vpack.c.b16 %v2953, %v2945
    %v3194 = vpack.c.b16 %v2962, %v2954
    %v3195 = vpack.c.b16 %v2963, %v2955
    %v3196 = vpack.c.b16 %v2964, %v2956
    %v3197 = vpack.c.b16 %v2965, %v2957
    %v3198 = vpack.c.b16 %v2966, %v2958
    %v3199 = vpack.c.b16 %v2967, %v2959
    %v3200 = vpack.c.b16 %v2968, %v2960
    %v3201 = vpack.c.b16 %v2969, %v2961
    %v3202 = vpack.c.b16 %v2978, %v2970
    %v3203 = vpack.c.b16 %v2979, %v2971
    %v3204 = vpack.c.b16 %v2980, %v2972
    %v3205 = vpack.c.b16 %v2981, %v2973
    %v3206 = vpack.c.b16 %v2982, %v2974
    %v3207 = vpack.c.b16 %v2983, %v2975
    %v3208 = vpack.c.b16 %v2984, %v2976
    %v3209 = vpack.c.b16 %v2985, %v2977
    %v3210 = vpack.c.b16 %v2994, %v2986
    %v3211 = vpack.c.b16 %v2995, %v2987
    %v3212 = vpack.c.b16 %v2996, %v2988
    %v3213 = vpack.c.b16 %v2997, %v2989
    %v3214 = vpack.c.b16 %v2998, %v2990
    %v3215 = vpack.c.b16 %v2999, %v2991
    %v3216 = vpack.c.b16 %v3000, %v2992
    %v3217 = vpack.c.b16 %v3001, %v2993
    %v3218 = vpack.c.b16 %v3010, %v3002
    %v3219 = vpack.c.b16 %v3011, %v3003
    %v3220 = vpack.c.b16 %v3012, %v3004
    %v3221 = vpack.c.b16 %v3013, %v3005
    %v3222 = vpack.c.b16 %v3014, %v3006
    %v3223 = vpack.c.b16 %v3015, %v3007
    %v3224 = vpack.c.b16 %v3016, %v3008
    %v3225 = vpack.c.b16 %v3017, %v3009
    %v3226 = vpack.c.b16 %v3026, %v3018
    %v3227 = vpack.c.b16 %v3027, %v3019
    %v3228 = vpack.c.b16 %v3028, %v3020
    %v3229 = vpack.c.b16 %v3029, %v3021
    %v3230 = vpack.c.b16 %v3030, %v3022
    %v3231 = vpack.c.b16 %v3031, %v3023
    %v3232 = vpack.c.b16 %v3032, %v3024
    %v3233 = vpack.c.b16 %v3033, %v3025
    %v3234 = vpack.c.b16 %v3042, %v3034
    %v3235 = vpack.c.b16 %v3043, %v3035
    %v3236 = vpack.c.b16 %v3044, %v3036
    %v3237 = vpack.c.b16 %v3045, %v3037
    %v3238 = vpack.c.b16 %v3046, %v3038
    %v3239 = vpack.c.b16 %v3047, %v3039
    %v3240 = vpack.c.b16 %v3048, %v3040
    %v3241 = vpack.c.b16 %v3049, %v3041
    %v3242 = vpack.c.b16 %v3058, %v3050
    %v3243 = vpack.c.b16 %v3059, %v3051
    %v3244 = vpack.c.b16 %v3060, %v3052
    %v3245 = vpack.c.b16 %v3061, %v3053
    %v3246 = vpack.c.b16 %v3062, %v3054
    %v3247 = vpack.c.b16 %v3063, %v3055
    %v3248 = vpack.c.b16 %v3064, %v3056
    %v3249 = vpack.c.b16 %v3065, %v3057
    %v3250 = vpack.c.b16 %v3074, %v3066
    %v3251 = vpack.c.b16 %v3075, %v3067
    %v3252 = vpack.c.b16 %v3076, %v3068
    %v3253 = vpack.c.b16 %v3077, %v3069
    %v3254 = vpack.c.b16 %v3078, %v3070
    %v3255 = vpack.c.b16 %v3079, %v3071
    %v3256 = vpack.c.b16 %v3080, %v3072
    %v3257 = vpack.c.b16 %v3081, %v3073
    %v3258 = vpack.c.b16 %v3090, %v3082
    %v3259 = vpack.c.b16 %v3091, %v3083
    %v3260 = vpack.c.b16 %v3092, %v3084
    %v3261 = vpack.c.b16 %v3093, %v3085
    %v3262 = vpack.c.b16 %v3094, %v3086
    %v3263 = vpack.c.b16 %v3095, %v3087
    %v3264 = vpack.c.b16 %v3096, %v3088
    %v3265 = vpack.c.b16 %v3097, %v3089
    %v3266 = vpack.c.b16 %v3106, %v3098
    %v3267 = vpack.c.b16 %v3107, %v3099
    %v3268 = vpack.c.b16 %v3108, %v3100
    %v3269 = vpack.c.b16 %v3109, %v3101
    %v3270 = vpack.c.b16 %v3110, %v3102
    %v3271 = vpack.c.b16 %v3111, %v3103
    %v3272 = vpack.c.b16 %v3112, %v3104
    %v3273 = vpack.c.b16 %v3113, %v3105
    %v3274 = vpack.c.b16 %v3122, %v3114
    %v3275 = vpack.c.b16 %v3123, %v3115
    %v3276 = vpack.c.b16 %v3124, %v3116
    %v3277 = vpack.c.b16 %v3125, %v3117
    %v3278 = vpack.c.b16 %v3126, %v3118
    %v3279 = vpack.c.b16 %v3127, %v3119
    %v3280 = vpack.c.b16 %v3128, %v3120
    %v3281 = vpack.c.b16 %v3129, %v3121
    %v3282 = vpack.c.b16 %v3138, %v3130
    %v3283 = vpack.c.b16 %v3139, %v3131
    %v3284 = vpack.c.b16 %v3140, %v3132
    %v3285 = vpack.c.b16 %v3141, %v3133
    %v3286 = vpack.c.b16 %v3142, %v3134
    %v3287 = vpack.c.b16 %v3143, %v3135
    %v3288 = vpack.c.b16 %v3144, %v3136
    %v3289 = vpack.c.b16 %v3145, %v3137
    %v3290 = vpack.c.b16 %v3154, %v3146
    %v3291 = vpack.c.b16 %v3155, %v3147
    %v3292 = vpack.c.b16 %v3156, %v3148
    %v3293 = vpack.c.b16 %v3157, %v3149
    %v3294 = vpack.c.b16 %v3158, %v3150
    %v3295 = vpack.c.b16 %v3159, %v3151
    %v3296 = vpack.c.b16 %v3160, %v3152
    %v3297 = vpack.c.b16 %v3161, %v3153
    %v3298 = vpack.c.b16 %v3170, %v3162
    %v3299 = vpack.c.b16 %v3171, %v3163
    %v3300 = vpack.c.b16 %v3172, %v3164
    %v3301 = vpack.c.b16 %v3173, %v3165
    %v3302 = vpack.c.b16 %v3174, %v3166
    %v3303 = vpack.c.b16 %v3175, %v3167
    %v3304 = vpack.c.b16 %v3176, %v3168
    %v3305 = vpack.c.b16 %v3177, %v3169
    %3434 = vmatprep.subr.bf16.mxu0 %v3179
    %3435 = vmatpush1.bf16.msra.mxu0 %v3178
    %3436 = vmatprep.subr.bf16.mxu0 %v3187
    %3437 = vmatpush1.bf16.msra.mxu0 %v3186
    %3438 = vmatprep.subr.bf16.mxu0 %v3195
    %3439 = vmatpush1.bf16.msra.mxu0 %v3194
    %3440 = vmatprep.subr.bf16.mxu0 %v3203
    %3441 = vmatpush1.bf16.msra.mxu0 %v3202
    %3442 = vmatprep.subr.bf16.mxu0 %v3211
    %3443 = vmatpush1.bf16.msra.mxu0 %v3210
    %3444 = vmatprep.subr.bf16.mxu0 %v3219
    %3445 = vmatpush1.bf16.msra.mxu0 %v3218
    %3446 = vmatprep.subr.bf16.mxu0 %v3227
    %3447 = vmatpush1.bf16.msra.mxu0 %v3226
    %3448 = vmatprep.subr.bf16.mxu0 %v3235
    %3449 = vmatpush1.bf16.msra.mxu0 %v3234
    %3450 = vmatprep.subr.bf16.mxu0 %v3243
    %3451 = vmatpush1.bf16.msra.mxu0 %v3242
    %3452 = vmatprep.subr.bf16.mxu0 %v3251
    %3453 = vmatpush1.bf16.msra.mxu0 %v3250
    %3454 = vmatprep.subr.bf16.mxu0 %v3259
    %3455 = vmatpush1.bf16.msra.mxu0 %v3258
    %3456 = vmatprep.subr.bf16.mxu0 %v3267
    %3457 = vmatpush1.bf16.msra.mxu0 %v3266
    %3458 = vmatprep.subr.bf16.mxu0 %v3275
    %3459 = vmatpush1.bf16.msra.mxu0 %v3274
    %3460 = vmatprep.subr.bf16.mxu0 %v3283
    %3461 = vmatpush1.bf16.msra.mxu0 %v3282
    %3462 = vmatprep.subr.bf16.mxu0 %v3291
    %3463 = vmatpush1.bf16.msra.mxu0 %v3290
    %3464 = vmatprep.subr.bf16.mxu0 %v3299
    %3465 = vmatpush1.bf16.msra.mxu0 %v3298
    %3466 = vmatprep.mubr.bf16.mxu0 %v2665
    %3467 = vmatmul.mubr.bf16.gmra.mrb[0].mxu0 %v2664
    %v3468 = vpop.f32.mrb[0].mxu0
    %v3469 = vadd.f32 0.0, %v3468
    %v3470 = vpop.f32.mrb[0].mxu0
    %v3471 = vadd.f32 0.0, %v3470
    %v3472 = vpop.f32.mrb[0].mxu0
    %v3473 = vpop.f32.mrb[0].mxu0
    %3474 = vdwg.mxu0
    %3475 = vmatprep.subr.bf16.mxu0 %v3181
    %3476 = vmatpush1.bf16.msra.mxu0 %v3180
    %3477 = vmatprep.subr.bf16.mxu0 %v3189
    %3478 = vmatpush1.bf16.msra.mxu0 %v3188
    %3479 = vmatprep.subr.bf16.mxu0 %v3197
    %3480 = vmatpush1.bf16.msra.mxu0 %v3196
    %3481 = vmatprep.subr.bf16.mxu0 %v3205
    %3482 = vmatpush1.bf16.msra.mxu0 %v3204
    %3483 = vmatprep.subr.bf16.mxu0 %v3213
    %3484 = vmatpush1.bf16.msra.mxu0 %v3212
    %3485 = vmatprep.subr.bf16.mxu0 %v3221
    %3486 = vmatpush1.bf16.msra.mxu0 %v3220
    %3487 = vmatprep.subr.bf16.mxu0 %v3229
    %3488 = vmatpush1.bf16.msra.mxu0 %v3228
    %3489 = vmatprep.subr.bf16.mxu0 %v3237
    %3490 = vmatpush1.bf16.msra.mxu0 %v3236
    %3491 = vmatprep.subr.bf16.mxu0 %v3245
    %3492 = vmatpush1.bf16.msra.mxu0 %v3244
    %3493 = vmatprep.subr.bf16.mxu0 %v3253
    %3494 = vmatpush1.bf16.msra.mxu0 %v3252
    %3495 = vmatprep.subr.bf16.mxu0 %v3261
    %3496 = vmatpush1.bf16.msra.mxu0 %v3260
    %3497 = vmatprep.subr.bf16.mxu0 %v3269
    %3498 = vmatpush1.bf16.msra.mxu0 %v3268
    %3499 = vmatprep.subr.bf16.mxu0 %v3277
    %3500 = vmatpush1.bf16.msra.mxu0 %v3276
    %3501 = vmatprep.subr.bf16.mxu0 %v3285
    %3502 = vmatpush1.bf16.msra.mxu0 %v3284
    %3503 = vmatprep.subr.bf16.mxu0 %v3293
    %3504 = vmatpush1.bf16.msra.mxu0 %v3292
    %3505 = vmatprep.subr.bf16.mxu0 %v3301
    %3506 = vmatpush1.bf16.msra.mxu0 %v3300
    %3507 = vmatprep.mubr.bf16.mxu0 %v2665
    %3508 = vmatmul.mubr.bf16.gmra.mrb[0].mxu0 %v2664
    %v3509 = vpop.f32.mrb[0].mxu0
    %v3510 = vadd.f32 0.0, %v3509
    %v3511 = vpop.f32.mrb[0].mxu0
    %v3512 = vadd.f32 0.0, %v3511
    %v3513 = vpop.f32.mrb[0].mxu0
    %v3514 = vpop.f32.mrb[0].mxu0
    %3515 = vdwg.mxu0
    %3516 = vmatprep.subr.bf16.mxu0 %v3183
    %3517 = vmatpush1.bf16.msra.mxu0 %v3182
    %3518 = vmatprep.subr.bf16.mxu0 %v3191
    %3519 = vmatpush1.bf16.msra.mxu0 %v3190
    %3520 = vmatprep.subr.bf16.mxu0 %v3199
    %3521 = vmatpush1.bf16.msra.mxu0 %v3198
    %3522 = vmatprep.subr.bf16.mxu0 %v3207
    %3523 = vmatpush1.bf16.msra.mxu0 %v3206
    %3524 = vmatprep.subr.bf16.mxu0 %v3215
    %3525 = vmatpush1.bf16.msra.mxu0 %v3214
    %3526 = vmatprep.subr.bf16.mxu0 %v3223
    %3527 = vmatpush1.bf16.msra.mxu0 %v3222
    %3528 = vmatprep.subr.bf16.mxu0 %v3231
    %3529 = vmatpush1.bf16.msra.mxu0 %v3230
    %3530 = vmatprep.subr.bf16.mxu0 %v3239
    %3531 = vmatpush1.bf16.msra.mxu0 %v3238
    %3532 = vmatprep.subr.bf16.mxu0 %v3247
    %3533 = vmatpush1.bf16.msra.mxu0 %v3246
    %3534 = vmatprep.subr.bf16.mxu0 %v3255
    %3535 = vmatpush1.bf16.msra.mxu0 %v3254
    %3536 = vmatprep.subr.bf16.mxu0 %v3263
    %3537 = vmatpush1.bf16.msra.mxu0 %v3262
    %3538 = vmatprep.subr.bf16.mxu0 %v3271
    %3539 = vmatpush1.bf16.msra.mxu0 %v3270
    %3540 = vmatprep.subr.bf16.mxu0 %v3279
    %3541 = vmatpush1.bf16.msra.mxu0 %v3278
    %3542 = vmatprep.subr.bf16.mxu0 %v3287
    %3543 = vmatpush1.bf16.msra.mxu0 %v3286
    %3544 = vmatprep.subr.bf16.mxu0 %v3295
    %3545 = vmatpush1.bf16.msra.mxu0 %v3294
    %3546 = vmatprep.subr.bf16.mxu0 %v3303
    %3547 = vmatpush1.bf16.msra.mxu0 %v3302
    %3548 = vmatprep.mubr.bf16.mxu0 %v2665
    %3549 = vmatmul.mubr.bf16.gmra.mrb[0].mxu0 %v2664
    %v3550 = vpop.f32.mrb[0].mxu0
    %v3551 = vadd.f32 0.0, %v3550
    %v3552 = vpop.f32.mrb[0].mxu0
    %v3553 = vadd.f32 0.0, %v3552
    %v3554 = vpop.f32.mrb[0].mxu0
    %v3555 = vpop.f32.mrb[0].mxu0
    %3556 = vdwg.mxu0
    %3557 = vmatprep.subr.bf16.mxu0 %v3185
    %3558 = vmatpush1.bf16.msra.mxu0 %v3184
    %3559 = vmatprep.subr.bf16.mxu0 %v3193
    %3560 = vmatpush1.bf16.msra.mxu0 %v3192
    %3561 = vmatprep.subr.bf16.mxu0 %v3201
    %3562 = vmatpush1.bf16.msra.mxu0 %v3200
    %3563 = vmatprep.subr.bf16.mxu0 %v3209
    %3564 = vmatpush1.bf16.msra.mxu0 %v3208
    %3565 = vmatprep.subr.bf16.mxu0 %v3217
    %3566 = vmatpush1.bf16.msra.mxu0 %v3216
    %3567 = vmatprep.subr.bf16.mxu0 %v3225
    %3568 = vmatpush1.bf16.msra.mxu0 %v3224
    %3569 = vmatprep.subr.bf16.mxu0 %v3233
    %3570 = vmatpush1.bf16.msra.mxu0 %v3232
    %3571 = vmatprep.subr.bf16.mxu0 %v3241
    %3572 = vmatpush1.bf16.msra.mxu0 %v3240
    %3573 = vmatprep.subr.bf16.mxu0 %v3249
    %3574 = vmatpush1.bf16.msra.mxu0 %v3248
    %3575 = vmatprep.subr.bf16.mxu0 %v3257
    %3576 = vmatpush1.bf16.msra.mxu0 %v3256
    %3577 = vmatprep.subr.bf16.mxu0 %v3265
    %3578 = vmatpush1.bf16.msra.mxu0 %v3264
    %3579 = vmatprep.subr.bf16.mxu0 %v3273
    %3580 = vmatpush1.bf16.msra.mxu0 %v3272
    %3581 = vmatprep.subr.bf16.mxu0 %v3281
    %3582 = vmatpush1.bf16.msra.mxu0 %v3280
    %3583 = vmatprep.subr.bf16.mxu0 %v3289
    %3584 = vmatpush1.bf16.msra.mxu0 %v3288
    %3585 = vmatprep.subr.bf16.mxu0 %v3297
    %3586 = vmatpush1.bf16.msra.mxu0 %v3296
    %3587 = vmatprep.subr.bf16.mxu0 %v3305
    %3588 = vmatpush1.bf16.msra.mxu0 %v3304
    %3589 = vmatprep.mubr.bf16.mxu0 %v2665
    %3590 = vmatmul.mubr.bf16.gmra.mrb[0].mxu0 %v2664
    %v3591 = vpop.f32.mrb[0].mxu0
    %v3592 = vadd.f32 0.0, %v3591
    %v3593 = vpop.f32.mrb[0].mxu0
    %v3594 = vadd.f32 0.0, %v3593
    %v3595 = vpop.f32.mrb[0].mxu0
    %v3596 = vpop.f32.mrb[0].mxu0
    %3597 = vdwg.mxu0
    %v3598 = vadd.f32 %v2535, %v3469
    %v3599 = vadd.f32 %v2537, %v3471
    %v3600 = vadd.f32 %v2576, %v3510
    %v3601 = vadd.f32 %v2578, %v3512
    %v3602 = vadd.f32 %v2617, %v3551
    %v3603 = vadd.f32 %v2619, %v3553
    %v3604 = vadd.f32 %v2658, %v3592
    %v3605 = vadd.f32 %v2660, %v3594
    %v3606 = vld [vmem:[%s8] sm:$0xff]
    %v3608 = vlaneseq
    %v3609 = vshrl.u32 %v3608, 7
    %v3610 = vsub.s32 0, %v3609
    %v3611 = vrot.slane %v3606, %v3610
    %v3612 = vlaneseq
    %v3613 = vshrl.u32 %v3612, 7
    %v3614 = vsub.s32 1, %v3613
    %v3615 = vrot.slane %v3606, %v3614
    %v3616 = vlaneseq
    %v3617 = vshrl.u32 %v3616, 7
    %v3618 = vsub.s32 2, %v3617
    %v3619 = vrot.slane %v3606, %v3618
    %v3620 = vlaneseq
    %v3621 = vshrl.u32 %v3620, 7
    %v3622 = vsub.s32 3, %v3621
    %v3623 = vrot.slane %v3606, %v3622
    %v3624 = vlaneseq
    %v3625 = vshrl.u32 %v3624, 7
    %v3626 = vsub.s32 4, %v3625
    %v3627 = vrot.slane %v3606, %v3626
    %v3628 = vlaneseq
    %v3629 = vshrl.u32 %v3628, 7
    %v3630 = vsub.s32 5, %v3629
    %v3631 = vrot.slane %v3606, %v3630
    %v3632 = vlaneseq
    %v3633 = vshrl.u32 %v3632, 7
    %v3634 = vsub.s32 6, %v3633
    %v3635 = vrot.slane %v3606, %v3634
    %v3636 = vlaneseq
    %v3637 = vshrl.u32 %v3636, 7
    %v3638 = vsub.s32 7, %v3637
    %v3639 = vrot.slane %v3606, %v3638
    %v3648 = vadd.f32 %v3598, %v3611
    %v3649 = vadd.f32 %v3599, %v3615
    %v3650 = vadd.f32 %v3600, %v3619
    %v3651 = vadd.f32 %v3601, %v3623
    %v3652 = vadd.f32 %v3602, %v3627
    %v3653 = vadd.f32 %v3603, %v3631
    %v3654 = vadd.f32 %v3604, %v3635
    %v3655 = vadd.f32 %v3605, %v3639
    %v3656 = vxor.u32 %v3648, 2147483648
    %v3657 = vxor.u32 %v3649, 2147483648
    %v3658 = vmul.f32 %v3656, 1.442695
    %v3659 = vpow.pop %v3658
    %v3660 = vmul.f32 %v3657, 1.442695
    %v3661 = vpow.pop %v3660
    %v3662 = vadd.f32 %v3659, 1.0
    %v3663 = vadd.f32 %v3661, 1.0
    %v3664 = vrcp.pop %v3662
    %v3665 = vmul.f32 1.0, %v3664
    %v3666 = vrcp.pop %v3663
    %v3667 = vmul.f32 1.0, %v3666
    %v3668 = vxor.u32 %v3650, 2147483648
    %v3669 = vxor.u32 %v3651, 2147483648
    %v3670 = vmul.f32 %v3668, 1.442695
    %v3671 = vpow.pop %v3670
    %v3672 = vmul.f32 %v3669, 1.442695
    %v3673 = vpow.pop %v3672
    %v3674 = vadd.f32 %v3671, 1.0
    %v3675 = vadd.f32 %v3673, 1.0
    %v3676 = vrcp.pop %v3674
    %v3677 = vmul.f32 1.0, %v3676
    %v3678 = vrcp.pop %v3675
    %v3679 = vmul.f32 1.0, %v3678
    %v3680 = vtanh.pop %v3652
    %v3681 = vtanh.pop %v3653
    %v3682 = vxor.u32 %v3654, 2147483648
    %v3683 = vxor.u32 %v3655, 2147483648
    %v3684 = vmul.f32 %v3682, 1.442695
    %v3685 = vpow.pop %v3684
    %v3686 = vmul.f32 %v3683, 1.442695
    %v3687 = vpow.pop %v3686
    %v3688 = vadd.f32 %v3685, 1.0
    %v3689 = vadd.f32 %v3687, 1.0
    %v3690 = vrcp.pop %v3688
    %v3691 = vmul.f32 1.0, %v3690
    %v3692 = vrcp.pop %v3689
    %v3693 = vmul.f32 1.0, %v3692
    %v3694 = vmul.f32 %v3677, %v60
    %v3695 = vmul.f32 %v3679, %v61
    %v3696 = vmul.f32 %v3665, %v3680
    %v3697 = vmul.f32 %v3667, %v3681
    %v3698 = vadd.f32 %v3694, %v3696
    %v3699 = vadd.f32 %v3695, %v3697
    %v3700 = vtanh.pop %v3698
    %v3701 = vtanh.pop %v3699
    %v3702 = vmul.f32 %v3691, %v3700
    %v3703 = vmul.f32 %v3693, %v3701
    %v3704 = vpack.c.bf16 %v3702, %v3702
    %v3705 = vpack.c.bf16 %v3703, %v3703
    %v3706 = vld [vmem:[%s9] sm:$0xff]
    %v3707 = vld [vmem:[%s9 + $0x8] sm:$0xff]
    %v3708 = vld [vmem:[%s9 + $0x10] sm:$0xff]
    %v3709 = vld [vmem:[%s9 + $0x18] sm:$0xff]
    %v3710 = vld [vmem:[%s9 + $0x20] sm:$0xff]
    %v3711 = vld [vmem:[%s9 + $0x28] sm:$0xff]
    %v3712 = vld [vmem:[%s9 + $0x30] sm:$0xff]
    %v3713 = vld [vmem:[%s9 + $0x38] sm:$0xff]
    %v3714 = vld [vmem:[%s9 + $0x40] sm:$0xff]
    %v3715 = vld [vmem:[%s9 + $0x48] sm:$0xff]
    %v3716 = vld [vmem:[%s9 + $0x50] sm:$0xff]
    %v3717 = vld [vmem:[%s9 + $0x58] sm:$0xff]
    %v3718 = vld [vmem:[%s9 + $0x60] sm:$0xff]
    %v3719 = vld [vmem:[%s9 + $0x68] sm:$0xff]
    %v3720 = vld [vmem:[%s9 + $0x70] sm:$0xff]
    %v3721 = vld [vmem:[%s9 + $0x78] sm:$0xff]
    %v3722 = vld [vmem:[%s9 + $0x80] sm:$0xff]
    %v3723 = vld [vmem:[%s9 + $0x88] sm:$0xff]
    %v3724 = vld [vmem:[%s9 + $0x90] sm:$0xff]
    %v3725 = vld [vmem:[%s9 + $0x98] sm:$0xff]
    %v3726 = vld [vmem:[%s9 + $0xa0] sm:$0xff]
    %v3727 = vld [vmem:[%s9 + $0xa8] sm:$0xff]
    %v3728 = vld [vmem:[%s9 + $0xb0] sm:$0xff]
    %v3729 = vld [vmem:[%s9 + $0xb8] sm:$0xff]
    %v3730 = vld [vmem:[%s9 + $0xc0] sm:$0xff]
    %v3731 = vld [vmem:[%s9 + $0xc8] sm:$0xff]
    %v3732 = vld [vmem:[%s9 + $0xd0] sm:$0xff]
    %v3733 = vld [vmem:[%s9 + $0xd8] sm:$0xff]
    %v3734 = vld [vmem:[%s9 + $0xe0] sm:$0xff]
    %v3735 = vld [vmem:[%s9 + $0xe8] sm:$0xff]
    %v3736 = vld [vmem:[%s9 + $0xf0] sm:$0xff]
    %v3737 = vld [vmem:[%s9 + $0xf8] sm:$0xff]
    %v3738 = vld [vmem:[%s10] sm:$0xff]
    %v3739 = vld [vmem:[%s10 + $0x8] sm:$0xff]
    %v3740 = vld [vmem:[%s10 + $0x10] sm:$0xff]
    %v3741 = vld [vmem:[%s10 + $0x18] sm:$0xff]
    %v3742 = vld [vmem:[%s10 + $0x20] sm:$0xff]
    %v3743 = vld [vmem:[%s10 + $0x28] sm:$0xff]
    %v3750 = vunpack.c.l.b16 %v3738
    %v3751 = vunpack.c.h.b16 %v3738
    %v3752 = vunpack.c.l.b16 %v3739
    %v3753 = vunpack.c.h.b16 %v3739
    %v3754 = vunpack.c.l.b16 %v3740
    %v3755 = vunpack.c.h.b16 %v3740
    %v3756 = vunpack.c.l.b16 %v3741
    %v3757 = vunpack.c.h.b16 %v3741
    %v3758 = vunpack.c.l.b16 %v3742
    %v3759 = vunpack.c.h.b16 %v3742
    %v3760 = vunpack.c.l.b16 %v3743
    %v3761 = vunpack.c.h.b16 %v3743
    %v3762 = vpack.c.b16 %v3752, %v3750
    %v3763 = vpack.c.b16 %v3753, %v3751
    %v3764 = vpack.c.b16 %v3756, %v3754
    %v3765 = vpack.c.b16 %v3757, %v3755
    %v3766 = vpack.c.b16 %v3760, %v3758
    %v3767 = vpack.c.b16 %v3761, %v3759
    %3774 = vmatprep.subr.bf16.mxu0 %v3763
    %3775 = vmatpush1.bf16.msra.mxu0 %v3762
    %3776 = vmatprep.subr.bf16.mxu0 %v3765
    %3777 = vmatpush1.bf16.msra.mxu0 %v3764
    %3778 = vmatprep.subr.bf16.mxu0 %v3767
    %3779 = vmatpush1.bf16.msra.mxu0 %v3766
    %3780 = vmatprep.subr.bf16.mxu0 0
    %3781 = vmatpush1.bf16.msra.mxu0 0
    %3782 = vmatprep.subr.bf16.mxu0 0
    %3783 = vmatpush1.bf16.msra.mxu0 0
    %3784 = vmatprep.subr.bf16.mxu0 0
    %3785 = vmatpush1.bf16.msra.mxu0 0
    %3786 = vmatprep.subr.bf16.mxu0 0
    %3787 = vmatpush1.bf16.msra.mxu0 0
    %3788 = vmatprep.subr.bf16.mxu0 0
    %3789 = vmatpush1.bf16.msra.mxu0 0
    %3790 = vmatprep.subr.bf16.mxu0 0
    %3791 = vmatpush1.bf16.msra.mxu0 0
    %3792 = vmatprep.subr.bf16.mxu0 0
    %3793 = vmatpush1.bf16.msra.mxu0 0
    %3794 = vmatprep.subr.bf16.mxu0 0
    %3795 = vmatpush1.bf16.msra.mxu0 0
    %3796 = vmatprep.subr.bf16.mxu0 0
    %3797 = vmatpush1.bf16.msra.mxu0 0
    %3798 = vmatprep.subr.bf16.mxu0 0
    %3799 = vmatpush1.bf16.msra.mxu0 0
    %3800 = vmatprep.subr.bf16.mxu0 0
    %3801 = vmatpush1.bf16.msra.mxu0 0
    %3802 = vmatprep.subr.bf16.mxu0 0
    %3803 = vmatpush1.bf16.msra.mxu0 0
    %3804 = vmatprep.subr.bf16.mxu0 0
    %3805 = vmatpush1.bf16.msra.mxu0 0
    %3806 = vmatprep.mubr.bf16.mxu0 0
    %3807 = vmatmul.mubr.bf16.gmra.mrb[0].mxu0 %v1155
    %v3808 = vpop.f32.mrb[0].mxu0
    %v3809 = vadd.f32 0.0, %v3808
    %v3810 = vpop.f32.mrb[0].mxu0
    %v3811 = vadd.f32 0.0, %v3810
    %v3812 = vpop.f32.mrb[0].mxu0
    %v3813 = vpop.f32.mrb[0].mxu0
    %3814 = vdwg.mxu0
    %v3847 = vunpack.c.l.b16 %v3706
    %v3848 = vunpack.c.h.b16 %v3706
    %v3849 = vunpack.c.l.b16 %v3707
    %v3850 = vunpack.c.h.b16 %v3707
    %v3851 = vunpack.c.l.b16 %v3708
    %v3852 = vunpack.c.h.b16 %v3708
    %v3853 = vunpack.c.l.b16 %v3709
    %v3854 = vunpack.c.h.b16 %v3709
    %v3855 = vunpack.c.l.b16 %v3710
    %v3856 = vunpack.c.h.b16 %v3710
    %v3857 = vunpack.c.l.b16 %v3711
    %v3858 = vunpack.c.h.b16 %v3711
    %v3859 = vunpack.c.l.b16 %v3712
    %v3860 = vunpack.c.h.b16 %v3712
    %v3861 = vunpack.c.l.b16 %v3713
    %v3862 = vunpack.c.h.b16 %v3713
    %v3863 = vunpack.c.l.b16 %v3714
    %v3864 = vunpack.c.h.b16 %v3714
    %v3865 = vunpack.c.l.b16 %v3715
    %v3866 = vunpack.c.h.b16 %v3715
    %v3867 = vunpack.c.l.b16 %v3716
    %v3868 = vunpack.c.h.b16 %v3716
    %v3869 = vunpack.c.l.b16 %v3717
    %v3870 = vunpack.c.h.b16 %v3717
    %v3871 = vunpack.c.l.b16 %v3718
    %v3872 = vunpack.c.h.b16 %v3718
    %v3873 = vunpack.c.l.b16 %v3719
    %v3874 = vunpack.c.h.b16 %v3719
    %v3875 = vunpack.c.l.b16 %v3720
    %v3876 = vunpack.c.h.b16 %v3720
    %v3877 = vunpack.c.l.b16 %v3721
    %v3878 = vunpack.c.h.b16 %v3721
    %v3879 = vunpack.c.l.b16 %v3722
    %v3880 = vunpack.c.h.b16 %v3722
    %v3881 = vunpack.c.l.b16 %v3723
    %v3882 = vunpack.c.h.b16 %v3723
    %v3883 = vunpack.c.l.b16 %v3724
    %v3884 = vunpack.c.h.b16 %v3724
    %v3885 = vunpack.c.l.b16 %v3725
    %v3886 = vunpack.c.h.b16 %v3725
    %v3887 = vunpack.c.l.b16 %v3726
    %v3888 = vunpack.c.h.b16 %v3726
    %v3889 = vunpack.c.l.b16 %v3727
    %v3890 = vunpack.c.h.b16 %v3727
    %v3891 = vunpack.c.l.b16 %v3728
    %v3892 = vunpack.c.h.b16 %v3728
    %v3893 = vunpack.c.l.b16 %v3729
    %v3894 = vunpack.c.h.b16 %v3729
    %v3895 = vunpack.c.l.b16 %v3730
    %v3896 = vunpack.c.h.b16 %v3730
    %v3897 = vunpack.c.l.b16 %v3731
    %v3898 = vunpack.c.h.b16 %v3731
    %v3899 = vunpack.c.l.b16 %v3732
    %v3900 = vunpack.c.h.b16 %v3732
    %v3901 = vunpack.c.l.b16 %v3733
    %v3902 = vunpack.c.h.b16 %v3733
    %v3903 = vunpack.c.l.b16 %v3734
    %v3904 = vunpack.c.h.b16 %v3734
    %v3905 = vunpack.c.l.b16 %v3735
    %v3906 = vunpack.c.h.b16 %v3735
    %v3907 = vunpack.c.l.b16 %v3736
    %v3908 = vunpack.c.h.b16 %v3736
    %v3909 = vunpack.c.l.b16 %v3737
    %v3910 = vunpack.c.h.b16 %v3737
    %v3911 = vpack.c.b16 %v3849, %v3847
    %v3912 = vpack.c.b16 %v3850, %v3848
    %v3913 = vpack.c.b16 %v3853, %v3851
    %v3914 = vpack.c.b16 %v3854, %v3852
    %v3915 = vpack.c.b16 %v3857, %v3855
    %v3916 = vpack.c.b16 %v3858, %v3856
    %v3917 = vpack.c.b16 %v3861, %v3859
    %v3918 = vpack.c.b16 %v3862, %v3860
    %v3919 = vpack.c.b16 %v3865, %v3863
    %v3920 = vpack.c.b16 %v3866, %v3864
    %v3921 = vpack.c.b16 %v3869, %v3867
    %v3922 = vpack.c.b16 %v3870, %v3868
    %v3923 = vpack.c.b16 %v3873, %v3871
    %v3924 = vpack.c.b16 %v3874, %v3872
    %v3925 = vpack.c.b16 %v3877, %v3875
    %v3926 = vpack.c.b16 %v3878, %v3876
    %v3927 = vpack.c.b16 %v3881, %v3879
    %v3928 = vpack.c.b16 %v3882, %v3880
    %v3929 = vpack.c.b16 %v3885, %v3883
    %v3930 = vpack.c.b16 %v3886, %v3884
    %v3931 = vpack.c.b16 %v3889, %v3887
    %v3932 = vpack.c.b16 %v3890, %v3888
    %v3933 = vpack.c.b16 %v3893, %v3891
    %v3934 = vpack.c.b16 %v3894, %v3892
    %v3935 = vpack.c.b16 %v3897, %v3895
    %v3936 = vpack.c.b16 %v3898, %v3896
    %v3937 = vpack.c.b16 %v3901, %v3899
    %v3938 = vpack.c.b16 %v3902, %v3900
    %v3939 = vpack.c.b16 %v3905, %v3903
    %v3940 = vpack.c.b16 %v3906, %v3904
    %v3941 = vpack.c.b16 %v3909, %v3907
    %v3942 = vpack.c.b16 %v3910, %v3908
    %3975 = vmatprep.subr.bf16.mxu0 %v3912
    %3976 = vmatpush1.bf16.msra.mxu0 %v3911
    %3977 = vmatprep.subr.bf16.mxu0 %v3914
    %3978 = vmatpush1.bf16.msra.mxu0 %v3913
    %3979 = vmatprep.subr.bf16.mxu0 %v3916
    %3980 = vmatpush1.bf16.msra.mxu0 %v3915
    %3981 = vmatprep.subr.bf16.mxu0 %v3918
    %3982 = vmatpush1.bf16.msra.mxu0 %v3917
    %3983 = vmatprep.subr.bf16.mxu0 %v3920
    %3984 = vmatpush1.bf16.msra.mxu0 %v3919
    %3985 = vmatprep.subr.bf16.mxu0 %v3922
    %3986 = vmatpush1.bf16.msra.mxu0 %v3921
    %3987 = vmatprep.subr.bf16.mxu0 %v3924
    %3988 = vmatpush1.bf16.msra.mxu0 %v3923
    %3989 = vmatprep.subr.bf16.mxu0 %v3926
    %3990 = vmatpush1.bf16.msra.mxu0 %v3925
    %3991 = vmatprep.subr.bf16.mxu0 %v3928
    %3992 = vmatpush1.bf16.msra.mxu0 %v3927
    %3993 = vmatprep.subr.bf16.mxu0 %v3930
    %3994 = vmatpush1.bf16.msra.mxu0 %v3929
    %3995 = vmatprep.subr.bf16.mxu0 %v3932
    %3996 = vmatpush1.bf16.msra.mxu0 %v3931
    %3997 = vmatprep.subr.bf16.mxu0 %v3934
    %3998 = vmatpush1.bf16.msra.mxu0 %v3933
    %3999 = vmatprep.subr.bf16.mxu0 %v3936
    %4000 = vmatpush1.bf16.msra.mxu0 %v3935
    %4001 = vmatprep.subr.bf16.mxu0 %v3938
    %4002 = vmatpush1.bf16.msra.mxu0 %v3937
    %4003 = vmatprep.subr.bf16.mxu0 %v3940
    %4004 = vmatpush1.bf16.msra.mxu0 %v3939
    %4005 = vmatprep.subr.bf16.mxu0 %v3942
    %4006 = vmatpush1.bf16.msra.mxu0 %v3941
    %4007 = vmatprep.mubr.bf16.mxu0 %v3705
    %4008 = vmatmul.mubr.bf16.gmra.mrb[0].mxu0 %v3704
    %v4009 = vpop.f32.mrb[0].mxu0
    %v4010 = vadd.f32 %v3809, %v4009
    %v4011 = vpop.f32.mrb[0].mxu0
    %v4012 = vadd.f32 %v3811, %v4011
    %v4013 = vpop.f32.mrb[0].mxu0
    %v4014 = vpop.f32.mrb[0].mxu0
    %4015 = vdwg.mxu0
    %v4016 = vld [vmem:[%s11] sm:$0x3]
    %v4018 = vlaneseq
    %v4019 = vshrl.u32 %v4018, 7
    %v4020 = vsub.s32 0, %v4019
    %v4021 = vrot.slane %v4016, %v4020
    %v4022 = vlaneseq
    %v4023 = vshrl.u32 %v4022, 7
    %v4024 = vsub.s32 1, %v4023
    %v4025 = vrot.slane %v4016, %v4024
    %v4028 = vadd.f32 %v4010, %v4021
    %v4029 = vadd.f32 %v4012, %v4025
    %v4030 = vtanh.pop %v4028
    %v4031 = vtanh.pop %v4029
    %v4032 = vpack.c.bf16 %v4030, %v4030
    %v4033 = vpack.c.bf16 %v4031, %v4031
    %v4034 = vld [vmem:[%s12] sm:$0xf]
    %v4035 = vld [vmem:[%s12 + $0x4] sm:$0xf]
    %v4036 = vld [vmem:[%s12 + $0x8] sm:$0xf]
    %v4037 = vld [vmem:[%s12 + $0xc] sm:$0xf]
    %v4038 = vld [vmem:[%s12 + $0x10] sm:$0xf]
    %v4039 = vld [vmem:[%s12 + $0x14] sm:$0xf]
    %v4040 = vld [vmem:[%s12 + $0x18] sm:$0xf]
    %v4041 = vld [vmem:[%s12 + $0x1c] sm:$0xf]
    %v4042 = vld [vmem:[%s12 + $0x20] sm:$0xf]
    %v4043 = vld [vmem:[%s12 + $0x24] sm:$0xf]
    %v4044 = vld [vmem:[%s12 + $0x28] sm:$0xf]
    %v4045 = vld [vmem:[%s12 + $0x2c] sm:$0xf]
    %v4046 = vld [vmem:[%s12 + $0x30] sm:$0xf]
    %v4047 = vld [vmem:[%s12 + $0x34] sm:$0xf]
    %v4048 = vld [vmem:[%s12 + $0x38] sm:$0xf]
    %v4049 = vld [vmem:[%s12 + $0x3c] sm:$0xf]
    %v4050 = vld [vmem:[%s12 + $0x40] sm:$0xf]
    %v4051 = vld [vmem:[%s12 + $0x44] sm:$0xf]
    %v4052 = vld [vmem:[%s12 + $0x48] sm:$0xf]
    %v4053 = vld [vmem:[%s12 + $0x4c] sm:$0xf]
    %v4054 = vld [vmem:[%s12 + $0x50] sm:$0xf]
    %v4055 = vld [vmem:[%s12 + $0x54] sm:$0xf]
    %v4056 = vld [vmem:[%s12 + $0x58] sm:$0xf]
    %v4057 = vld [vmem:[%s12 + $0x5c] sm:$0xf]
    %v4058 = vld [vmem:[%s12 + $0x60] sm:$0xf]
    %v4059 = vld [vmem:[%s12 + $0x64] sm:$0xf]
    %v4060 = vld [vmem:[%s12 + $0x68] sm:$0xf]
    %v4061 = vld [vmem:[%s12 + $0x6c] sm:$0xf]
    %v4062 = vld [vmem:[%s12 + $0x70] sm:$0xf]
    %v4063 = vld [vmem:[%s12 + $0x74] sm:$0xf]
    %v4064 = vld [vmem:[%s12 + $0x78] sm:$0xf]
    %v4065 = vld [vmem:[%s12 + $0x7c] sm:$0xf]
    %v4066 = vld [vmem:[%s13] sm:$0x1]
    %v4068 = vlaneseq
    %v4069 = vshrl.u32 %v4068, 7
    %v4070 = vsub.s32 0, %v4069
    %v4071 = vrot.slane %v4066, %v4070
    %v4105 = vunpack.c.l.b16 %v4034
    %v4106 = vunpack.c.l.b16 %v4035
    %v4107 = vunpack.c.l.b16 %v4036
    %v4108 = vunpack.c.l.b16 %v4037
    %v4109 = vunpack.c.l.b16 %v4038
    %v4110 = vunpack.c.l.b16 %v4039
    %v4111 = vunpack.c.l.b16 %v4040
    %v4112 = vunpack.c.l.b16 %v4041
    %v4113 = vunpack.c.l.b16 %v4042
    %v4114 = vunpack.c.l.b16 %v4043
    %v4115 = vunpack.c.l.b16 %v4044
    %v4116 = vunpack.c.l.b16 %v4045
    %v4117 = vunpack.c.l.b16 %v4046
    %v4118 = vunpack.c.l.b16 %v4047
    %v4119 = vunpack.c.l.b16 %v4048
    %v4120 = vunpack.c.l.b16 %v4049
    %v4121 = vunpack.c.l.b16 %v4050
    %v4122 = vunpack.c.l.b16 %v4051
    %v4123 = vunpack.c.l.b16 %v4052
    %v4124 = vunpack.c.l.b16 %v4053
    %v4125 = vunpack.c.l.b16 %v4054
    %v4126 = vunpack.c.l.b16 %v4055
    %v4127 = vunpack.c.l.b16 %v4056
    %v4128 = vunpack.c.l.b16 %v4057
    %v4129 = vunpack.c.l.b16 %v4058
    %v4130 = vunpack.c.l.b16 %v4059
    %v4131 = vunpack.c.l.b16 %v4060
    %v4132 = vunpack.c.l.b16 %v4061
    %v4133 = vunpack.c.l.b16 %v4062
    %v4134 = vunpack.c.l.b16 %v4063
    %v4135 = vunpack.c.l.b16 %v4064
    %v4136 = vunpack.c.l.b16 %v4065
    %v4137 = vpack.c.b16 %v4106, %v4105
    %v4138 = vpack.c.b16 %v4108, %v4107
    %v4139 = vpack.c.b16 %v4110, %v4109
    %v4140 = vpack.c.b16 %v4112, %v4111
    %v4141 = vpack.c.b16 %v4114, %v4113
    %v4142 = vpack.c.b16 %v4116, %v4115
    %v4143 = vpack.c.b16 %v4118, %v4117
    %v4144 = vpack.c.b16 %v4120, %v4119
    %v4145 = vpack.c.b16 %v4122, %v4121
    %v4146 = vpack.c.b16 %v4124, %v4123
    %v4147 = vpack.c.b16 %v4126, %v4125
    %v4148 = vpack.c.b16 %v4128, %v4127
    %v4149 = vpack.c.b16 %v4130, %v4129
    %v4150 = vpack.c.b16 %v4132, %v4131
    %v4151 = vpack.c.b16 %v4134, %v4133
    %v4152 = vpack.c.b16 %v4136, %v4135
    %4169 = vmatprep.subr.bf16.mxu0 0
    %4170 = vmatpush1.bf16.msra.mxu0 %v4137
    %4171 = vmatprep.subr.bf16.mxu0 0
    %4172 = vmatpush1.bf16.msra.mxu0 %v4138
    %4173 = vmatprep.subr.bf16.mxu0 0
    %4174 = vmatpush1.bf16.msra.mxu0 %v4139
    %4175 = vmatprep.subr.bf16.mxu0 0
    %4176 = vmatpush1.bf16.msra.mxu0 %v4140
    %4177 = vmatprep.subr.bf16.mxu0 0
    %4178 = vmatpush1.bf16.msra.mxu0 %v4141
    %4179 = vmatprep.subr.bf16.mxu0 0
    %4180 = vmatpush1.bf16.msra.mxu0 %v4142
    %4181 = vmatprep.subr.bf16.mxu0 0
    %4182 = vmatpush1.bf16.msra.mxu0 %v4143
    %4183 = vmatprep.subr.bf16.mxu0 0
    %4184 = vmatpush1.bf16.msra.mxu0 %v4144
    %4185 = vmatprep.subr.bf16.mxu0 0
    %4186 = vmatpush1.bf16.msra.mxu0 %v4145
    %4187 = vmatprep.subr.bf16.mxu0 0
    %4188 = vmatpush1.bf16.msra.mxu0 %v4146
    %4189 = vmatprep.subr.bf16.mxu0 0
    %4190 = vmatpush1.bf16.msra.mxu0 %v4147
    %4191 = vmatprep.subr.bf16.mxu0 0
    %4192 = vmatpush1.bf16.msra.mxu0 %v4148
    %4193 = vmatprep.subr.bf16.mxu0 0
    %4194 = vmatpush1.bf16.msra.mxu0 %v4149
    %4195 = vmatprep.subr.bf16.mxu0 0
    %4196 = vmatpush1.bf16.msra.mxu0 %v4150
    %4197 = vmatprep.subr.bf16.mxu0 0
    %4198 = vmatpush1.bf16.msra.mxu0 %v4151
    %4199 = vmatprep.subr.bf16.mxu0 0
    %4200 = vmatpush1.bf16.msra.mxu0 %v4152
    %4201 = vmatprep.mubr.bf16.mxu0 %v4033
    %4202 = vmatmul.mubr.bf16.gmra.mrb[0].mxu0 %v4032
    %v4203 = vpop.f32.mrb[0].mxu0
    %v4204 = vadd.f32 %v4071, %v4203
    %v4205 = vpop.f32.mrb[0].mxu0
    %v4206 = vpop.f32.mrb[0].mxu0
    %v4207 = vpop.f32.mrb[0].mxu0
    %4208 = vdwg.mxu0
    %v4209 = vtanh.pop %v4204
    %s4210 = scalar_lea.vmem %s14, %s63
    %vm4211 = vcmask 386048
    %4212 = vst.msk [vmem:[%s4210] sm:$0x3] %vm4211, %v4209
  $region62: #{actp_forward.1} parent=0 // loop_footer
    %s53 = sadd.s32 1, %s49
  $region63: #{actp_forward.1} parent=0 // loop_footer_branch
    %48 = sbr.rel target = $region59
  $region64: #{actp_forward.1} parent=0 // loop_exit
    _
  // Predicated region
  $region65: #{actp_forward.1} parent=0 // pred_check
    _
  $region66: #{actp_forward.1} parent=0 // pred_check_branch
    %4214 = sbr.rel (0) target = $region68
  $region67: #{actp_forward.1} parent=0 // pred_region
    _
  $region68: #{actp_forward.1} parent=0 // pred_fallthru
    _
  // Predicated region
  $region69: #{actp_forward.1} parent=0 // pred_check
    _
  $region70: #{actp_forward.1} parent=0 // pred_check_branch
    %4216 = sbr.rel (0) target = $region72
  $region71: #{actp_forward.1} parent=0 // pred_region
    _
  $region72: #{actp_forward.1} parent=0 // pred_fallthru
    _

</llo_original>
